<compile_context>
chip_gen: v7x
topology: tpu7x:2x2x1
jax: 0.10.0
libtpu: 0.0.40
codegen_flags: <defaults>
</compile_context>

<pallas_src>
import math
import numpy as np
import jax
import jax.numpy as jnp
from jax.experimental import pallas as pl
from jax.experimental.pallas import tpu as pltpu


# ----------------------------------------------------------------------------
# ConvLSTM layer kernel: one grid step per batch block; T recurrence in-kernel.
# ----------------------------------------------------------------------------
def make_convlstm_seq_kernel(T, H, BL):
    def kernel(zx_ref, wh_ref, mask_ref, out_ref):
        # zx_ref:  (T, 4H, BL)   precomputed input projection
        # wh_ref:  (4H, 3H)      packed recurrent weights [wh0 | wh1 | wh2]
        # mask_ref:(2, H, BL)    conv edge masks (prev-valid, next-valid)
        # out_ref: (T, H, BL)    all hidden states; written once per grid step
        wh = wh_ref[...]
        mask_prev = mask_ref[0]
        mask_next = mask_ref[1]

        h = jnp.zeros((H, BL), jnp.float32)
        c = jnp.zeros((H, BL), jnp.float32)

        # Static Python loop: fully unrolled (T=12), static ref indices, and the
        # serial h->h dependency keeps live ranges tiny.
        for t in range(T):
            # Shifted neighbours along L (conv1d k=3, pad=1).  Batch elements are
            # packed along the lane axis; the masks zero the cross-batch wraparound.
            hp = pltpu.roll(h, shift=1, axis=1) * mask_prev        # value at l-1
            hn = pltpu.roll(h, shift=BL - 1, axis=1) * mask_next   # value at l+1
            stacked = jnp.concatenate([hp, h, hn], axis=0)         # (3H, BL)
            z = zx_ref[t] + jnp.dot(wh, stacked,
                                    preferred_element_type=jnp.float32)  # (4H, BL)

            ifo = jax.nn.sigmoid(z[0:3 * H])       # one wide EUP push for i,f,o
            g = jnp.tanh(z[3 * H:4 * H])
            i = ifo[0:H]
            f = ifo[H:2 * H]
            o = ifo[2 * H:3 * H]

            c = f * c + i * g
            h = o * jnp.tanh(c)
            out_ref[t] = h

    return kernel


def convlstm_layer(x, wx, wh, *, n_batch_blocks=None):
    """x: (B, T, C_in, L); wx: (3, 4H, C_in); wh: (3, 4H, H) -> (B, T, H, L)."""
    B, T, C_in, L = x.shape
    H = wh.shape[2]
    hp_ = jax.lax.Precision.HIGHEST

    # ---- hoisted input projection (plain XLA, once for all (B, T)) -------------
    xp = jnp.pad(x, ((0, 0), (0, 0), (0, 0), (1, 0)))[..., :L]   # value at l-1
    xn = jnp.pad(x, ((0, 0), (0, 0), (0, 0), (0, 1)))[..., 1:]   # value at l+1
    ein = lambda w, a: jnp.einsum("oc,btcl->btol", w, a, precision=hp_)
    zx = ein(wx[0], xp) + ein(wx[1], x) + ein(wx[2], xn)          # (B, T, 4H, L)

    # ---- pack batch into the lane axis -----------------------------------------
    # 2 batch blocks by default so the v7x megacore ("parallel" grid axis) is used;
    # on v5e/v6e this is just 2 cheap sequential grid steps.
    nb = n_batch_blocks or (2 if (B % 2 == 0 and B >= 2) else 1)
    Bb = B // nb
    BL = Bb * L
    zx = (zx.reshape(nb, Bb, T, 4 * H, L)
            .transpose(0, 2, 3, 1, 4)
            .reshape(nb, T, 4 * H, BL))

    # pre-packed recurrent weight (4H, 3H); lane index within BL is bb*L + l
    whcat = jnp.concatenate([wh[0], wh[1], wh[2]], axis=1)

    l_idx = jnp.arange(BL) % L
    mask_prev = (l_idx >= 1).astype(jnp.float32)
    mask_next = (l_idx <= L - 2).astype(jnp.float32)
    masks = jnp.broadcast_to(jnp.stack([mask_prev, mask_next])[:, None, :],
                             (2, H, BL))

    kernel = make_convlstm_seq_kernel(T, H, BL)
    out = pl.pallas_call(
        kernel,
        out_shape=jax.ShapeDtypeStruct((nb, T, H, BL), jnp.float32),
        grid_spec=pltpu.PrefetchScalarGridSpec(
            num_scalar_prefetch=0,
            grid=(nb,),
            in_specs=[
                pl.BlockSpec((None, T, 4 * H, BL), lambda g: (g, 0, 0, 0)),
                pl.BlockSpec((4 * H, 3 * H), lambda g: (0, 0)),
                pl.BlockSpec((2, H, BL), lambda g: (0, 0, 0)),
            ],
            out_specs=pl.BlockSpec((None, T, H, BL), lambda g: (g, 0, 0, 0)),
        ),
        # Each grid step handles an independent batch block (state is in-kernel),
        # so "parallel" is safe and enables megacore sharding on v7x.
        compiler_params=pltpu.CompilerParams(
            dimension_semantics=("parallel",)),
    )(zx, whcat, masks)

    # unpack (nb, T, H, Bb, L) -> (B, T, H, L)
    return (out.reshape(nb, T, H, Bb, L)
               .transpose(0, 3, 1, 2, 4)
               .reshape(B, T, H, L))


# ----------------------------------------------------------------------------
# MLP head: Linear -> BN(eval)+ReLU -> Linear -> BN(eval)+ReLU -> Linear.
# The K=T*H*L reduction of the first Linear is tiled so w1 streams HBM->VMEM.
# ----------------------------------------------------------------------------
def mlp_kernel(x_ref, w1_ref, s1_ref, t1_ref, w2_ref, s2_ref, t2_ref,
               w3_ref, b3_ref, out_ref, acc_ref):
    k = pl.program_id(0)

    @pl.when(k == 0)
    def _init():
        acc_ref[...] = jnp.zeros_like(acc_ref)

    acc_ref[...] += jnp.dot(x_ref[...], w1_ref[...],
                            preferred_element_type=jnp.float32)

    @pl.when(k == pl.num_programs(0) - 1)
    def _finish():
        h1 = jnp.maximum(acc_ref[...] * s1_ref[...] + t1_ref[...], 0.0)
        h2 = jnp.maximum(
            jnp.dot(h1, w2_ref[...], preferred_element_type=jnp.float32)
            * s2_ref[...] + t2_ref[...], 0.0)
        out_ref[...] = (jnp.dot(h2, w3_ref[...],
                                preferred_element_type=jnp.float32)
                        + b3_ref[...])


def _pick_tk(K, max_tk=2048):
    """Largest divisor of K that is a multiple of 128 and <= max_tk (else K)."""
    if K % 128 != 0:
        return K
    for nsteps in range(1, K // 128 + 1):
        if K % nsteps == 0:
            tk = K // nsteps
            if tk % 128 == 0 and tk <= max_tk:
                return tk
    return K


def mlp_head(flat, p):
    B, K = flat.shape
    D1 = p["w1"].shape[1]
    n_classes = p["w3"].shape[1]
    tk = _pick_tk(K)                       # e.g. K=9984 -> tk=1664 (6 grid steps)

    return pl.pallas_call(
        mlp_kernel,
        out_shape=jax.ShapeDtypeStruct((B, n_classes), jnp.float32),
        grid_spec=pltpu.PrefetchScalarGridSpec(
            num_scalar_prefetch=0,
            grid=(K // tk,),
            in_specs=[
                pl.BlockSpec((B, tk), lambda k: (0, k)),        # activations slab
                pl.BlockSpec((tk, D1), lambda k: (k, 0)),       # streamed w1 tile
                pl.BlockSpec((1, D1), lambda k: (0, 0)),
                pl.BlockSpec((1, D1), lambda k: (0, 0)),
                pl.BlockSpec(p["w2"].shape, lambda k: (0, 0)),
                pl.BlockSpec(p["s2"].shape, lambda k: (0, 0)),
                pl.BlockSpec(p["t2"].shape, lambda k: (0, 0)),
                pl.BlockSpec(p["w3"].shape, lambda k: (0, 0)),
                pl.BlockSpec(p["b3"].shape, lambda k: (0, 0)),
            ],
            out_specs=pl.BlockSpec((B, n_classes), lambda k: (0, 0)),
            scratch_shapes=[pltpu.VMEM((B, D1), jnp.float32)],
        ),
        compiler_params=pltpu.CompilerParams(
            dimension_semantics=("arbitrary",)),
    )(flat, p["w1"], p["s1"], p["t1"], p["w2"], p["s2"], p["t2"],
      p["w3"], p["b3"])


# ----------------------------------------------------------------------------
# Full forward (glue in plain JAX)
# ----------------------------------------------------------------------------
def crop_convlstm_forward(x_btl, params):
    B, T, L = x_btl.shape
    cur = x_btl[:, :, None, :]                    # (B, T, C_in=1, L) <- input[:, None]
    for (wx, wh) in params["cells"]:
        cur = convlstm_layer(cur, wx, wh)         # (B, T, H, L)
    flat = cur.reshape(B, -1)                     # Flatten over (T, H, L), torch order
    return mlp_head(flat, params)


# ----------------------------------------------------------------------------
# Pure-JAX reference (same math) for a sanity check
# ----------------------------------------------------------------------------
def reference_forward(x_btl, params):
    hp_ = jax.lax.Precision.HIGHEST
    B, T, L = x_btl.shape
    cur = x_btl[:, :, None, :]
    for (wx, wh) in params["cells"]:
        H = wh.shape[2]
        h = jnp.zeros((B, H, L), jnp.float32)
        c = jnp.zeros((B, H, L), jnp.float32)
        outs = []

        def shift(a):
            prev = jnp.pad(a, ((0, 0), (0, 0), (1, 0)))[:, :, :L]
            nxt = jnp.pad(a, ((0, 0), (0, 0), (0, 1)))[:, :, 1:]
            return prev, nxt

        for t in range(T):
            xt = cur[:, t]
            xp, xn = shift(xt)
            hhp, hhn = shift(h)
            ein = lambda w, a: jnp.einsum("oc,bcl->bol", w, a, precision=hp_)
            z = (ein(wx[0], xp) + ein(wx[1], xt) + ein(wx[2], xn)
                 + ein(wh[0], hhp) + ein(wh[1], h) + ein(wh[2], hhn))
            i = jax.nn.sigmoid(z[:, 0:H])
            f = jax.nn.sigmoid(z[:, H:2 * H])
            o = jax.nn.sigmoid(z[:, 2 * H:3 * H])
            g = jnp.tanh(z[:, 3 * H:4 * H])
            c = f * c + i * g
            h = o * jnp.tanh(c)
            outs.append(h)
        cur = jnp.stack(outs, axis=1)
    flat = cur.reshape(B, -1)
    mm = lambda a, b: jnp.dot(a, b, precision=hp_)
    h1 = jnp.maximum(mm(flat, params["w1"]) * params["s1"] + params["t1"], 0.0)
    h2 = jnp.maximum(mm(h1, params["w2"]) * params["s2"] + params["t2"], 0.0)
    return mm(h2, params["w3"]) + params["b3"]


# ----------------------------------------------------------------------------
# Deterministic synthetic parameters (shapes from CropConvLSTM.__init__ defaults)
# ----------------------------------------------------------------------------
def init_params(key, input_dim, hidden_dim, seq_len, input_len, n_classes):
    H, T, L = hidden_dim, seq_len, input_len
    D0 = H * T * L
    D1 = H * T
    D2 = T
    ks = jax.random.split(key, 8)

    # ConvLSTMCell conv weight: torch (4H, C_in+H, 3), bias=False.  Stored split by tap.
    Cc = input_dim + H
    bc = 1.0 / math.sqrt(Cc * 3)
    wfull = jax.random.uniform(ks[0], (3, 4 * H, Cc), jnp.float32, -bc, bc)
    wx = wfull[:, :, :input_dim]
    wh = wfull[:, :, input_dim:]

    def linear(k, fan_in, fan_out):
        b = 1.0 / math.sqrt(fan_in)
        kw, kb = jax.random.split(k)
        W = jax.random.uniform(kw, (fan_in, fan_out), jnp.float32, -b, b)  # (in, out)
        bias = jax.random.uniform(kb, (fan_out,), jnp.float32, -b, b)
        return W, bias

    w1, b1 = linear(ks[1], D0, D1)
    w2, b2 = linear(ks[2], D1, D2)
    w3, b3 = linear(ks[3], D2, n_classes)

    # Fresh BatchNorm1d (eval mode): gamma=1, beta=0, running_mean=0, running_var=1
    eps = 1e-5

    def fold_bn(bias, dim):
        gamma = jnp.ones((dim,), jnp.float32)
        beta = jnp.zeros((dim,), jnp.float32)
        rm = jnp.zeros((dim,), jnp.float32)
        rv = jnp.ones((dim,), jnp.float32)
        s = gamma / jnp.sqrt(rv + eps)
        t = (bias - rm) * s + beta
        return s.reshape(1, dim), t.reshape(1, dim)

    s1, t1 = fold_bn(b1, D1)
    s2, t2 = fold_bn(b2, D2)

    return {
        "cells": [(wx, wh)],
        "w1": w1, "s1": s1, "t1": t1,
        "w2": w2, "s2": s2, "t2": t2,
        "w3": w3, "b3": b3.reshape(1, n_classes),
    }


if __name__ == "__main__":
    # Module defaults: input_dim=1, hidden_dim=16, seq_len=12, input_len_monthly=52, n_classes=4
    B, T, L = 4, 12, 52
    input_dim, hidden_dim, n_classes = 1, 16, 4

    key = jax.random.PRNGKey(0)
    k_params, k_x = jax.random.split(key)
    params = init_params(k_params, input_dim, hidden_dim, T, L, n_classes)

    # input_monthly: (batch, seq_len, input_len_monthly)
    x = jax.random.normal(k_x, (B, T, L), jnp.float32)

    fwd = jax.jit(crop_convlstm_forward)
    out = jax.block_until_ready(fwd(x, params))

    ref = jax.block_until_ready(reference_forward(x, params))
    np.testing.assert_allclose(np.asarray(out), np.asarray(ref), rtol=5e-2, atol=5e-2)
    assert out.shape == (B, n_classes) and bool(jnp.all(jnp.isfinite(out)))

    print("KERNEL_OK")
</pallas_src>

<mosaic_0001>
module attributes {stable_mosaic.version = 11 : i64} {
  func.func @kernel(%arg0: i32, %arg1: memref<1x12x64x104xf32, #tpu.memory_space<vmem>>, %arg2: memref<64x48xf32, #tpu.memory_space<vmem>>, %arg3: memref<2x16x104xf32, #tpu.memory_space<vmem>>, %arg4: memref<1x12x16x104xf32, #tpu.memory_space<vmem>>) attributes {dimension_semantics = [#tpu.dimension_semantics<parallel>], iteration_bounds = array<i64: 2>, scalar_prefetch = 0 : i64, scratch_operands = 0 : i64, tpu.core_type = #tpu.core_type<tc>, window_params = [{transform_indices = @transform_0, window_bounds = array<i64: 1, 12, 64, 104>}, {pipeline_mode = #tpu.pipeline_mode<synchronous>, transform_indices = @transform_1, window_bounds = array<i64: 64, 48>}, {pipeline_mode = #tpu.pipeline_mode<synchronous>, transform_indices = @transform_2, window_bounds = array<i64: 2, 16, 104>}, {transform_indices = @transform_3, window_bounds = array<i64: 1, 12, 16, 104>}]} {
    %c0 = arith.constant 0 : index
    %c0_0 = arith.constant 0 : index
    %0 = vector.load %arg2[%c0, %c0_0] : memref<64x48xf32, #tpu.memory_space<vmem>>, vector<64x48xf32>
    %c0_1 = arith.constant 0 : index
    %c0_2 = arith.constant 0 : index
    %c0_3 = arith.constant 0 : index
    %1 = vector.load %arg3[%c0_1, %c0_2, %c0_3] : memref<2x16x104xf32, #tpu.memory_space<vmem>>, vector<1x16x104xf32>
    %2 = vector.shape_cast %1 : vector<1x16x104xf32> to vector<16x104xf32>
    %c1 = arith.constant 1 : index
    %c0_4 = arith.constant 0 : index
    %c0_5 = arith.constant 0 : index
    %3 = vector.load %arg3[%c1, %c0_4, %c0_5] : memref<2x16x104xf32, #tpu.memory_space<vmem>>, vector<1x16x104xf32>
    %4 = vector.shape_cast %3 : vector<1x16x104xf32> to vector<16x104xf32>
    %cst = arith.constant 0.000000e+00 : f32
    %5 = vector.broadcast %cst : f32 to vector<16x104xf32>
    %cst_6 = arith.constant 0.000000e+00 : f32
    %6 = vector.broadcast %cst_6 : f32 to vector<16x104xf32>
    %c1_i32 = arith.constant 1 : i32
    %7 = tpu.dynamic_rotate %5 by %c1_i32 dim 1 : vector<16x104xf32>, i32 -> vector<16x104xf32>
    %8 = arith.mulf %7, %2 : vector<16x104xf32>
    %c103_i32 = arith.constant 103 : i32
    %9 = tpu.dynamic_rotate %5 by %c103_i32 dim 1 : vector<16x104xf32>, i32 -> vector<16x104xf32>
    %10 = arith.mulf %9, %4 : vector<16x104xf32>
    %11 = tpu.concatenate %8, %5, %10 in 0 : vector<16x104xf32>, vector<16x104xf32>, vector<16x104xf32> -> vector<48x104xf32>
    %c0_7 = arith.constant 0 : index
    %c0_8 = arith.constant 0 : index
    %c0_9 = arith.constant 0 : index
    %c0_10 = arith.constant 0 : index
    %12 = vector.load %arg1[%c0_7, %c0_8, %c0_9, %c0_10] : memref<1x12x64x104xf32, #tpu.memory_space<vmem>>, vector<1x1x64x104xf32>
    %13 = vector.shape_cast %12 : vector<1x1x64x104xf32> to vector<64x104xf32>
    %cst_11 = arith.constant dense<0.000000e+00> : vector<64x104xf32>
    %14 = tpu.matmul %0, %11, %cst_11 {dimension_numbers = #tpu.dot_dimension_numbers<[1], [0], [0], [1], [0, 0, 1, 1], [], []>} : vector<64x48xf32>, vector<48x104xf32>, vector<64x104xf32> -> vector<64x104xf32>
    %15 = arith.addf %13, %14 : vector<64x104xf32>
    %16 = vector.extract_strided_slice %15 {offsets = [0, 0], sizes = [48, 104], strides = [1, 1]} : vector<64x104xf32> to vector<48x104xf32>
    %17 = arith.negf %16 : vector<48x104xf32>
    %18 = math.exp %17 : vector<48x104xf32>
    %cst_12 = arith.constant 1.000000e+00 : f32
    %19 = vector.broadcast %cst_12 : f32 to vector<48x104xf32>
    %20 = arith.addf %19, %18 : vector<48x104xf32>
    %21 = arith.divf %19, %20 : vector<48x104xf32>
    %22 = vector.extract_strided_slice %15 {offsets = [48, 0], sizes = [16, 104], strides = [1, 1]} : vector<64x104xf32> to vector<16x104xf32>
    %23 = math.tanh %22 : vector<16x104xf32>
    %24 = vector.extract_strided_slice %21 {offsets = [0, 0], sizes = [16, 104], strides = [1, 1]} : vector<48x104xf32> to vector<16x104xf32>
    %25 = vector.extract_strided_slice %21 {offsets = [16, 0], sizes = [16, 104], strides = [1, 1]} : vector<48x104xf32> to vector<16x104xf32>
    %26 = vector.extract_strided_slice %21 {offsets = [32, 0], sizes = [16, 104], strides = [1, 1]} : vector<48x104xf32> to vector<16x104xf32>
    %27 = arith.mulf %25, %6 : vector<16x104xf32>
    %28 = arith.mulf %24, %23 : vector<16x104xf32>
    %29 = arith.addf %27, %28 : vector<16x104xf32>
    %30 = math.tanh %29 : vector<16x104xf32>
    %31 = arith.mulf %26, %30 : vector<16x104xf32>
    %c0_13 = arith.constant 0 : index
    %c0_14 = arith.constant 0 : index
    %c0_15 = arith.constant 0 : index
    %c0_16 = arith.constant 0 : index
    %32 = vector.load %arg4[%c0_13, %c0_14, %c0_15, %c0_16] : memref<1x12x16x104xf32, #tpu.memory_space<vmem>>, vector<1x1x16x104xf32>
    %33 = vector.shape_cast %32 : vector<1x1x16x104xf32> to vector<16x104xf32>
    %34 = vector.shape_cast %31 : vector<16x104xf32> to vector<1x1x16x104xf32>
    tpu.vector_store %arg4[%c0_13, %c0_14, %c0_15, %c0_16], %34 {strides = array<i32>} : memref<1x12x16x104xf32, #tpu.memory_space<vmem>>, vector<1x1x16x104xf32>,
    %c1_i32_17 = arith.constant 1 : i32
    %35 = tpu.dynamic_rotate %31 by %c1_i32_17 dim 1 : vector<16x104xf32>, i32 -> vector<16x104xf32>
    %36 = arith.mulf %35, %2 : vector<16x104xf32>
    %c103_i32_18 = arith.constant 103 : i32
    %37 = tpu.dynamic_rotate %31 by %c103_i32_18 dim 1 : vector<16x104xf32>, i32 -> vector<16x104xf32>
    %38 = arith.mulf %37, %4 : vector<16x104xf32>
    %39 = tpu.concatenate %36, %31, %38 in 0 : vector<16x104xf32>, vector<16x104xf32>, vector<16x104xf32> -> vector<48x104xf32>
    %c0_19 = arith.constant 0 : index
    %c1_20 = arith.constant 1 : index
    %c0_21 = arith.constant 0 : index
    %c0_22 = arith.constant 0 : index
    %40 = vector.load %arg1[%c0_19, %c1_20, %c0_21, %c0_22] : memref<1x12x64x104xf32, #tpu.memory_space<vmem>>, vector<1x1x64x104xf32>
    %41 = vector.shape_cast %40 : vector<1x1x64x104xf32> to vector<64x104xf32>
    %cst_23 = arith.constant dense<0.000000e+00> : vector<64x104xf32>
    %42 = tpu.matmul %0, %39, %cst_23 {dimension_numbers = #tpu.dot_dimension_numbers<[1], [0], [0], [1], [0, 0, 1, 1], [], []>} : vector<64x48xf32>, vector<48x104xf32>, vector<64x104xf32> -> vector<64x104xf32>
    %43 = arith.addf %41, %42 : vector<64x104xf32>
    %44 = vector.extract_strided_slice %43 {offsets = [0, 0], sizes = [48, 104], strides = [1, 1]} : vector<64x104xf32> to vector<48x104xf32>
    %45 = arith.negf %44 : vector<48x104xf32>
    %46 = math.exp %45 : vector<48x104xf32>
    %cst_24 = arith.constant 1.000000e+00 : f32
    %47 = vector.broadcast %cst_24 : f32 to vector<48x104xf32>
    %48 = arith.addf %47, %46 : vector<48x104xf32>
    %49 = arith.divf %47, %48 : vector<48x104xf32>
    %50 = vector.extract_strided_slice %43 {offsets = [48, 0], sizes = [16, 104], strides = [1, 1]} : vector<64x104xf32> to vector<16x104xf32>
    %51 = math.tanh %50 : vector<16x104xf32>
    %52 = vector.extract_strided_slice %49 {offsets = [0, 0], sizes = [16, 104], strides = [1, 1]} : vector<48x104xf32> to vector<16x104xf32>
    %53 = vector.extract_strided_slice %49 {offsets = [16, 0], sizes = [16, 104], strides = [1, 1]} : vector<48x104xf32> to vector<16x104xf32>
    %54 = vector.extract_strided_slice %49 {offsets = [32, 0], sizes = [16, 104], strides = [1, 1]} : vector<48x104xf32> to vector<16x104xf32>
    %55 = arith.mulf %53, %29 : vector<16x104xf32>
    %56 = arith.mulf %52, %51 : vector<16x104xf32>
    %57 = arith.addf %55, %56 : vector<16x104xf32>
    %58 = math.tanh %57 : vector<16x104xf32>
    %59 = arith.mulf %54, %58 : vector<16x104xf32>
    %c0_25 = arith.constant 0 : index
    %c1_26 = arith.constant 1 : index
    %c0_27 = arith.constant 0 : index
    %c0_28 = arith.constant 0 : index
    %60 = vector.load %arg4[%c0_25, %c1_26, %c0_27, %c0_28] : memref<1x12x16x104xf32, #tpu.memory_space<vmem>>, vector<1x1x16x104xf32>
    %61 = vector.shape_cast %60 : vector<1x1x16x104xf32> to vector<16x104xf32>
    %62 = vector.shape_cast %59 : vector<16x104xf32> to vector<1x1x16x104xf32>
    tpu.vector_store %arg4[%c0_25, %c1_26, %c0_27, %c0_28], %62 {strides = array<i32>} : memref<1x12x16x104xf32, #tpu.memory_space<vmem>>, vector<1x1x16x104xf32>,
    %c1_i32_29 = arith.constant 1 : i32
    %63 = tpu.dynamic_rotate %59 by %c1_i32_29 dim 1 : vector<16x104xf32>, i32 -> vector<16x104xf32>
    %64 = arith.mulf %63, %2 : vector<16x104xf32>
    %c103_i32_30 = arith.constant 103 : i32
    %65 = tpu.dynamic_rotate %59 by %c103_i32_30 dim 1 : vector<16x104xf32>, i32 -> vector<16x104xf32>
    %66 = arith.mulf %65, %4 : vector<16x104xf32>
    %67 = tpu.concatenate %64, %59, %66 in 0 : vector<16x104xf32>, vector<16x104xf32>, vector<16x104xf32> -> vector<48x104xf32>
    %c0_31 = arith.constant 0 : index
    %c2 = arith.constant 2 : index
    %c0_32 = arith.constant 0 : index
    %c0_33 = arith.constant 0 : index
    %68 = vector.load %arg1[%c0_31, %c2, %c0_32, %c0_33] : memref<1x12x64x104xf32, #tpu.memory_space<vmem>>, vector<1x1x64x104xf32>
    %69 = vector.shape_cast %68 : vector<1x1x64x104xf32> to vector<64x104xf32>
    %cst_34 = arith.constant dense<0.000000e+00> : vector<64x104xf32>
    %70 = tpu.matmul %0, %67, %cst_34 {dimension_numbers = #tpu.dot_dimension_numbers<[1], [0], [0], [1], [0, 0, 1, 1], [], []>} : vector<64x48xf32>, vector<48x104xf32>, vector<64x104xf32> -> vector<64x104xf32>
    %71 = arith.addf %69, %70 : vector<64x104xf32>
    %72 = vector.extract_strided_slice %71 {offsets = [0, 0], sizes = [48, 104], strides = [1, 1]} : vector<64x104xf32> to vector<48x104xf32>
    %73 = arith.negf %72 : vector<48x104xf32>
    %74 = math.exp %73 : vector<48x104xf32>
    %cst_35 = arith.constant 1.000000e+00 : f32
    %75 = vector.broadcast %cst_35 : f32 to vector<48x104xf32>
    %76 = arith.addf %75, %74 : vector<48x104xf32>
    %77 = arith.divf %75, %76 : vector<48x104xf32>
    %78 = vector.extract_strided_slice %71 {offsets = [48, 0], sizes = [16, 104], strides = [1, 1]} : vector<64x104xf32> to vector<16x104xf32>
    %79 = math.tanh %78 : vector<16x104xf32>
    %80 = vector.extract_strided_slice %77 {offsets = [0, 0], sizes = [16, 104], strides = [1, 1]} : vector<48x104xf32> to vector<16x104xf32>
    %81 = vector.extract_strided_slice %77 {offsets = [16, 0], sizes = [16, 104], strides = [1, 1]} : vector<48x104xf32> to vector<16x104xf32>
    %82 = vector.extract_strided_slice %77 {offsets = [32, 0], sizes = [16, 104], strides = [1, 1]} : vector<48x104xf32> to vector<16x104xf32>
    %83 = arith.mulf %81, %57 : vector<16x104xf32>
    %84 = arith.mulf %80, %79 : vector<16x104xf32>
    %85 = arith.addf %83, %84 : vector<16x104xf32>
    %86 = math.tanh %85 : vector<16x104xf32>
    %87 = arith.mulf %82, %86 : vector<16x104xf32>
    %c0_36 = arith.constant 0 : index
    %c2_37 = arith.constant 2 : index
    %c0_38 = arith.constant 0 : index
    %c0_39 = arith.constant 0 : index
    %88 = vector.load %arg4[%c0_36, %c2_37, %c0_38, %c0_39] : memref<1x12x16x104xf32, #tpu.memory_space<vmem>>, vector<1x1x16x104xf32>
    %89 = vector.shape_cast %88 : vector<1x1x16x104xf32> to vector<16x104xf32>
    %90 = vector.shape_cast %87 : vector<16x104xf32> to vector<1x1x16x104xf32>
    tpu.vector_store %arg4[%c0_36, %c2_37, %c0_38, %c0_39], %90 {strides = array<i32>} : memref<1x12x16x104xf32, #tpu.memory_space<vmem>>, vector<1x1x16x104xf32>,
    %c1_i32_40 = arith.constant 1 : i32
    %91 = tpu.dynamic_rotate %87 by %c1_i32_40 dim 1 : vector<16x104xf32>, i32 -> vector<16x104xf32>
    %92 = arith.mulf %91, %2 : vector<16x104xf32>
    %c103_i32_41 = arith.constant 103 : i32
    %93 = tpu.dynamic_rotate %87 by %c103_i32_41 dim 1 : vector<16x104xf32>, i32 -> vector<16x104xf32>
    %94 = arith.mulf %93, %4 : vector<16x104xf32>
    %95 = tpu.concatenate %92, %87, %94 in 0 : vector<16x104xf32>, vector<16x104xf32>, vector<16x104xf32> -> vector<48x104xf32>
    %c0_42 = arith.constant 0 : index
    %c3 = arith.constant 3 : index
    %c0_43 = arith.constant 0 : index
    %c0_44 = arith.constant 0 : index
    %96 = vector.load %arg1[%c0_42, %c3, %c0_43, %c0_44] : memref<1x12x64x104xf32, #tpu.memory_space<vmem>>, vector<1x1x64x104xf32>
    %97 = vector.shape_cast %96 : vector<1x1x64x104xf32> to vector<64x104xf32>
    %cst_45 = arith.constant dense<0.000000e+00> : vector<64x104xf32>
    %98 = tpu.matmul %0, %95, %cst_45 {dimension_numbers = #tpu.dot_dimension_numbers<[1], [0], [0], [1], [0, 0, 1, 1], [], []>} : vector<64x48xf32>, vector<48x104xf32>, vector<64x104xf32> -> vector<64x104xf32>
    %99 = arith.addf %97, %98 : vector<64x104xf32>
    %100 = vector.extract_strided_slice %99 {offsets = [0, 0], sizes = [48, 104], strides = [1, 1]} : vector<64x104xf32> to vector<48x104xf32>
    %101 = arith.negf %100 : vector<48x104xf32>
    %102 = math.exp %101 : vector<48x104xf32>
    %cst_46 = arith.constant 1.000000e+00 : f32
    %103 = vector.broadcast %cst_46 : f32 to vector<48x104xf32>
    %104 = arith.addf %103, %102 : vector<48x104xf32>
    %105 = arith.divf %103, %104 : vector<48x104xf32>
    %106 = vector.extract_strided_slice %99 {offsets = [48, 0], sizes = [16, 104], strides = [1, 1]} : vector<64x104xf32> to vector<16x104xf32>
    %107 = math.tanh %106 : vector<16x104xf32>
    %108 = vector.extract_strided_slice %105 {offsets = [0, 0], sizes = [16, 104], strides = [1, 1]} : vector<48x104xf32> to vector<16x104xf32>
    %109 = vector.extract_strided_slice %105 {offsets = [16, 0], sizes = [16, 104], strides = [1, 1]} : vector<48x104xf32> to vector<16x104xf32>
    %110 = vector.extract_strided_slice %105 {offsets = [32, 0], sizes = [16, 104], strides = [1, 1]} : vector<48x104xf32> to vector<16x104xf32>
    %111 = arith.mulf %109, %85 : vector<16x104xf32>
    %112 = arith.mulf %108, %107 : vector<16x104xf32>
    %113 = arith.addf %111, %112 : vector<16x104xf32>
    %114 = math.tanh %113 : vector<16x104xf32>
    %115 = arith.mulf %110, %114 : vector<16x104xf32>
    %c0_47 = arith.constant 0 : index
    %c3_48 = arith.constant 3 : index
    %c0_49 = arith.constant 0 : index
    %c0_50 = arith.constant 0 : index
    %116 = vector.load %arg4[%c0_47, %c3_48, %c0_49, %c0_50] : memref<1x12x16x104xf32, #tpu.memory_space<vmem>>, vector<1x1x16x104xf32>
    %117 = vector.shape_cast %116 : vector<1x1x16x104xf32> to vector<16x104xf32>
    %118 = vector.shape_cast %115 : vector<16x104xf32> to vector<1x1x16x104xf32>
    tpu.vector_store %arg4[%c0_47, %c3_48, %c0_49, %c0_50], %118 {strides = array<i32>} : memref<1x12x16x104xf32, #tpu.memory_space<vmem>>, vector<1x1x16x104xf32>,
    %c1_i32_51 = arith.constant 1 : i32
    %119 = tpu.dynamic_rotate %115 by %c1_i32_51 dim 1 : vector<16x104xf32>, i32 -> vector<16x104xf32>
    %120 = arith.mulf %119, %2 : vector<16x104xf32>
    %c103_i32_52 = arith.constant 103 : i32
    %121 = tpu.dynamic_rotate %115 by %c103_i32_52 dim 1 : vector<16x104xf32>, i32 -> vector<16x104xf32>
    %122 = arith.mulf %121, %4 : vector<16x104xf32>
    %123 = tpu.concatenate %120, %115, %122 in 0 : vector<16x104xf32>, vector<16x104xf32>, vector<16x104xf32> -> vector<48x104xf32>
    %c0_53 = arith.constant 0 : index
    %c4 = arith.constant 4 : index
    %c0_54 = arith.constant 0 : index
    %c0_55 = arith.constant 0 : index
    %124 = vector.load %arg1[%c0_53, %c4, %c0_54, %c0_55] : memref<1x12x64x104xf32, #tpu.memory_space<vmem>>, vector<1x1x64x104xf32>
    %125 = vector.shape_cast %124 : vector<1x1x64x104xf32> to vector<64x104xf32>
    %cst_56 = arith.constant dense<0.000000e+00> : vector<64x104xf32>
    %126 = tpu.matmul %0, %123, %cst_56 {dimension_numbers = #tpu.dot_dimension_numbers<[1], [0], [0], [1], [0, 0, 1, 1], [], []>} : vector<64x48xf32>, vector<48x104xf32>, vector<64x104xf32> -> vector<64x104xf32>
    %127 = arith.addf %125, %126 : vector<64x104xf32>
    %128 = vector.extract_strided_slice %127 {offsets = [0, 0], sizes = [48, 104], strides = [1, 1]} : vector<64x104xf32> to vector<48x104xf32>
    %129 = arith.negf %128 : vector<48x104xf32>
    %130 = math.exp %129 : vector<48x104xf32>
    %cst_57 = arith.constant 1.000000e+00 : f32
    %131 = vector.broadcast %cst_57 : f32 to vector<48x104xf32>
    %132 = arith.addf %131, %130 : vector<48x104xf32>
    %133 = arith.divf %131, %132 : vector<48x104xf32>
    %134 = vector.extract_strided_slice %127 {offsets = [48, 0], sizes = [16, 104], strides = [1, 1]} : vector<64x104xf32> to vector<16x104xf32>
    %135 = math.tanh %134 : vector<16x104xf32>
    %136 = vector.extract_strided_slice %133 {offsets = [0, 0], sizes = [16, 104], strides = [1, 1]} : vector<48x104xf32> to vector<16x104xf32>
    %137 = vector.extract_strided_slice %133 {offsets = [16, 0], sizes = [16, 104], strides = [1, 1]} : vector<48x104xf32> to vector<16x104xf32>
    %138 = vector.extract_strided_slice %133 {offsets = [32, 0], sizes = [16, 104], strides = [1, 1]} : vector<48x104xf32> to vector<16x104xf32>
    %139 = arith.mulf %137, %113 : vector<16x104xf32>
    %140 = arith.mulf %136, %135 : vector<16x104xf32>
    %141 = arith.addf %139, %140 : vector<16x104xf32>
    %142 = math.tanh %141 : vector<16x104xf32>
    %143 = arith.mulf %138, %142 : vector<16x104xf32>
    %c0_58 = arith.constant 0 : index
    %c4_59 = arith.constant 4 : index
    %c0_60 = arith.constant 0 : index
    %c0_61 = arith.constant 0 : index
    %144 = vector.load %arg4[%c0_58, %c4_59, %c0_60, %c0_61] : memref<1x12x16x104xf32, #tpu.memory_space<vmem>>, vector<1x1x16x104xf32>
    %145 = vector.shape_cast %144 : vector<1x1x16x104xf32> to vector<16x104xf32>
    %146 = vector.shape_cast %143 : vector<16x104xf32> to vector<1x1x16x104xf32>
    tpu.vector_store %arg4[%c0_58, %c4_59, %c0_60, %c0_61], %146 {strides = array<i32>} : memref<1x12x16x104xf32, #tpu.memory_space<vmem>>, vector<1x1x16x104xf32>,
    %c1_i32_62 = arith.constant 1 : i32
    %147 = tpu.dynamic_rotate %143 by %c1_i32_62 dim 1 : vector<16x104xf32>, i32 -> vector<16x104xf32>
    %148 = arith.mulf %147, %2 : vector<16x104xf32>
    %c103_i32_63 = arith.constant 103 : i32
    %149 = tpu.dynamic_rotate %143 by %c103_i32_63 dim 1 : vector<16x104xf32>, i32 -> vector<16x104xf32>
    %150 = arith.mulf %149, %4 : vector<16x104xf32>
    %151 = tpu.concatenate %148, %143, %150 in 0 : vector<16x104xf32>, vector<16x104xf32>, vector<16x104xf32> -> vector<48x104xf32>
    %c0_64 = arith.constant 0 : index
    %c5 = arith.constant 5 : index
    %c0_65 = arith.constant 0 : index
    %c0_66 = arith.constant 0 : index
    %152 = vector.load %arg1[%c0_64, %c5, %c0_65, %c0_66] : memref<1x12x64x104xf32, #tpu.memory_space<vmem>>, vector<1x1x64x104xf32>
    %153 = vector.shape_cast %152 : vector<1x1x64x104xf32> to vector<64x104xf32>
    %cst_67 = arith.constant dense<0.000000e+00> : vector<64x104xf32>
    %154 = tpu.matmul %0, %151, %cst_67 {dimension_numbers = #tpu.dot_dimension_numbers<[1], [0], [0], [1], [0, 0, 1, 1], [], []>} : vector<64x48xf32>, vector<48x104xf32>, vector<64x104xf32> -> vector<64x104xf32>
    %155 = arith.addf %153, %154 : vector<64x104xf32>
    %156 = vector.extract_strided_slice %155 {offsets = [0, 0], sizes = [48, 104], strides = [1, 1]} : vector<64x104xf32> to vector<48x104xf32>
    %157 = arith.negf %156 : vector<48x104xf32>
    %158 = math.exp %157 : vector<48x104xf32>
    %cst_68 = arith.constant 1.000000e+00 : f32
    %159 = vector.broadcast %cst_68 : f32 to vector<48x104xf32>
    %160 = arith.addf %159, %158 : vector<48x104xf32>
    %161 = arith.divf %159, %160 : vector<48x104xf32>
    %162 = vector.extract_strided_slice %155 {offsets = [48, 0], sizes = [16, 104], strides = [1, 1]} : vector<64x104xf32> to vector<16x104xf32>
    %163 = math.tanh %162 : vector<16x104xf32>
    %164 = vector.extract_strided_slice %161 {offsets = [0, 0], sizes = [16, 104], strides = [1, 1]} : vector<48x104xf32> to vector<16x104xf32>
    %165 = vector.extract_strided_slice %161 {offsets = [16, 0], sizes = [16, 104], strides = [1, 1]} : vector<48x104xf32> to vector<16x104xf32>
    %166 = vector.extract_strided_slice %161 {offsets = [32, 0], sizes = [16, 104], strides = [1, 1]} : vector<48x104xf32> to vector<16x104xf32>
    %167 = arith.mulf %165, %141 : vector<16x104xf32>
    %168 = arith.mulf %164, %163 : vector<16x104xf32>
    %169 = arith.addf %167, %168 : vector<16x104xf32>
    %170 = math.tanh %169 : vector<16x104xf32>
    %171 = arith.mulf %166, %170 : vector<16x104xf32>
    %c0_69 = arith.constant 0 : index
    %c5_70 = arith.constant 5 : index
    %c0_71 = arith.constant 0 : index
    %c0_72 = arith.constant 0 : index
    %172 = vector.load %arg4[%c0_69, %c5_70, %c0_71, %c0_72] : memref<1x12x16x104xf32, #tpu.memory_space<vmem>>, vector<1x1x16x104xf32>
    %173 = vector.shape_cast %172 : vector<1x1x16x104xf32> to vector<16x104xf32>
    %174 = vector.shape_cast %171 : vector<16x104xf32> to vector<1x1x16x104xf32>
    tpu.vector_store %arg4[%c0_69, %c5_70, %c0_71, %c0_72], %174 {strides = array<i32>} : memref<1x12x16x104xf32, #tpu.memory_space<vmem>>, vector<1x1x16x104xf32>,
    %c1_i32_73 = arith.constant 1 : i32
    %175 = tpu.dynamic_rotate %171 by %c1_i32_73 dim 1 : vector<16x104xf32>, i32 -> vector<16x104xf32>
    %176 = arith.mulf %175, %2 : vector<16x104xf32>
    %c103_i32_74 = arith.constant 103 : i32
    %177 = tpu.dynamic_rotate %171 by %c103_i32_74 dim 1 : vector<16x104xf32>, i32 -> vector<16x104xf32>
    %178 = arith.mulf %177, %4 : vector<16x104xf32>
    %179 = tpu.concatenate %176, %171, %178 in 0 : vector<16x104xf32>, vector<16x104xf32>, vector<16x104xf32> -> vector<48x104xf32>
    %c0_75 = arith.constant 0 : index
    %c6 = arith.constant 6 : index
    %c0_76 = arith.constant 0 : index
    %c0_77 = arith.constant 0 : index
    %180 = vector.load %arg1[%c0_75, %c6, %c0_76, %c0_77] : memref<1x12x64x104xf32, #tpu.memory_space<vmem>>, vector<1x1x64x104xf32>
    %181 = vector.shape_cast %180 : vector<1x1x64x104xf32> to vector<64x104xf32>
    %cst_78 = arith.constant dense<0.000000e+00> : vector<64x104xf32>
    %182 = tpu.matmul %0, %179, %cst_78 {dimension_numbers = #tpu.dot_dimension_numbers<[1], [0], [0], [1], [0, 0, 1, 1], [], []>} : vector<64x48xf32>, vector<48x104xf32>, vector<64x104xf32> -> vector<64x104xf32>
    %183 = arith.addf %181, %182 : vector<64x104xf32>
    %184 = vector.extract_strided_slice %183 {offsets = [0, 0], sizes = [48, 104], strides = [1, 1]} : vector<64x104xf32> to vector<48x104xf32>
    %185 = arith.negf %184 : vector<48x104xf32>
    %186 = math.exp %185 : vector<48x104xf32>
    %cst_79 = arith.constant 1.000000e+00 : f32
    %187 = vector.broadcast %cst_79 : f32 to vector<48x104xf32>
    %188 = arith.addf %187, %186 : vector<48x104xf32>
    %189 = arith.divf %187, %188 : vector<48x104xf32>
    %190 = vector.extract_strided_slice %183 {offsets = [48, 0], sizes = [16, 104], strides = [1, 1]} : vector<64x104xf32> to vector<16x104xf32>
    %191 = math.tanh %190 : vector<16x104xf32>
    %192 = vector.extract_strided_slice %189 {offsets = [0, 0], sizes = [16, 104], strides = [1, 1]} : vector<48x104xf32> to vector<16x104xf32>
    %193 = vector.extract_strided_slice %189 {offsets = [16, 0], sizes = [16, 104], strides = [1, 1]} : vector<48x104xf32> to vector<16x104xf32>
    %194 = vector.extract_strided_slice %189 {offsets = [32, 0], sizes = [16, 104], strides = [1, 1]} : vector<48x104xf32> to vector<16x104xf32>
    %195 = arith.mulf %193, %169 : vector<16x104xf32>
    %196 = arith.mulf %192, %191 : vector<16x104xf32>
    %197 = arith.addf %195, %196 : vector<16x104xf32>
    %198 = math.tanh %197 : vector<16x104xf32>
    %199 = arith.mulf %194, %198 : vector<16x104xf32>
    %c0_80 = arith.constant 0 : index
    %c6_81 = arith.constant 6 : index
    %c0_82 = arith.constant 0 : index
    %c0_83 = arith.constant 0 : index
    %200 = vector.load %arg4[%c0_80, %c6_81, %c0_82, %c0_83] : memref<1x12x16x104xf32, #tpu.memory_space<vmem>>, vector<1x1x16x104xf32>
    %201 = vector.shape_cast %200 : vector<1x1x16x104xf32> to vector<16x104xf32>
    %202 = vector.shape_cast %199 : vector<16x104xf32> to vector<1x1x16x104xf32>
    tpu.vector_store %arg4[%c0_80, %c6_81, %c0_82, %c0_83], %202 {strides = array<i32>} : memref<1x12x16x104xf32, #tpu.memory_space<vmem>>, vector<1x1x16x104xf32>,
    %c1_i32_84 = arith.constant 1 : i32
    %203 = tpu.dynamic_rotate %199 by %c1_i32_84 dim 1 : vector<16x104xf32>, i32 -> vector<16x104xf32>
    %204 = arith.mulf %203, %2 : vector<16x104xf32>
    %c103_i32_85 = arith.constant 103 : i32
    %205 = tpu.dynamic_rotate %199 by %c103_i32_85 dim 1 : vector<16x104xf32>, i32 -> vector<16x104xf32>
    %206 = arith.mulf %205, %4 : vector<16x104xf32>
    %207 = tpu.concatenate %204, %199, %206 in 0 : vector<16x104xf32>, vector<16x104xf32>, vector<16x104xf32> -> vector<48x104xf32>
    %c0_86 = arith.constant 0 : index
    %c7 = arith.constant 7 : index
    %c0_87 = arith.constant 0 : index
    %c0_88 = arith.constant 0 : index
    %208 = vector.load %arg1[%c0_86, %c7, %c0_87, %c0_88] : memref<1x12x64x104xf32, #tpu.memory_space<vmem>>, vector<1x1x64x104xf32>
    %209 = vector.shape_cast %208 : vector<1x1x64x104xf32> to vector<64x104xf32>
    %cst_89 = arith.constant dense<0.000000e+00> : vector<64x104xf32>
    %210 = tpu.matmul %0, %207, %cst_89 {dimension_numbers = #tpu.dot_dimension_numbers<[1], [0], [0], [1], [0, 0, 1, 1], [], []>} : vector<64x48xf32>, vector<48x104xf32>, vector<64x104xf32> -> vector<64x104xf32>
    %211 = arith.addf %209, %210 : vector<64x104xf32>
    %212 = vector.extract_strided_slice %211 {offsets = [0, 0], sizes = [48, 104], strides = [1, 1]} : vector<64x104xf32> to vector<48x104xf32>
    %213 = arith.negf %212 : vector<48x104xf32>
    %214 = math.exp %213 : vector<48x104xf32>
    %cst_90 = arith.constant 1.000000e+00 : f32
    %215 = vector.broadcast %cst_90 : f32 to vector<48x104xf32>
    %216 = arith.addf %215, %214 : vector<48x104xf32>
    %217 = arith.divf %215, %216 : vector<48x104xf32>
    %218 = vector.extract_strided_slice %211 {offsets = [48, 0], sizes = [16, 104], strides = [1, 1]} : vector<64x104xf32> to vector<16x104xf32>
    %219 = math.tanh %218 : vector<16x104xf32>
    %220 = vector.extract_strided_slice %217 {offsets = [0, 0], sizes = [16, 104], strides = [1, 1]} : vector<48x104xf32> to vector<16x104xf32>
    %221 = vector.extract_strided_slice %217 {offsets = [16, 0], sizes = [16, 104], strides = [1, 1]} : vector<48x104xf32> to vector<16x104xf32>
    %222 = vector.extract_strided_slice %217 {offsets = [32, 0], sizes = [16, 104], strides = [1, 1]} : vector<48x104xf32> to vector<16x104xf32>
    %223 = arith.mulf %221, %197 : vector<16x104xf32>
    %224 = arith.mulf %220, %219 : vector<16x104xf32>
    %225 = arith.addf %223, %224 : vector<16x104xf32>
    %226 = math.tanh %225 : vector<16x104xf32>
    %227 = arith.mulf %222, %226 : vector<16x104xf32>
    %c0_91 = arith.constant 0 : index
    %c7_92 = arith.constant 7 : index
    %c0_93 = arith.constant 0 : index
    %c0_94 = arith.constant 0 : index
    %228 = vector.load %arg4[%c0_91, %c7_92, %c0_93, %c0_94] : memref<1x12x16x104xf32, #tpu.memory_space<vmem>>, vector<1x1x16x104xf32>
    %229 = vector.shape_cast %228 : vector<1x1x16x104xf32> to vector<16x104xf32>
    %230 = vector.shape_cast %227 : vector<16x104xf32> to vector<1x1x16x104xf32>
    tpu.vector_store %arg4[%c0_91, %c7_92, %c0_93, %c0_94], %230 {strides = array<i32>} : memref<1x12x16x104xf32, #tpu.memory_space<vmem>>, vector<1x1x16x104xf32>,
    %c1_i32_95 = arith.constant 1 : i32
    %231 = tpu.dynamic_rotate %227 by %c1_i32_95 dim 1 : vector<16x104xf32>, i32 -> vector<16x104xf32>
    %232 = arith.mulf %231, %2 : vector<16x104xf32>
    %c103_i32_96 = arith.constant 103 : i32
    %233 = tpu.dynamic_rotate %227 by %c103_i32_96 dim 1 : vector<16x104xf32>, i32 -> vector<16x104xf32>
    %234 = arith.mulf %233, %4 : vector<16x104xf32>
    %235 = tpu.concatenate %232, %227, %234 in 0 : vector<16x104xf32>, vector<16x104xf32>, vector<16x104xf32> -> vector<48x104xf32>
    %c0_97 = arith.constant 0 : index
    %c8 = arith.constant 8 : index
    %c0_98 = arith.constant 0 : index
    %c0_99 = arith.constant 0 : index
    %236 = vector.load %arg1[%c0_97, %c8, %c0_98, %c0_99] : memref<1x12x64x104xf32, #tpu.memory_space<vmem>>, vector<1x1x64x104xf32>
    %237 = vector.shape_cast %236 : vector<1x1x64x104xf32> to vector<64x104xf32>
    %cst_100 = arith.constant dense<0.000000e+00> : vector<64x104xf32>
    %238 = tpu.matmul %0, %235, %cst_100 {dimension_numbers = #tpu.dot_dimension_numbers<[1], [0], [0], [1], [0, 0, 1, 1], [], []>} : vector<64x48xf32>, vector<48x104xf32>, vector<64x104xf32> -> vector<64x104xf32>
    %239 = arith.addf %237, %238 : vector<64x104xf32>
    %240 = vector.extract_strided_slice %239 {offsets = [0, 0], sizes = [48, 104], strides = [1, 1]} : vector<64x104xf32> to vector<48x104xf32>
    %241 = arith.negf %240 : vector<48x104xf32>
    %242 = math.exp %241 : vector<48x104xf32>
    %cst_101 = arith.constant 1.000000e+00 : f32
    %243 = vector.broadcast %cst_101 : f32 to vector<48x104xf32>
    %244 = arith.addf %243, %242 : vector<48x104xf32>
    %245 = arith.divf %243, %244 : vector<48x104xf32>
    %246 = vector.extract_strided_slice %239 {offsets = [48, 0], sizes = [16, 104], strides = [1, 1]} : vector<64x104xf32> to vector<16x104xf32>
    %247 = math.tanh %246 : vector<16x104xf32>
    %248 = vector.extract_strided_slice %245 {offsets = [0, 0], sizes = [16, 104], strides = [1, 1]} : vector<48x104xf32> to vector<16x104xf32>
    %249 = vector.extract_strided_slice %245 {offsets = [16, 0], sizes = [16, 104], strides = [1, 1]} : vector<48x104xf32> to vector<16x104xf32>
    %250 = vector.extract_strided_slice %245 {offsets = [32, 0], sizes = [16, 104], strides = [1, 1]} : vector<48x104xf32> to vector<16x104xf32>
    %251 = arith.mulf %249, %225 : vector<16x104xf32>
    %252 = arith.mulf %248, %247 : vector<16x104xf32>
    %253 = arith.addf %251, %252 : vector<16x104xf32>
    %254 = math.tanh %253 : vector<16x104xf32>
    %255 = arith.mulf %250, %254 : vector<16x104xf32>
    %c0_102 = arith.constant 0 : index
    %c8_103 = arith.constant 8 : index
    %c0_104 = arith.constant 0 : index
    %c0_105 = arith.constant 0 : index
    %256 = vector.load %arg4[%c0_102, %c8_103, %c0_104, %c0_105] : memref<1x12x16x104xf32, #tpu.memory_space<vmem>>, vector<1x1x16x104xf32>
    %257 = vector.shape_cast %256 : vector<1x1x16x104xf32> to vector<16x104xf32>
    %258 = vector.shape_cast %255 : vector<16x104xf32> to vector<1x1x16x104xf32>
    tpu.vector_store %arg4[%c0_102, %c8_103, %c0_104, %c0_105], %258 {strides = array<i32>} : memref<1x12x16x104xf32, #tpu.memory_space<vmem>>, vector<1x1x16x104xf32>,
    %c1_i32_106 = arith.constant 1 : i32
    %259 = tpu.dynamic_rotate %255 by %c1_i32_106 dim 1 : vector<16x104xf32>, i32 -> vector<16x104xf32>
    %260 = arith.mulf %259, %2 : vector<16x104xf32>
    %c103_i32_107 = arith.constant 103 : i32
    %261 = tpu.dynamic_rotate %255 by %c103_i32_107 dim 1 : vector<16x104xf32>, i32 -> vector<16x104xf32>
    %262 = arith.mulf %261, %4 : vector<16x104xf32>
    %263 = tpu.concatenate %260, %255, %262 in 0 : vector<16x104xf32>, vector<16x104xf32>, vector<16x104xf32> -> vector<48x104xf32>
    %c0_108 = arith.constant 0 : index
    %c9 = arith.constant 9 : index
    %c0_109 = arith.constant 0 : index
    %c0_110 = arith.constant 0 : index
    %264 = vector.load %arg1[%c0_108, %c9, %c0_109, %c0_110] : memref<1x12x64x104xf32, #tpu.memory_space<vmem>>, vector<1x1x64x104xf32>
    %265 = vector.shape_cast %264 : vector<1x1x64x104xf32> to vector<64x104xf32>
    %cst_111 = arith.constant dense<0.000000e+00> : vector<64x104xf32>
    %266 = tpu.matmul %0, %263, %cst_111 {dimension_numbers = #tpu.dot_dimension_numbers<[1], [0], [0], [1], [0, 0, 1, 1], [], []>} : vector<64x48xf32>, vector<48x104xf32>, vector<64x104xf32> -> vector<64x104xf32>
    %267 = arith.addf %265, %266 : vector<64x104xf32>
    %268 = vector.extract_strided_slice %267 {offsets = [0, 0], sizes = [48, 104], strides = [1, 1]} : vector<64x104xf32> to vector<48x104xf32>
    %269 = arith.negf %268 : vector<48x104xf32>
    %270 = math.exp %269 : vector<48x104xf32>
    %cst_112 = arith.constant 1.000000e+00 : f32
    %271 = vector.broadcast %cst_112 : f32 to vector<48x104xf32>
    %272 = arith.addf %271, %270 : vector<48x104xf32>
    %273 = arith.divf %271, %272 : vector<48x104xf32>
    %274 = vector.extract_strided_slice %267 {offsets = [48, 0], sizes = [16, 104], strides = [1, 1]} : vector<64x104xf32> to vector<16x104xf32>
    %275 = math.tanh %274 : vector<16x104xf32>
    %276 = vector.extract_strided_slice %273 {offsets = [0, 0], sizes = [16, 104], strides = [1, 1]} : vector<48x104xf32> to vector<16x104xf32>
    %277 = vector.extract_strided_slice %273 {offsets = [16, 0], sizes = [16, 104], strides = [1, 1]} : vector<48x104xf32> to vector<16x104xf32>
    %278 = vector.extract_strided_slice %273 {offsets = [32, 0], sizes = [16, 104], strides = [1, 1]} : vector<48x104xf32> to vector<16x104xf32>
    %279 = arith.mulf %277, %253 : vector<16x104xf32>
    %280 = arith.mulf %276, %275 : vector<16x104xf32>
    %281 = arith.addf %279, %280 : vector<16x104xf32>
    %282 = math.tanh %281 : vector<16x104xf32>
    %283 = arith.mulf %278, %282 : vector<16x104xf32>
    %c0_113 = arith.constant 0 : index
    %c9_114 = arith.constant 9 : index
    %c0_115 = arith.constant 0 : index
    %c0_116 = arith.constant 0 : index
    %284 = vector.load %arg4[%c0_113, %c9_114, %c0_115, %c0_116] : memref<1x12x16x104xf32, #tpu.memory_space<vmem>>, vector<1x1x16x104xf32>
    %285 = vector.shape_cast %284 : vector<1x1x16x104xf32> to vector<16x104xf32>
    %286 = vector.shape_cast %283 : vector<16x104xf32> to vector<1x1x16x104xf32>
    tpu.vector_store %arg4[%c0_113, %c9_114, %c0_115, %c0_116], %286 {strides = array<i32>} : memref<1x12x16x104xf32, #tpu.memory_space<vmem>>, vector<1x1x16x104xf32>,
    %c1_i32_117 = arith.constant 1 : i32
    %287 = tpu.dynamic_rotate %283 by %c1_i32_117 dim 1 : vector<16x104xf32>, i32 -> vector<16x104xf32>
    %288 = arith.mulf %287, %2 : vector<16x104xf32>
    %c103_i32_118 = arith.constant 103 : i32
    %289 = tpu.dynamic_rotate %283 by %c103_i32_118 dim 1 : vector<16x104xf32>, i32 -> vector<16x104xf32>
    %290 = arith.mulf %289, %4 : vector<16x104xf32>
    %291 = tpu.concatenate %288, %283, %290 in 0 : vector<16x104xf32>, vector<16x104xf32>, vector<16x104xf32> -> vector<48x104xf32>
    %c0_119 = arith.constant 0 : index
    %c10 = arith.constant 10 : index
    %c0_120 = arith.constant 0 : index
    %c0_121 = arith.constant 0 : index
    %292 = vector.load %arg1[%c0_119, %c10, %c0_120, %c0_121] : memref<1x12x64x104xf32, #tpu.memory_space<vmem>>, vector<1x1x64x104xf32>
    %293 = vector.shape_cast %292 : vector<1x1x64x104xf32> to vector<64x104xf32>
    %cst_122 = arith.constant dense<0.000000e+00> : vector<64x104xf32>
    %294 = tpu.matmul %0, %291, %cst_122 {dimension_numbers = #tpu.dot_dimension_numbers<[1], [0], [0], [1], [0, 0, 1, 1], [], []>} : vector<64x48xf32>, vector<48x104xf32>, vector<64x104xf32> -> vector<64x104xf32>
    %295 = arith.addf %293, %294 : vector<64x104xf32>
    %296 = vector.extract_strided_slice %295 {offsets = [0, 0], sizes = [48, 104], strides = [1, 1]} : vector<64x104xf32> to vector<48x104xf32>
    %297 = arith.negf %296 : vector<48x104xf32>
    %298 = math.exp %297 : vector<48x104xf32>
    %cst_123 = arith.constant 1.000000e+00 : f32
    %299 = vector.broadcast %cst_123 : f32 to vector<48x104xf32>
    %300 = arith.addf %299, %298 : vector<48x104xf32>
    %301 = arith.divf %299, %300 : vector<48x104xf32>
    %302 = vector.extract_strided_slice %295 {offsets = [48, 0], sizes = [16, 104], strides = [1, 1]} : vector<64x104xf32> to vector<16x104xf32>
    %303 = math.tanh %302 : vector<16x104xf32>
    %304 = vector.extract_strided_slice %301 {offsets = [0, 0], sizes = [16, 104], strides = [1, 1]} : vector<48x104xf32> to vector<16x104xf32>
    %305 = vector.extract_strided_slice %301 {offsets = [16, 0], sizes = [16, 104], strides = [1, 1]} : vector<48x104xf32> to vector<16x104xf32>
    %306 = vector.extract_strided_slice %301 {offsets = [32, 0], sizes = [16, 104], strides = [1, 1]} : vector<48x104xf32> to vector<16x104xf32>
    %307 = arith.mulf %305, %281 : vector<16x104xf32>
    %308 = arith.mulf %304, %303 : vector<16x104xf32>
    %309 = arith.addf %307, %308 : vector<16x104xf32>
    %310 = math.tanh %309 : vector<16x104xf32>
    %311 = arith.mulf %306, %310 : vector<16x104xf32>
    %c0_124 = arith.constant 0 : index
    %c10_125 = arith.constant 10 : index
    %c0_126 = arith.constant 0 : index
    %c0_127 = arith.constant 0 : index
    %312 = vector.load %arg4[%c0_124, %c10_125, %c0_126, %c0_127] : memref<1x12x16x104xf32, #tpu.memory_space<vmem>>, vector<1x1x16x104xf32>
    %313 = vector.shape_cast %312 : vector<1x1x16x104xf32> to vector<16x104xf32>
    %314 = vector.shape_cast %311 : vector<16x104xf32> to vector<1x1x16x104xf32>
    tpu.vector_store %arg4[%c0_124, %c10_125, %c0_126, %c0_127], %314 {strides = array<i32>} : memref<1x12x16x104xf32, #tpu.memory_space<vmem>>, vector<1x1x16x104xf32>,
    %c1_i32_128 = arith.constant 1 : i32
    %315 = tpu.dynamic_rotate %311 by %c1_i32_128 dim 1 : vector<16x104xf32>, i32 -> vector<16x104xf32>
    %316 = arith.mulf %315, %2 : vector<16x104xf32>
    %c103_i32_129 = arith.constant 103 : i32
    %317 = tpu.dynamic_rotate %311 by %c103_i32_129 dim 1 : vector<16x104xf32>, i32 -> vector<16x104xf32>
    %318 = arith.mulf %317, %4 : vector<16x104xf32>
    %319 = tpu.concatenate %316, %311, %318 in 0 : vector<16x104xf32>, vector<16x104xf32>, vector<16x104xf32> -> vector<48x104xf32>
    %c0_130 = arith.constant 0 : index
    %c11 = arith.constant 11 : index
    %c0_131 = arith.constant 0 : index
    %c0_132 = arith.constant 0 : index
    %320 = vector.load %arg1[%c0_130, %c11, %c0_131, %c0_132] : memref<1x12x64x104xf32, #tpu.memory_space<vmem>>, vector<1x1x64x104xf32>
    %321 = vector.shape_cast %320 : vector<1x1x64x104xf32> to vector<64x104xf32>
    %cst_133 = arith.constant dense<0.000000e+00> : vector<64x104xf32>
    %322 = tpu.matmul %0, %319, %cst_133 {dimension_numbers = #tpu.dot_dimension_numbers<[1], [0], [0], [1], [0, 0, 1, 1], [], []>} : vector<64x48xf32>, vector<48x104xf32>, vector<64x104xf32> -> vector<64x104xf32>
    %323 = arith.addf %321, %322 : vector<64x104xf32>
    %324 = vector.extract_strided_slice %323 {offsets = [0, 0], sizes = [48, 104], strides = [1, 1]} : vector<64x104xf32> to vector<48x104xf32>
    %325 = arith.negf %324 : vector<48x104xf32>
    %326 = math.exp %325 : vector<48x104xf32>
    %cst_134 = arith.constant 1.000000e+00 : f32
    %327 = vector.broadcast %cst_134 : f32 to vector<48x104xf32>
    %328 = arith.addf %327, %326 : vector<48x104xf32>
    %329 = arith.divf %327, %328 : vector<48x104xf32>
    %330 = vector.extract_strided_slice %323 {offsets = [48, 0], sizes = [16, 104], strides = [1, 1]} : vector<64x104xf32> to vector<16x104xf32>
    %331 = math.tanh %330 : vector<16x104xf32>
    %332 = vector.extract_strided_slice %329 {offsets = [0, 0], sizes = [16, 104], strides = [1, 1]} : vector<48x104xf32> to vector<16x104xf32>
    %333 = vector.extract_strided_slice %329 {offsets = [16, 0], sizes = [16, 104], strides = [1, 1]} : vector<48x104xf32> to vector<16x104xf32>
    %334 = vector.extract_strided_slice %329 {offsets = [32, 0], sizes = [16, 104], strides = [1, 1]} : vector<48x104xf32> to vector<16x104xf32>
    %335 = arith.mulf %333, %309 : vector<16x104xf32>
    %336 = arith.mulf %332, %331 : vector<16x104xf32>
    %337 = arith.addf %335, %336 : vector<16x104xf32>
    %338 = math.tanh %337 : vector<16x104xf32>
    %339 = arith.mulf %334, %338 : vector<16x104xf32>
    %c0_135 = arith.constant 0 : index
    %c11_136 = arith.constant 11 : index
    %c0_137 = arith.constant 0 : index
    %c0_138 = arith.constant 0 : index
    %340 = vector.load %arg4[%c0_135, %c11_136, %c0_137, %c0_138] : memref<1x12x16x104xf32, #tpu.memory_space<vmem>>, vector<1x1x16x104xf32>
    %341 = vector.shape_cast %340 : vector<1x1x16x104xf32> to vector<16x104xf32>
    %342 = vector.shape_cast %339 : vector<16x104xf32> to vector<1x1x16x104xf32>
    tpu.vector_store %arg4[%c0_135, %c11_136, %c0_137, %c0_138], %342 {strides = array<i32>} : memref<1x12x16x104xf32, #tpu.memory_space<vmem>>, vector<1x1x16x104xf32>,
    return
  }
  func.func @transform_0(%arg0: i32) -> (i32, i32, i32, i32) {
    %c0_i32 = arith.constant 0 : i32
    %c0_i32_0 = arith.constant 0 : i32
    %c0_i32_1 = arith.constant 0 : i32
    %c0_i32_2 = arith.constant 0 : i32
    return %arg0, %c0_i32, %c0_i32_0, %c0_i32_1 : i32, i32, i32, i32
  }
  func.func @transform_1(%arg0: i32) -> (i32, i32) {
    %c0_i32 = arith.constant 0 : i32
    %c0_i32_0 = arith.constant 0 : i32
    %c0_i32_1 = arith.constant 0 : i32
    return %c0_i32, %c0_i32_0 : i32, i32
  }
  func.func @transform_2(%arg0: i32) -> (i32, i32, i32) {
    %c0_i32 = arith.constant 0 : i32
    %c0_i32_0 = arith.constant 0 : i32
    %c0_i32_1 = arith.constant 0 : i32
    %c0_i32_2 = arith.constant 0 : i32
    return %c0_i32, %c0_i32_0, %c0_i32_1 : i32, i32, i32
  }
  func.func @transform_3(%arg0: i32) -> (i32, i32, i32, i32) {
    %c0_i32 = arith.constant 0 : i32
    %c0_i32_0 = arith.constant 0 : i32
    %c0_i32_1 = arith.constant 0 : i32
    %c0_i32_2 = arith.constant 0 : i32
    return %arg0, %c0_i32, %c0_i32_0, %c0_i32_1 : i32, i32, i32, i32
  }
}

module attributes {stable_mosaic.version = 11 : i64} {
  func.func @mlp_kernel(%arg0: i32, %arg1: memref<4x1664xf32, #tpu.memory_space<vmem>>, %arg2: memref<1664x192xf32, #tpu.memory_space<vmem>>, %arg3: memref<1x192xf32, #tpu.memory_space<vmem>>, %arg4: memref<1x192xf32, #tpu.memory_space<vmem>>, %arg5: memref<192x12xf32, #tpu.memory_space<vmem>>, %arg6: memref<1x12xf32, #tpu.memory_space<vmem>>, %arg7: memref<1x12xf32, #tpu.memory_space<vmem>>, %arg8: memref<12x4xf32, #tpu.memory_space<vmem>>, %arg9: memref<1x4xf32, #tpu.memory_space<vmem>>, %arg10: memref<4x4xf32, #tpu.memory_space<vmem>>, %arg11: memref<4x192xf32, #tpu.memory_space<vmem>>) attributes {dimension_semantics = [#tpu.dimension_semantics<arbitrary>], iteration_bounds = array<i64: 6>, scalar_prefetch = 0 : i64, scratch_operands = 1 : i64, tpu.core_type = #tpu.core_type<tc>, window_params = [{transform_indices = @transform_0, window_bounds = array<i64: 4, 1664>}, {transform_indices = @transform_1, window_bounds = array<i64: 1664, 192>}, {pipeline_mode = #tpu.pipeline_mode<synchronous>, transform_indices = @transform_2, window_bounds = array<i64: 1, 192>}, {pipeline_mode = #tpu.pipeline_mode<synchronous>, transform_indices = @transform_3, window_bounds = array<i64: 1, 192>}, {pipeline_mode = #tpu.pipeline_mode<synchronous>, transform_indices = @transform_4, window_bounds = array<i64: 192, 12>}, {pipeline_mode = #tpu.pipeline_mode<synchronous>, transform_indices = @transform_5, window_bounds = array<i64: 1, 12>}, {pipeline_mode = #tpu.pipeline_mode<synchronous>, transform_indices = @transform_6, window_bounds = array<i64: 1, 12>}, {pipeline_mode = #tpu.pipeline_mode<synchronous>, transform_indices = @transform_7, window_bounds = array<i64: 12, 4>}, {pipeline_mode = #tpu.pipeline_mode<synchronous>, transform_indices = @transform_8, window_bounds = array<i64: 1, 4>}, {pipeline_mode = #tpu.pipeline_mode<synchronous>, transform_indices = @transform_9, window_bounds = array<i64: 4, 4>}]} {
    %c0_i32 = arith.constant 0 : i32
    %0 = arith.cmpi eq, %arg0, %c0_i32 : i32
    %1 = arith.extui %0 : i1 to i32
    %c0_i32_0 = arith.constant 0 : i32
    %2 = arith.cmpi ne, %1, %c0_i32_0 : i32
    scf.if %2 {
      %cst_9 = arith.constant 0.000000e+00 : f32
      %12 = vector.broadcast %cst_9 : f32 to vector<4x192xf32>
      %c0_10 = arith.constant 0 : index
      %c0_11 = arith.constant 0 : index
      %13 = vector.load %arg11[%c0_10, %c0_11] : memref<4x192xf32, #tpu.memory_space<vmem>>, vector<4x192xf32>
      tpu.vector_store %arg11[%c0_10, %c0_11], %12 {strides = array<i32>} : memref<4x192xf32, #tpu.memory_space<vmem>>, vector<4x192xf32>,
    } else {
    }
    %c0 = arith.constant 0 : index
    %c0_1 = arith.constant 0 : index
    %3 = vector.load %arg11[%c0, %c0_1] : memref<4x192xf32, #tpu.memory_space<vmem>>, vector<4x192xf32>
    %c0_2 = arith.constant 0 : index
    %c0_3 = arith.constant 0 : index
    %4 = vector.load %arg1[%c0_2, %c0_3] : memref<4x1664xf32, #tpu.memory_space<vmem>>, vector<4x1664xf32>
    %c0_4 = arith.constant 0 : index
    %c0_5 = arith.constant 0 : index
    %5 = vector.load %arg2[%c0_4, %c0_5] : memref<1664x192xf32, #tpu.memory_space<vmem>>, vector<1664x192xf32>
    %cst = arith.constant dense<0.000000e+00> : vector<4x192xf32>
    %6 = tpu.matmul %4, %5, %cst {dimension_numbers = #tpu.dot_dimension_numbers<[1], [0], [0], [1], [0, 0, 1, 1], [], []>} : vector<4x1664xf32>, vector<1664x192xf32>, vector<4x192xf32> -> vector<4x192xf32>
    %7 = arith.addf %3, %6 : vector<4x192xf32>
    %c0_6 = arith.constant 0 : index
    %c0_7 = arith.constant 0 : index
    %8 = vector.load %arg11[%c0_6, %c0_7] : memref<4x192xf32, #tpu.memory_space<vmem>>, vector<4x192xf32>
    tpu.vector_store %arg11[%c0_6, %c0_7], %7 {strides = array<i32>} : memref<4x192xf32, #tpu.memory_space<vmem>>, vector<4x192xf32>,
    %c5_i32 = arith.constant 5 : i32
    %9 = arith.cmpi eq, %arg0, %c5_i32 : i32
    %10 = arith.extui %9 : i1 to i32
    %c0_i32_8 = arith.constant 0 : i32
    %11 = arith.cmpi ne, %10, %c0_i32_8 : i32
    scf.if %11 {
      %c0_9 = arith.constant 0 : index
      %c0_10 = arith.constant 0 : index
      %12 = vector.load %arg11[%c0_9, %c0_10] : memref<4x192xf32, #tpu.memory_space<vmem>>, vector<4x192xf32>
      %c0_11 = arith.constant 0 : index
      %c0_12 = arith.constant 0 : index
      %13 = vector.load %arg3[%c0_11, %c0_12] : memref<1x192xf32, #tpu.memory_space<vmem>>, vector<1x192xf32>
      %14 = vector.broadcast %13 : vector<1x192xf32> to vector<4x192xf32>
      %15 = arith.mulf %12, %14 : vector<4x192xf32>
      %c0_13 = arith.constant 0 : index
      %c0_14 = arith.constant 0 : index
      %16 = vector.load %arg4[%c0_13, %c0_14] : memref<1x192xf32, #tpu.memory_space<vmem>>, vector<1x192xf32>
      %17 = vector.broadcast %16 : vector<1x192xf32> to vector<4x192xf32>
      %18 = arith.addf %15, %17 : vector<4x192xf32>
      %cst_15 = arith.constant 0.000000e+00 : f32
      %19 = vector.broadcast %cst_15 : f32 to vector<4x192xf32>
      %20 = arith.maximumf %18, %19 : vector<4x192xf32>
      %c0_16 = arith.constant 0 : index
      %c0_17 = arith.constant 0 : index
      %21 = vector.load %arg5[%c0_16, %c0_17] : memref<192x12xf32, #tpu.memory_space<vmem>>, vector<192x12xf32>
      %cst_18 = arith.constant dense<0.000000e+00> : vector<4x12xf32>
      %22 = tpu.matmul %20, %21, %cst_18 {dimension_numbers = #tpu.dot_dimension_numbers<[1], [0], [0], [1], [0, 0, 1, 1], [], []>} : vector<4x192xf32>, vector<192x12xf32>, vector<4x12xf32> -> vector<4x12xf32>
      %c0_19 = arith.constant 0 : index
      %c0_20 = arith.constant 0 : index
      %23 = vector.load %arg6[%c0_19, %c0_20] : memref<1x12xf32, #tpu.memory_space<vmem>>, vector<1x12xf32>
      %24 = vector.broadcast %23 : vector<1x12xf32> to vector<4x12xf32>
      %25 = arith.mulf %22, %24 : vector<4x12xf32>
      %c0_21 = arith.constant 0 : index
      %c0_22 = arith.constant 0 : index
      %26 = vector.load %arg7[%c0_21, %c0_22] : memref<1x12xf32, #tpu.memory_space<vmem>>, vector<1x12xf32>
      %27 = vector.broadcast %26 : vector<1x12xf32> to vector<4x12xf32>
      %28 = arith.addf %25, %27 : vector<4x12xf32>
      %cst_23 = arith.constant 0.000000e+00 : f32
      %29 = vector.broadcast %cst_23 : f32 to vector<4x12xf32>
      %30 = arith.maximumf %28, %29 : vector<4x12xf32>
      %c0_24 = arith.constant 0 : index
      %c0_25 = arith.constant 0 : index
      %31 = vector.load %arg8[%c0_24, %c0_25] : memref<12x4xf32, #tpu.memory_space<vmem>>, vector<12x4xf32>
      %cst_26 = arith.constant dense<0.000000e+00> : vector<4x4xf32>
      %32 = tpu.matmul %30, %31, %cst_26 {dimension_numbers = #tpu.dot_dimension_numbers<[1], [0], [0], [1], [0, 0, 1, 1], [], []>} : vector<4x12xf32>, vector<12x4xf32>, vector<4x4xf32> -> vector<4x4xf32>
      %c0_27 = arith.constant 0 : index
      %c0_28 = arith.constant 0 : index
      %33 = vector.load %arg9[%c0_27, %c0_28] : memref<1x4xf32, #tpu.memory_space<vmem>>, vector<1x4xf32>
      %34 = vector.broadcast %33 : vector<1x4xf32> to vector<4x4xf32>
      %35 = arith.addf %32, %34 : vector<4x4xf32>
      %c0_29 = arith.constant 0 : index
      %c0_30 = arith.constant 0 : index
      %36 = vector.load %arg10[%c0_29, %c0_30] : memref<4x4xf32, #tpu.memory_space<vmem>>, vector<4x4xf32>
      tpu.vector_store %arg10[%c0_29, %c0_30], %35 {strides = array<i32>} : memref<4x4xf32, #tpu.memory_space<vmem>>, vector<4x4xf32>,
    } else {
    }
    return
  }
  func.func @transform_0(%arg0: i32) -> (i32, i32) {
    %c0_i32 = arith.constant 0 : i32
    %c0_i32_0 = arith.constant 0 : i32
    return %c0_i32, %arg0 : i32, i32
  }
  func.func @transform_1(%arg0: i32) -> (i32, i32) {
    %c0_i32 = arith.constant 0 : i32
    %c0_i32_0 = arith.constant 0 : i32
    return %arg0, %c0_i32 : i32, i32
  }
  func.func @transform_2(%arg0: i32) -> (i32, i32) {
    %c0_i32 = arith.constant 0 : i32
    %c0_i32_0 = arith.constant 0 : i32
    %c0_i32_1 = arith.constant 0 : i32
    return %c0_i32, %c0_i32_0 : i32, i32
  }
  func.func @transform_3(%arg0: i32) -> (i32, i32) {
    %c0_i32 = arith.constant 0 : i32
    %c0_i32_0 = arith.constant 0 : i32
    %c0_i32_1 = arith.constant 0 : i32
    return %c0_i32, %c0_i32_0 : i32, i32
  }
  func.func @transform_4(%arg0: i32) -> (i32, i32) {
    %c0_i32 = arith.constant 0 : i32
    %c0_i32_0 = arith.constant 0 : i32
    %c0_i32_1 = arith.constant 0 : i32
    return %c0_i32, %c0_i32_0 : i32, i32
  }
  func.func @transform_5(%arg0: i32) -> (i32, i32) {
    %c0_i32 = arith.constant 0 : i32
    %c0_i32_0 = arith.constant 0 : i32
    %c0_i32_1 = arith.constant 0 : i32
    return %c0_i32, %c0_i32_0 : i32, i32
  }
  func.func @transform_6(%arg0: i32) -> (i32, i32) {
    %c0_i32 = arith.constant 0 : i32
    %c0_i32_0 = arith.constant 0 : i32
    %c0_i32_1 = arith.constant 0 : i32
    return %c0_i32, %c0_i32_0 : i32, i32
  }
  func.func @transform_7(%arg0: i32) -> (i32, i32) {
    %c0_i32 = arith.constant 0 : i32
    %c0_i32_0 = arith.constant 0 : i32
    %c0_i32_1 = arith.constant 0 : i32
    return %c0_i32, %c0_i32_0 : i32, i32
  }
  func.func @transform_8(%arg0: i32) -> (i32, i32) {
    %c0_i32 = arith.constant 0 : i32
    %c0_i32_0 = arith.constant 0 : i32
    %c0_i32_1 = arith.constant 0 : i32
    return %c0_i32, %c0_i32_0 : i32, i32
  }
  func.func @transform_9(%arg0: i32) -> (i32, i32) {
    %c0_i32 = arith.constant 0 : i32
    %c0_i32_0 = arith.constant 0 : i32
    %c0_i32_1 = arith.constant 0 : i32
    return %c0_i32, %c0_i32_0 : i32, i32
  }
}

</mosaic_0001>

<llo_original>
// kernel: crop_convlstm_forward.2
$region0: #{crop_convlstm_forward.2}
  #allocation0 [shape = 'u32[]', space=smem, size = 0x4, offset = 0x4, fixed_abs, tag = 'smem constant byte address 0x4 - core index']
  #allocation1 [shape = 'u32[144,128]{1,0:T(1,128)}', space=vmem, size = 0x12000, scoped, tag = 'internal scratch']
  %s0 = inlined_call_operand.vmem [shape: f32[2,12,64,104], index: 0, kind: input, shape index: {}]
  %s1 = inlined_call_operand.vmem [shape: f32[64,48], index: 1, kind: input, shape index: {}]
  %s2 = inlined_call_operand.vmem [shape: f32[2,16,104], index: 2, kind: input, shape index: {}]
  %s3 = inlined_call_operand.vmem [shape: f32[2,12,16,104], index: 3, kind: output, shape index: {}]
  %s4 = sld [smem:[#allocation0]]
  $region45: #{crop_convlstm_forward.2} parent=0
    _
  %s6 = ssub.s32 1, %s4
  %s7 = scalar_select 0, %s6, %s4
  loop: start=0, step=1, limit=4
  $region2: #{crop_convlstm_forward.2} parent=0 // loop_pre_header
    _
  $region3: #{crop_convlstm_forward.2} parent=0 // loop_header
    %s9 = sphi 0, %s13
    %p10 = scmp.ge.s32.totalorder %s9, 4
    %s19 = sphi 0, %s21
    %s22 = sphi 0, %s19
    %s23 = sphi 0, %s22
    %s39 = sphi 0, %s23
    %s43 = sphi 0, %s43
    %s45 = sphi 0, %s43
    %s46 = sphi 0, %s45
    %s60 = sphi 0, %s46
    %s64 = sphi 0, %s64
    %s66 = sphi 0, %s64
    %s67 = sphi 0, %s66
    %s81 = sphi 0, %s67
    %s87 = sphi 0, %s89
    %s90 = sphi 0, %s87
    %s91 = sphi 0, %s90
    %s107 = sphi 0, %s91
  $region4: #{crop_convlstm_forward.2} parent=0 // loop_header_branch
    %12 = sbr.rel (%p10) target = $region8
  $region5: #{crop_convlstm_forward.2} parent=0 // loop_body
    %s14 = ssub.s32 %s9, 1
    %s15 = ssub.s32 %s9, 2
    %s16 = sadd.s32 %s9, 1
    %s17 = ssub.s32 %s9, %s16
    %p18 = scmp.eq.s32.totalorder %s17, 0
    %s20 = sadd.s32 %s19, 1
    %s21 = scalar_select %p18, %s19, %s20
    %p24 = pneg %p18
    %p25 = scmp.eq.s32.totalorder %s9, 1
    %p26 = por %p24, %p25
    %p27 = scmp.ne.s32.totalorder %s19, %s22
    %p28 = scmp.eq.s32.totalorder %s9, 0
    %p29 = por %p27, %p28
    %p30 = scmp.ne.s32.totalorder %s19, %s22
    %p31 = scmp.eq.s32.totalorder %s14, 1
    %p32 = por %p30, %p31
    %p33 = scmp.ne.s32.totalorder %s22, %s23
    %p34 = scmp.eq.s32.totalorder %s14, 0
    %p35 = por %p33, %p34
    %p36 = scmp.ne.s32.totalorder %s22, %s23
    %p37 = scmp.eq.s32.totalorder %s15, 1
    %p38 = por %p36, %p37
    %p40 = scmp.ne.s32.totalorder %s23, %s39
    %p41 = scmp.eq.s32.totalorder %s15, 0
    %p42 = por %p40, %p41
    %s44 = sadd.s32 %s43, 1
    %p47 = scmp.eq.s32.totalorder %s9, 1
    %p48 = scmp.ne.s32.totalorder %s43, %s45
    %p49 = scmp.eq.s32.totalorder %s9, 0
    %p50 = por %p48, %p49
    %p51 = scmp.ne.s32.totalorder %s43, %s45
    %p52 = scmp.eq.s32.totalorder %s14, 1
    %p53 = por %p51, %p52
    %p54 = scmp.ne.s32.totalorder %s45, %s46
    %p55 = scmp.eq.s32.totalorder %s14, 0
    %p56 = por %p54, %p55
    %p57 = scmp.ne.s32.totalorder %s45, %s46
    %p58 = scmp.eq.s32.totalorder %s15, 1
    %p59 = por %p57, %p58
    %p61 = scmp.ne.s32.totalorder %s46, %s60
    %p62 = scmp.eq.s32.totalorder %s15, 0
    %p63 = por %p61, %p62
    %s65 = sadd.s32 %s64, 1
    %p68 = scmp.eq.s32.totalorder %s9, 1
    %p69 = scmp.ne.s32.totalorder %s64, %s66
    %p70 = scmp.eq.s32.totalorder %s9, 0
    %p71 = por %p69, %p70
    %p72 = scmp.ne.s32.totalorder %s64, %s66
    %p73 = scmp.eq.s32.totalorder %s14, 1
    %p74 = por %p72, %p73
    %p75 = scmp.ne.s32.totalorder %s66, %s67
    %p76 = scmp.eq.s32.totalorder %s14, 0
    %p77 = por %p75, %p76
    %p78 = scmp.ne.s32.totalorder %s66, %s67
    %p79 = scmp.eq.s32.totalorder %s15, 1
    %p80 = por %p78, %p79
    %p82 = scmp.ne.s32.totalorder %s67, %s81
    %p83 = scmp.eq.s32.totalorder %s15, 0
    %p84 = por %p82, %p83
    %s85 = ssub.s32 %s9, %s16
    %p86 = scmp.eq.s32.totalorder %s85, 0
    %s88 = sadd.s32 %s87, 1
    %s89 = scalar_select %p86, %s87, %s88
    %p92 = pneg %p86
    %p93 = scmp.eq.s32.totalorder %s9, 1
    %p94 = por %p92, %p93
    %p95 = scmp.ne.s32.totalorder %s87, %s90
    %p96 = scmp.eq.s32.totalorder %s9, 0
    %p97 = por %p95, %p96
    %p98 = scmp.ne.s32.totalorder %s87, %s90
    %p99 = scmp.eq.s32.totalorder %s14, 1
    %p100 = por %p98, %p99
    %p101 = scmp.ne.s32.totalorder %s90, %s91
    %p102 = scmp.eq.s32.totalorder %s14, 0
    %p103 = por %p101, %p102
    %p104 = scmp.ne.s32.totalorder %s90, %s91
    %p105 = scmp.eq.s32.totalorder %s15, 1
    %p106 = por %p104, %p105
    %p108 = scmp.ne.s32.totalorder %s91, %s107
    %p109 = scmp.eq.s32.totalorder %s15, 0
    %p110 = por %p108, %p109
    %p111 = scmp.le.s32.totalorder 1, %s9
    %p112 = scmp.lt.s32.totalorder %s9, 3
    %p113 = pnand %p111, %p112
    %p114 = pneg %p113
    // Predicated region
    $region9: #{crop_convlstm_forward.2} parent=5 // pred_check
      _
    $region10: #{crop_convlstm_forward.2} parent=5 // pred_check_branch
      %116 = sbr.rel (%p113) target = $region12
    $region11: #{crop_convlstm_forward.2} parent=5 // pred_region
      %s117 = ssub.s32 %s9, 1
      // Predicated region
      $region13: #{crop_convlstm_forward.2} parent=11 // pred_check
        %p118 = pneg %p56
      $region14: #{crop_convlstm_forward.2} parent=11 // pred_check_branch
        %120 = sbr.rel (%p118) target = $region16
      $region15: #{crop_convlstm_forward.2} parent=11 // pred_region
        _
      $region16: #{crop_convlstm_forward.2} parent=11 // pred_fallthru
        _
      // Predicated region
      $region17: #{crop_convlstm_forward.2} parent=11 // pred_check
        %p121 = pneg %p77
      $region18: #{crop_convlstm_forward.2} parent=11 // pred_check_branch
        %123 = sbr.rel (%p121) target = $region20
      $region19: #{crop_convlstm_forward.2} parent=11 // pred_region
        _
      $region20: #{crop_convlstm_forward.2} parent=11 // pred_fallthru
        _
    $region12: #{crop_convlstm_forward.2} parent=5 // pred_fallthru
      _
    %p124 = scmp.lt.s32.totalorder %s9, 2
    // Predicated region
    $region21: #{crop_convlstm_forward.2} parent=5 // pred_check
      %p125 = pneg %p124
    $region22: #{crop_convlstm_forward.2} parent=5 // pred_check_branch
      %127 = sbr.rel (%p125) target = $region24
    $region23: #{crop_convlstm_forward.2} parent=5 // pred_region
      // Predicated region
      $region25: #{crop_convlstm_forward.2} parent=23 // pred_check
        %p128 = pneg %p29
      $region26: #{crop_convlstm_forward.2} parent=23 // pred_check_branch
        %130 = sbr.rel (%p128) target = $region28
      $region27: #{crop_convlstm_forward.2} parent=23 // pred_region
        %p131 = scmp.lt.s32.totalorder %s9, 1
        %s132 = scalar_select %p131, %s9, 1
        %s133 = smul.addr %s132, 96
        %s134 = smul.addr %s133, 8
        %s135 = scalar_lea.vmem %s0, %s134
      $region28: #{crop_convlstm_forward.2} parent=23 // pred_fallthru
        _
    $region24: #{crop_convlstm_forward.2} parent=5 // pred_fallthru
      _
    %p136 = scmp.le.s32.totalorder 1, %s9
    %p137 = scmp.lt.s32.totalorder %s9, 3
    %p138 = pnand %p136, %p137
    %p139 = pneg %p138
    // Predicated region
    $region29: #{crop_convlstm_forward.2} parent=5 // pred_check
      _
    $region30: #{crop_convlstm_forward.2} parent=5 // pred_check_branch
      %141 = sbr.rel (%p138) target = $region32
    $region31: #{crop_convlstm_forward.2} parent=5 // pred_region
      %s142 = ssub.s32 %s9, 1
      %p143 = scmp.lt.s32.totalorder %s14, 1
      %s144 = scalar_select %p143, %s14, 1
      %s145 = smul.addr %s144, 96
      %s146 = smul.addr %s145, 8
      %s147 = scalar_lea.vmem %s0, %s146
      %p148 = pneg %p35
      %p149 = pneg %p32
      %p150 = pneg %p56
      %p151 = pneg %p53
      %p152 = pneg %p77
      %p153 = pneg %p74
      %p154 = pneg %p103
      %p155 = pneg %p100
      %p156 = scmp.lt.s32.totalorder %s14, 1
      %s157 = scalar_select %p156, %s14, 1
      %s158 = smul.addr %s157, 24
      %s159 = smul.addr %s158, 8
      %s160 = scalar_lea.vmem %s3, %s159
      %p161 = scmp.lt.s32.totalorder %s14, 1
      %s162 = scalar_select %p161, %s14, 1
      %s163 = smul.addr %s162, 96
      %s164 = smul.addr %s163, 8
      %s165 = scalar_lea.vmem %s0, %s164
      %p166 = scmp.lt.s32.totalorder %s14, 1
      %s167 = scalar_select %p166, %s14, 1
      %s168 = smul.addr %s167, 24
      %s169 = smul.addr %s168, 8
      %s170 = scalar_lea.vmem %s3, %s169
      %v171 = vld [vmem:[%s1] sm:$0xff]
      %v172 = vld [vmem:[%s1 + $0x8] sm:$0xff]
      %v173 = vld [vmem:[%s1 + $0x10] sm:$0xff]
      %v174 = vld [vmem:[%s1 + $0x18] sm:$0xff]
      %v175 = vld [vmem:[%s1 + $0x20] sm:$0xff]
      %v176 = vld [vmem:[%s1 + $0x28] sm:$0xff]
      %v177 = vld [vmem:[%s1 + $0x30] sm:$0xff]
      %v178 = vld [vmem:[%s1 + $0x38] sm:$0xff]
      %v179 = vld [vmem:[%s2] sm:$0xff]
      %v180 = vld [vmem:[%s2 + $0x8] sm:$0xff]
      %s181 = scalar_lea.vmem %s2, 16
      %v182 = vld [vmem:[%s181] sm:$0xff]
      %v183 = vld [vmem:[%s181 + $0x8] sm:$0xff]
      %vm184 = vcmask 1048384
      %185 = vrot.lane.b32.xlu0 0.0, 104
      %v186 = vpop.permute.xlu0 %185
      %v187 = vsel %vm184, %v186, 0.0
      %188 = vrot.lane.b32.xlu0 %v187, 104
      %v189 = vpop.permute.xlu0 %188
      %v190 = vsel %vm184, %v189, 0.0
      %193 = vrot.lane.b32.xlu0 %v179, 103
      %v194 = vpop.permute.xlu0 %193
      %195 = vrot.lane.b32.xlu0 %v180, 103
      %v196 = vpop.permute.xlu0 %195
      %v199 = vmul.f32 %v190, %v194
      %v200 = vmul.f32 %v189, %v194
      %v201 = vmul.f32 %v190, %v196
      %v202 = vmul.f32 %v189, %v196
      %205 = vrot.lane.b32.xlu0 %v182, 1
      %v206 = vpop.permute.xlu0 %205
      %207 = vrot.lane.b32.xlu0 %v183, 1
      %v208 = vpop.permute.xlu0 %207
      %v211 = vmul.f32 %v190, %v206
      %v212 = vmul.f32 %v190, %v208
      %215 = vrot.lane.b32.xlu0 %v211, 102
      %v216 = vpop.permute.xlu0 %215
      %217 = vrot.lane.b32.xlu0 %v212, 102
      %v218 = vpop.permute.xlu0 %217
      %v219 = vld [vmem:[%s165] sm:$0xff]
      %v220 = vld [vmem:[%s165 + $0x8] sm:$0xff]
      %v221 = vld [vmem:[%s165 + $0x10] sm:$0xff]
      %v222 = vld [vmem:[%s165 + $0x18] sm:$0xff]
      %v223 = vld [vmem:[%s165 + $0x20] sm:$0xff]
      %v224 = vld [vmem:[%s165 + $0x28] sm:$0xff]
      %v225 = vld [vmem:[%s165 + $0x30] sm:$0xff]
      %v226 = vld [vmem:[%s165 + $0x38] sm:$0xff]
      %232 = vrot.lane.b32.xlu0 %v199, 25
      %v233 = vpop.permute.xlu0 %232
      %234 = vrot.lane.b32.xlu0 %v200, 25
      %v235 = vpop.permute.xlu0 %234
      %236 = vrot.lane.b32.xlu0 %v201, 25
      %v237 = vpop.permute.xlu0 %236
      %238 = vrot.lane.b32.xlu0 %v202, 25
      %v239 = vpop.permute.xlu0 %238
      %240 = vrot.lane.b32.xlu0 0.0, 25
      %v241 = vpop.permute.xlu0 %240
      %242 = vrot.lane.b32.xlu0 %v216, 25
      %v243 = vpop.permute.xlu0 %242
      %244 = vrot.lane.b32.xlu0 %v218, 25
      %v245 = vpop.permute.xlu0 %244
      %vm246 = vcmask 203776
      %v247 = vsel %vm246, %v233, %v235
      %v248 = vsel %vm246, %v237, %v239
      %vm254 = vcmask 392192
      %v256 = vsel %vm254, %v171, 0
      %v259 = vsel %vm254, %v172, 0
      %v262 = vsel %vm254, %v173, 0
      %v265 = vsel %vm254, %v174, 0
      %v268 = vsel %vm254, %v175, 0
      %v271 = vsel %vm254, %v176, 0
      %v274 = vsel %vm254, %v177, 0
      %v277 = vsel %vm254, %v178, 0
      %279 = vmatprep.subr.mxu0 0.0
      %280 = vmatpush1.msra.mxu0 %v247
      %281 = vmatprep.subr.mxu0 0.0
      %282 = vmatpush1.msra.mxu0 %v248
      %283 = vmatprep.subr.mxu0 0.0
      %284 = vmatpush1.msra.mxu0 %v241
      %285 = vmatprep.subr.mxu0 0.0
      %286 = vmatpush1.msra.mxu0 %v241
      %287 = vmatprep.subr.mxu0 0.0
      %288 = vmatpush1.msra.mxu0 %v243
      %289 = vmatprep.subr.mxu0 0.0
      %290 = vmatpush1.msra.mxu0 %v245
      %291 = vmatprep.subr.mxu0 0.0
      %292 = vmatpush1.msra.mxu0 0.0
      %293 = vmatprep.subr.mxu0 0.0
      %294 = vmatpush1.msra.mxu0 0.0
      %295 = vmatprep.subr.mxu0 0.0
      %296 = vmatpush1.msra.mxu0 0.0
      %297 = vmatprep.subr.mxu0 0.0
      %298 = vmatpush1.msra.mxu0 0.0
      %299 = vmatprep.subr.mxu0 0.0
      %300 = vmatpush1.msra.mxu0 0.0
      %301 = vmatprep.subr.mxu0 0.0
      %302 = vmatpush1.msra.mxu0 0.0
      %303 = vmatprep.subr.mxu0 0.0
      %304 = vmatpush1.msra.mxu0 0.0
      %305 = vmatprep.subr.mxu0 0.0
      %306 = vmatpush1.msra.mxu0 0.0
      %307 = vmatprep.subr.mxu0 0.0
      %308 = vmatpush1.msra.mxu0 0.0
      %309 = vmatprep.subr.mxu0 0.0
      %310 = vmatpush1.msra.mxu0 0.0
      %311 = vmatprep.subr.mxu0 0.0
      %312 = vmatpush1.msra.mxu0 0.0
      %313 = vmatprep.subr.mxu0 0.0
      %314 = vmatpush1.msra.mxu0 0.0
      %315 = vmatprep.subr.mxu0 0.0
      %316 = vmatpush1.msra.mxu0 0.0
      %317 = vmatprep.subr.mxu0 0.0
      %318 = vmatpush1.msra.mxu0 0.0
      %319 = vmatprep.subr.mxu0 0.0
      %320 = vmatpush1.msra.mxu0 0.0
      %321 = vmatprep.subr.mxu0 0.0
      %322 = vmatpush1.msra.mxu0 0.0
      %323 = vmatprep.subr.mxu0 0.0
      %324 = vmatpush1.msra.mxu0 0.0
      %325 = vmatprep.subr.mxu0 0.0
      %326 = vmatpush1.msra.mxu0 0.0
      %327 = vmatprep.subr.mxu0 0.0
      %328 = vmatpush1.msra.mxu0 0.0
      %329 = vmatprep.subr.mxu0 0.0
      %330 = vmatpush1.msra.mxu0 0.0
      %331 = vmatprep.subr.mxu0 0.0
      %332 = vmatpush1.msra.mxu0 0.0
      %333 = vmatprep.subr.mxu0 0.0
      %334 = vmatpush1.msra.mxu0 0.0
      %335 = vmatprep.subr.mxu0 0.0
      %336 = vmatpush1.msra.mxu0 0.0
      %337 = vmatprep.subr.mxu0 0.0
      %338 = vmatpush1.msra.mxu0 0.0
      %339 = vmatprep.subr.mxu0 0.0
      %340 = vmatpush1.msra.mxu0 0.0
      %341 = vmatprep.subr.mxu0 0.0
      %342 = vmatpush1.msra.mxu0 0.0
      %343 = vmatprep.mubr.f32.mxu0 0.0
      %344 = vmatmul.mubr.f32.gmra.mrb[0].mxu0 %v256
      %v345 = vpop.f32.mrb[0].mxu0
      %v346 = vadd.f32 0.0, %v345
      %v347 = vpop.f32.mrb[0].mxu0
      %348 = vmatprep.mubr.f32.mxu0 0.0
      %349 = vmatmul.mubr.f32.gmra.mrb[0].mxu0 %v259
      %v350 = vpop.f32.mrb[0].mxu0
      %v351 = vadd.f32 0.0, %v350
      %v352 = vpop.f32.mrb[0].mxu0
      %353 = vmatprep.mubr.f32.mxu0 0.0
      %354 = vmatmul.mubr.f32.gmra.mrb[0].mxu0 %v262
      %v355 = vpop.f32.mrb[0].mxu0
      %v356 = vadd.f32 0.0, %v355
      %v357 = vpop.f32.mrb[0].mxu0
      %358 = vmatprep.mubr.f32.mxu0 0.0
      %359 = vmatmul.mubr.f32.gmra.mrb[0].mxu0 %v265
      %v360 = vpop.f32.mrb[0].mxu0
      %v361 = vadd.f32 0.0, %v360
      %v362 = vpop.f32.mrb[0].mxu0
      %363 = vmatprep.mubr.f32.mxu0 0.0
      %364 = vmatmul.mubr.f32.gmra.mrb[0].mxu0 %v268
      %v365 = vpop.f32.mrb[0].mxu0
      %v366 = vadd.f32 0.0, %v365
      %v367 = vpop.f32.mrb[0].mxu0
      %368 = vmatprep.mubr.f32.mxu0 0.0
      %369 = vmatmul.mubr.f32.gmra.mrb[0].mxu0 %v271
      %v370 = vpop.f32.mrb[0].mxu0
      %v371 = vadd.f32 0.0, %v370
      %v372 = vpop.f32.mrb[0].mxu0
      %373 = vmatprep.mubr.f32.mxu0 0.0
      %374 = vmatmul.mubr.f32.gmra.mrb[0].mxu0 %v274
      %v375 = vpop.f32.mrb[0].mxu0
      %v376 = vadd.f32 0.0, %v375
      %v377 = vpop.f32.mrb[0].mxu0
      %378 = vmatprep.mubr.f32.mxu0 0.0
      %379 = vmatmul.mubr.f32.gmra.mrb[0].mxu0 %v277
      %v380 = vpop.f32.mrb[0].mxu0
      %v381 = vadd.f32 0.0, %v380
      %v382 = vpop.f32.mrb[0].mxu0
      %383 = vdwg.mxu0
      %v384 = vadd.f32 %v219, %v346
      %v385 = vadd.f32 %v220, %v351
      %v386 = vadd.f32 %v221, %v356
      %v387 = vadd.f32 %v222, %v361
      %v388 = vadd.f32 %v223, %v366
      %v389 = vadd.f32 %v224, %v371
      %v390 = vadd.f32 %v225, %v376
      %v391 = vadd.f32 %v226, %v381
      %v392 = vxor.u32 %v384, 2147483648
      %v393 = vxor.u32 %v385, 2147483648
      %v394 = vxor.u32 %v386, 2147483648
      %v395 = vxor.u32 %v387, 2147483648
      %v396 = vxor.u32 %v388, 2147483648
      %v397 = vxor.u32 %v389, 2147483648
      %v398 = vmul.f32 %v392, 1.442695
      %v399 = vpow.pop %v398
      %v400 = vmul.f32 %v393, 1.442695
      %v401 = vpow.pop %v400
      %v402 = vmul.f32 %v394, 1.442695
      %v403 = vpow.pop %v402
      %v404 = vmul.f32 %v395, 1.442695
      %v405 = vpow.pop %v404
      %v406 = vmul.f32 %v396, 1.442695
      %v407 = vpow.pop %v406
      %v408 = vmul.f32 %v397, 1.442695
      %v409 = vpow.pop %v408
      %v410 = vadd.f32 %v399, 1.0
      %v411 = vadd.f32 %v401, 1.0
      %v412 = vadd.f32 %v403, 1.0
      %v413 = vadd.f32 %v405, 1.0
      %v414 = vadd.f32 %v407, 1.0
      %v415 = vadd.f32 %v409, 1.0
      %v416 = vrcp.pop %v410
      %v417 = vmul.f32 1.0, %v416
      %v418 = vrcp.pop %v411
      %v419 = vmul.f32 1.0, %v418
      %v420 = vrcp.pop %v412
      %v421 = vmul.f32 1.0, %v420
      %v422 = vrcp.pop %v413
      %v423 = vmul.f32 1.0, %v422
      %v424 = vrcp.pop %v414
      %v425 = vmul.f32 1.0, %v424
      %v426 = vrcp.pop %v415
      %v427 = vmul.f32 1.0, %v426
      %v428 = vtanh.pop %v390
      %v429 = vtanh.pop %v391
      %v430 = vmul.f32 %v421, 0.0
      %v431 = vmul.f32 %v423, 0.0
      %v432 = vmul.f32 %v417, %v428
      %v433 = vmul.f32 %v419, %v429
      %v434 = vadd.f32 %v430, %v432
      %v435 = vadd.f32 %v431, %v433
      %v436 = vtanh.pop %v434
      %v437 = vtanh.pop %v435
      %v438 = vmul.f32 %v425, %v436
      %v439 = vmul.f32 %v427, %v437
      %vm440 = vcmask 850944
      %441 = vst.msk [vmem:[%s170] sm:$0xff] %vm440, %v438
      %442 = vst.msk [vmem:[%s170 + $0x8] sm:$0xff] %vm440, %v439
      %443 = vrot.lane.b32.xlu0 %v438, 104
      %v444 = vpop.permute.xlu0 %443
      %v445 = vsel %vm184, %v444, %v438
      %446 = vrot.lane.b32.xlu0 %v439, 104
      %v447 = vpop.permute.xlu0 %446
      %v448 = vsel %vm184, %v447, %v439
      %449 = vrot.lane.b32.xlu0 %v445, 104
      %v450 = vpop.permute.xlu0 %449
      %451 = vrot.lane.b32.xlu0 %v448, 104
      %v452 = vpop.permute.xlu0 %451
      %v453 = vsel %vm184, %v450, %v438
      %v454 = vsel %vm184, %v452, %v439
      %v455 = vmul.f32 %v453, %v194
      %v456 = vmul.f32 %v450, %v194
      %v457 = vmul.f32 %v454, %v196
      %v458 = vmul.f32 %v452, %v196
      %v459 = vmul.f32 %v453, %v206
      %v460 = vmul.f32 %v454, %v208
      %463 = vrot.lane.b32.xlu0 %v438, 103
      %v464 = vpop.permute.xlu0 %463
      %465 = vrot.lane.b32.xlu0 %v439, 103
      %v466 = vpop.permute.xlu0 %465
      %469 = vrot.lane.b32.xlu0 %v459, 102
      %v470 = vpop.permute.xlu0 %469
      %471 = vrot.lane.b32.xlu0 %v460, 102
      %v472 = vpop.permute.xlu0 %471
      %s473 = scalar_lea.vmem %s165, 64
      %v474 = vld [vmem:[%s473] sm:$0xff]
      %v475 = vld [vmem:[%s473 + $0x8] sm:$0xff]
      %v476 = vld [vmem:[%s473 + $0x10] sm:$0xff]
      %v477 = vld [vmem:[%s473 + $0x18] sm:$0xff]
      %v478 = vld [vmem:[%s473 + $0x20] sm:$0xff]
      %v479 = vld [vmem:[%s473 + $0x28] sm:$0xff]
      %v480 = vld [vmem:[%s473 + $0x30] sm:$0xff]
      %v481 = vld [vmem:[%s473 + $0x38] sm:$0xff]
      %486 = vrot.lane.b32.xlu0 %v455, 25
      %v487 = vpop.permute.xlu0 %486
      %488 = vrot.lane.b32.xlu0 %v456, 25
      %v489 = vpop.permute.xlu0 %488
      %490 = vrot.lane.b32.xlu0 %v457, 25
      %v491 = vpop.permute.xlu0 %490
      %492 = vrot.lane.b32.xlu0 %v458, 25
      %v493 = vpop.permute.xlu0 %492
      %494 = vrot.lane.b32.xlu0 %v464, 25
      %v495 = vpop.permute.xlu0 %494
      %496 = vrot.lane.b32.xlu0 %v466, 25
      %v497 = vpop.permute.xlu0 %496
      %498 = vrot.lane.b32.xlu0 %v470, 25
      %v499 = vpop.permute.xlu0 %498
      %500 = vrot.lane.b32.xlu0 %v472, 25
      %v501 = vpop.permute.xlu0 %500
      %v502 = vsel %vm246, %v487, %v489
      %v503 = vsel %vm246, %v491, %v493
      %510 = vmatprep.subr.mxu0 0.0
      %511 = vmatpush1.msra.mxu0 %v502
      %512 = vmatprep.subr.mxu0 0.0
      %513 = vmatpush1.msra.mxu0 %v503
      %514 = vmatprep.subr.mxu0 0.0
      %515 = vmatpush1.msra.mxu0 %v495
      %516 = vmatprep.subr.mxu0 0.0
      %517 = vmatpush1.msra.mxu0 %v497
      %518 = vmatprep.subr.mxu0 0.0
      %519 = vmatpush1.msra.mxu0 %v499
      %520 = vmatprep.subr.mxu0 0.0
      %521 = vmatpush1.msra.mxu0 %v501
      %522 = vmatprep.subr.mxu0 0.0
      %523 = vmatpush1.msra.mxu0 0.0
      %524 = vmatprep.subr.mxu0 0.0
      %525 = vmatpush1.msra.mxu0 0.0
      %526 = vmatprep.subr.mxu0 0.0
      %527 = vmatpush1.msra.mxu0 0.0
      %528 = vmatprep.subr.mxu0 0.0
      %529 = vmatpush1.msra.mxu0 0.0
      %530 = vmatprep.subr.mxu0 0.0
      %531 = vmatpush1.msra.mxu0 0.0
      %532 = vmatprep.subr.mxu0 0.0
      %533 = vmatpush1.msra.mxu0 0.0
      %534 = vmatprep.subr.mxu0 0.0
      %535 = vmatpush1.msra.mxu0 0.0
      %536 = vmatprep.subr.mxu0 0.0
      %537 = vmatpush1.msra.mxu0 0.0
      %538 = vmatprep.subr.mxu0 0.0
      %539 = vmatpush1.msra.mxu0 0.0
      %540 = vmatprep.subr.mxu0 0.0
      %541 = vmatpush1.msra.mxu0 0.0
      %542 = vmatprep.subr.mxu0 0.0
      %543 = vmatpush1.msra.mxu0 0.0
      %544 = vmatprep.subr.mxu0 0.0
      %545 = vmatpush1.msra.mxu0 0.0
      %546 = vmatprep.subr.mxu0 0.0
      %547 = vmatpush1.msra.mxu0 0.0
      %548 = vmatprep.subr.mxu0 0.0
      %549 = vmatpush1.msra.mxu0 0.0
      %550 = vmatprep.subr.mxu0 0.0
      %551 = vmatpush1.msra.mxu0 0.0
      %552 = vmatprep.subr.mxu0 0.0
      %553 = vmatpush1.msra.mxu0 0.0
      %554 = vmatprep.subr.mxu0 0.0
      %555 = vmatpush1.msra.mxu0 0.0
      %556 = vmatprep.subr.mxu0 0.0
      %557 = vmatpush1.msra.mxu0 0.0
      %558 = vmatprep.subr.mxu0 0.0
      %559 = vmatpush1.msra.mxu0 0.0
      %560 = vmatprep.subr.mxu0 0.0
      %561 = vmatpush1.msra.mxu0 0.0
      %562 = vmatprep.subr.mxu0 0.0
      %563 = vmatpush1.msra.mxu0 0.0
      %564 = vmatprep.subr.mxu0 0.0
      %565 = vmatpush1.msra.mxu0 0.0
      %566 = vmatprep.subr.mxu0 0.0
      %567 = vmatpush1.msra.mxu0 0.0
      %568 = vmatprep.subr.mxu0 0.0
      %569 = vmatpush1.msra.mxu0 0.0
      %570 = vmatprep.subr.mxu0 0.0
      %571 = vmatpush1.msra.mxu0 0.0
      %572 = vmatprep.subr.mxu0 0.0
      %573 = vmatpush1.msra.mxu0 0.0
      %574 = vmatprep.mubr.f32.mxu0 0.0
      %575 = vmatmul.mubr.f32.gmra.mrb[0].mxu0 %v256
      %v576 = vpop.f32.mrb[0].mxu0
      %v577 = vadd.f32 0.0, %v576
      %v578 = vpop.f32.mrb[0].mxu0
      %579 = vmatprep.mubr.f32.mxu0 0.0
      %580 = vmatmul.mubr.f32.gmra.mrb[0].mxu0 %v259
      %v581 = vpop.f32.mrb[0].mxu0
      %v582 = vadd.f32 0.0, %v581
      %v583 = vpop.f32.mrb[0].mxu0
      %584 = vmatprep.mubr.f32.mxu0 0.0
      %585 = vmatmul.mubr.f32.gmra.mrb[0].mxu0 %v262
      %v586 = vpop.f32.mrb[0].mxu0
      %v587 = vadd.f32 0.0, %v586
      %v588 = vpop.f32.mrb[0].mxu0
      %589 = vmatprep.mubr.f32.mxu0 0.0
      %590 = vmatmul.mubr.f32.gmra.mrb[0].mxu0 %v265
      %v591 = vpop.f32.mrb[0].mxu0
      %v592 = vadd.f32 0.0, %v591
      %v593 = vpop.f32.mrb[0].mxu0
      %594 = vmatprep.mubr.f32.mxu0 0.0
      %595 = vmatmul.mubr.f32.gmra.mrb[0].mxu0 %v268
      %v596 = vpop.f32.mrb[0].mxu0
      %v597 = vadd.f32 0.0, %v596
      %v598 = vpop.f32.mrb[0].mxu0
      %599 = vmatprep.mubr.f32.mxu0 0.0
      %600 = vmatmul.mubr.f32.gmra.mrb[0].mxu0 %v271
      %v601 = vpop.f32.mrb[0].mxu0
      %v602 = vadd.f32 0.0, %v601
      %v603 = vpop.f32.mrb[0].mxu0
      %604 = vmatprep.mubr.f32.mxu0 0.0
      %605 = vmatmul.mubr.f32.gmra.mrb[0].mxu0 %v274
      %v606 = vpop.f32.mrb[0].mxu0
      %v607 = vadd.f32 0.0, %v606
      %v608 = vpop.f32.mrb[0].mxu0
      %609 = vmatprep.mubr.f32.mxu0 0.0
      %610 = vmatmul.mubr.f32.gmra.mrb[0].mxu0 %v277
      %v611 = vpop.f32.mrb[0].mxu0
      %v612 = vadd.f32 0.0, %v611
      %v613 = vpop.f32.mrb[0].mxu0
      %614 = vdwg.mxu0
      %v615 = vadd.f32 %v474, %v577
      %v616 = vadd.f32 %v475, %v582
      %v617 = vadd.f32 %v476, %v587
      %v618 = vadd.f32 %v477, %v592
      %v619 = vadd.f32 %v478, %v597
      %v620 = vadd.f32 %v479, %v602
      %v621 = vadd.f32 %v480, %v607
      %v622 = vadd.f32 %v481, %v612
      %v623 = vxor.u32 %v615, 2147483648
      %v624 = vxor.u32 %v616, 2147483648
      %v625 = vxor.u32 %v617, 2147483648
      %v626 = vxor.u32 %v618, 2147483648
      %v627 = vxor.u32 %v619, 2147483648
      %v628 = vxor.u32 %v620, 2147483648
      %v629 = vmul.f32 %v623, 1.442695
      %v630 = vpow.pop %v629
      %v631 = vmul.f32 %v624, 1.442695
      %v632 = vpow.pop %v631
      %v633 = vmul.f32 %v625, 1.442695
      %v634 = vpow.pop %v633
      %v635 = vmul.f32 %v626, 1.442695
      %v636 = vpow.pop %v635
      %v637 = vmul.f32 %v627, 1.442695
      %v638 = vpow.pop %v637
      %v639 = vmul.f32 %v628, 1.442695
      %v640 = vpow.pop %v639
      %v641 = vadd.f32 %v630, 1.0
      %v642 = vadd.f32 %v632, 1.0
      %v643 = vadd.f32 %v634, 1.0
      %v644 = vadd.f32 %v636, 1.0
      %v645 = vadd.f32 %v638, 1.0
      %v646 = vadd.f32 %v640, 1.0
      %v647 = vrcp.pop %v641
      %v648 = vmul.f32 1.0, %v647
      %v649 = vrcp.pop %v642
      %v650 = vmul.f32 1.0, %v649
      %v651 = vrcp.pop %v643
      %v652 = vmul.f32 1.0, %v651
      %v653 = vrcp.pop %v644
      %v654 = vmul.f32 1.0, %v653
      %v655 = vrcp.pop %v645
      %v656 = vmul.f32 1.0, %v655
      %v657 = vrcp.pop %v646
      %v658 = vmul.f32 1.0, %v657
      %v659 = vtanh.pop %v621
      %v660 = vtanh.pop %v622
      %v661 = vmul.f32 %v652, %v434
      %v662 = vmul.f32 %v654, %v435
      %v663 = vmul.f32 %v648, %v659
      %v664 = vmul.f32 %v650, %v660
      %v665 = vadd.f32 %v661, %v663
      %v666 = vadd.f32 %v662, %v664
      %v667 = vtanh.pop %v665
      %v668 = vtanh.pop %v666
      %v669 = vmul.f32 %v656, %v667
      %v670 = vmul.f32 %v658, %v668
      %s671 = scalar_lea.vmem %s170, 16
      %672 = vst.msk [vmem:[%s671] sm:$0xff] %vm440, %v669
      %673 = vst.msk [vmem:[%s671 + $0x8] sm:$0xff] %vm440, %v670
      %674 = vrot.lane.b32.xlu0 %v669, 104
      %v675 = vpop.permute.xlu0 %674
      %v676 = vsel %vm184, %v675, %v669
      %677 = vrot.lane.b32.xlu0 %v670, 104
      %v678 = vpop.permute.xlu0 %677
      %v679 = vsel %vm184, %v678, %v670
      %680 = vrot.lane.b32.xlu0 %v676, 104
      %v681 = vpop.permute.xlu0 %680
      %682 = vrot.lane.b32.xlu0 %v679, 104
      %v683 = vpop.permute.xlu0 %682
      %v684 = vsel %vm184, %v681, %v669
      %v685 = vsel %vm184, %v683, %v670
      %v686 = vmul.f32 %v684, %v194
      %v687 = vmul.f32 %v681, %v194
      %v688 = vmul.f32 %v685, %v196
      %v689 = vmul.f32 %v683, %v196
      %v690 = vmul.f32 %v684, %v206
      %v691 = vmul.f32 %v685, %v208
      %694 = vrot.lane.b32.xlu0 %v669, 103
      %v695 = vpop.permute.xlu0 %694
      %696 = vrot.lane.b32.xlu0 %v670, 103
      %v697 = vpop.permute.xlu0 %696
      %700 = vrot.lane.b32.xlu0 %v690, 102
      %v701 = vpop.permute.xlu0 %700
      %702 = vrot.lane.b32.xlu0 %v691, 102
      %v703 = vpop.permute.xlu0 %702
      %s704 = scalar_lea.vmem %s165, 128
      %v705 = vld [vmem:[%s704] sm:$0xff]
      %v706 = vld [vmem:[%s704 + $0x8] sm:$0xff]
      %v707 = vld [vmem:[%s704 + $0x10] sm:$0xff]
      %v708 = vld [vmem:[%s704 + $0x18] sm:$0xff]
      %v709 = vld [vmem:[%s704 + $0x20] sm:$0xff]
      %v710 = vld [vmem:[%s704 + $0x28] sm:$0xff]
      %v711 = vld [vmem:[%s704 + $0x30] sm:$0xff]
      %v712 = vld [vmem:[%s704 + $0x38] sm:$0xff]
      %717 = vrot.lane.b32.xlu0 %v686, 25
      %v718 = vpop.permute.xlu0 %717
      %719 = vrot.lane.b32.xlu0 %v687, 25
      %v720 = vpop.permute.xlu0 %719
      %721 = vrot.lane.b32.xlu0 %v688, 25
      %v722 = vpop.permute.xlu0 %721
      %723 = vrot.lane.b32.xlu0 %v689, 25
      %v724 = vpop.permute.xlu0 %723
      %725 = vrot.lane.b32.xlu0 %v695, 25
      %v726 = vpop.permute.xlu0 %725
      %727 = vrot.lane.b32.xlu0 %v697, 25
      %v728 = vpop.permute.xlu0 %727
      %729 = vrot.lane.b32.xlu0 %v701, 25
      %v730 = vpop.permute.xlu0 %729
      %731 = vrot.lane.b32.xlu0 %v703, 25
      %v732 = vpop.permute.xlu0 %731
      %v733 = vsel %vm246, %v718, %v720
      %v734 = vsel %vm246, %v722, %v724
      %741 = vmatprep.subr.mxu0 0.0
      %742 = vmatpush1.msra.mxu0 %v733
      %743 = vmatprep.subr.mxu0 0.0
      %744 = vmatpush1.msra.mxu0 %v734
      %745 = vmatprep.subr.mxu0 0.0
      %746 = vmatpush1.msra.mxu0 %v726
      %747 = vmatprep.subr.mxu0 0.0
      %748 = vmatpush1.msra.mxu0 %v728
      %749 = vmatprep.subr.mxu0 0.0
      %750 = vmatpush1.msra.mxu0 %v730
      %751 = vmatprep.subr.mxu0 0.0
      %752 = vmatpush1.msra.mxu0 %v732
      %753 = vmatprep.subr.mxu0 0.0
      %754 = vmatpush1.msra.mxu0 0.0
      %755 = vmatprep.subr.mxu0 0.0
      %756 = vmatpush1.msra.mxu0 0.0
      %757 = vmatprep.subr.mxu0 0.0
      %758 = vmatpush1.msra.mxu0 0.0
      %759 = vmatprep.subr.mxu0 0.0
      %760 = vmatpush1.msra.mxu0 0.0
      %761 = vmatprep.subr.mxu0 0.0
      %762 = vmatpush1.msra.mxu0 0.0
      %763 = vmatprep.subr.mxu0 0.0
      %764 = vmatpush1.msra.mxu0 0.0
      %765 = vmatprep.subr.mxu0 0.0
      %766 = vmatpush1.msra.mxu0 0.0
      %767 = vmatprep.subr.mxu0 0.0
      %768 = vmatpush1.msra.mxu0 0.0
      %769 = vmatprep.subr.mxu0 0.0
      %770 = vmatpush1.msra.mxu0 0.0
      %771 = vmatprep.subr.mxu0 0.0
      %772 = vmatpush1.msra.mxu0 0.0
      %773 = vmatprep.subr.mxu0 0.0
      %774 = vmatpush1.msra.mxu0 0.0
      %775 = vmatprep.subr.mxu0 0.0
      %776 = vmatpush1.msra.mxu0 0.0
      %777 = vmatprep.subr.mxu0 0.0
      %778 = vmatpush1.msra.mxu0 0.0
      %779 = vmatprep.subr.mxu0 0.0
      %780 = vmatpush1.msra.mxu0 0.0
      %781 = vmatprep.subr.mxu0 0.0
      %782 = vmatpush1.msra.mxu0 0.0
      %783 = vmatprep.subr.mxu0 0.0
      %784 = vmatpush1.msra.mxu0 0.0
      %785 = vmatprep.subr.mxu0 0.0
      %786 = vmatpush1.msra.mxu0 0.0
      %787 = vmatprep.subr.mxu0 0.0
      %788 = vmatpush1.msra.mxu0 0.0
      %789 = vmatprep.subr.mxu0 0.0
      %790 = vmatpush1.msra.mxu0 0.0
      %791 = vmatprep.subr.mxu0 0.0
      %792 = vmatpush1.msra.mxu0 0.0
      %793 = vmatprep.subr.mxu0 0.0
      %794 = vmatpush1.msra.mxu0 0.0
      %795 = vmatprep.subr.mxu0 0.0
      %796 = vmatpush1.msra.mxu0 0.0
      %797 = vmatprep.subr.mxu0 0.0
      %798 = vmatpush1.msra.mxu0 0.0
      %799 = vmatprep.subr.mxu0 0.0
      %800 = vmatpush1.msra.mxu0 0.0
      %801 = vmatprep.subr.mxu0 0.0
      %802 = vmatpush1.msra.mxu0 0.0
      %803 = vmatprep.subr.mxu0 0.0
      %804 = vmatpush1.msra.mxu0 0.0
      %805 = vmatprep.mubr.f32.mxu0 0.0
      %806 = vmatmul.mubr.f32.gmra.mrb[0].mxu0 %v256
      %v807 = vpop.f32.mrb[0].mxu0
      %v808 = vadd.f32 0.0, %v807
      %v809 = vpop.f32.mrb[0].mxu0
      %810 = vmatprep.mubr.f32.mxu0 0.0
      %811 = vmatmul.mubr.f32.gmra.mrb[0].mxu0 %v259
      %v812 = vpop.f32.mrb[0].mxu0
      %v813 = vadd.f32 0.0, %v812
      %v814 = vpop.f32.mrb[0].mxu0
      %815 = vmatprep.mubr.f32.mxu0 0.0
      %816 = vmatmul.mubr.f32.gmra.mrb[0].mxu0 %v262
      %v817 = vpop.f32.mrb[0].mxu0
      %v818 = vadd.f32 0.0, %v817
      %v819 = vpop.f32.mrb[0].mxu0
      %820 = vmatprep.mubr.f32.mxu0 0.0
      %821 = vmatmul.mubr.f32.gmra.mrb[0].mxu0 %v265
      %v822 = vpop.f32.mrb[0].mxu0
      %v823 = vadd.f32 0.0, %v822
      %v824 = vpop.f32.mrb[0].mxu0
      %825 = vmatprep.mubr.f32.mxu0 0.0
      %826 = vmatmul.mubr.f32.gmra.mrb[0].mxu0 %v268
      %v827 = vpop.f32.mrb[0].mxu0
      %v828 = vadd.f32 0.0, %v827
      %v829 = vpop.f32.mrb[0].mxu0
      %830 = vmatprep.mubr.f32.mxu0 0.0
      %831 = vmatmul.mubr.f32.gmra.mrb[0].mxu0 %v271
      %v832 = vpop.f32.mrb[0].mxu0
      %v833 = vadd.f32 0.0, %v832
      %v834 = vpop.f32.mrb[0].mxu0
      %835 = vmatprep.mubr.f32.mxu0 0.0
      %836 = vmatmul.mubr.f32.gmra.mrb[0].mxu0 %v274
      %v837 = vpop.f32.mrb[0].mxu0
      %v838 = vadd.f32 0.0, %v837
      %v839 = vpop.f32.mrb[0].mxu0
      %840 = vmatprep.mubr.f32.mxu0 0.0
      %841 = vmatmul.mubr.f32.gmra.mrb[0].mxu0 %v277
      %v842 = vpop.f32.mrb[0].mxu0
      %v843 = vadd.f32 0.0, %v842
      %v844 = vpop.f32.mrb[0].mxu0
      %845 = vdwg.mxu0
      %v846 = vadd.f32 %v705, %v808
      %v847 = vadd.f32 %v706, %v813
      %v848 = vadd.f32 %v707, %v818
      %v849 = vadd.f32 %v708, %v823
      %v850 = vadd.f32 %v709, %v828
      %v851 = vadd.f32 %v710, %v833
      %v852 = vadd.f32 %v711, %v838
      %v853 = vadd.f32 %v712, %v843
      %v854 = vxor.u32 %v846, 2147483648
      %v855 = vxor.u32 %v847, 2147483648
      %v856 = vxor.u32 %v848, 2147483648
      %v857 = vxor.u32 %v849, 2147483648
      %v858 = vxor.u32 %v850, 2147483648
      %v859 = vxor.u32 %v851, 2147483648
      %v860 = vmul.f32 %v854, 1.442695
      %v861 = vpow.pop %v860
      %v862 = vmul.f32 %v855, 1.442695
      %v863 = vpow.pop %v862
      %v864 = vmul.f32 %v856, 1.442695
      %v865 = vpow.pop %v864
      %v866 = vmul.f32 %v857, 1.442695
      %v867 = vpow.pop %v866
      %v868 = vmul.f32 %v858, 1.442695
      %v869 = vpow.pop %v868
      %v870 = vmul.f32 %v859, 1.442695
      %v871 = vpow.pop %v870
      %v872 = vadd.f32 %v861, 1.0
      %v873 = vadd.f32 %v863, 1.0
      %v874 = vadd.f32 %v865, 1.0
      %v875 = vadd.f32 %v867, 1.0
      %v876 = vadd.f32 %v869, 1.0
      %v877 = vadd.f32 %v871, 1.0
      %v878 = vrcp.pop %v872
      %v879 = vmul.f32 1.0, %v878
      %v880 = vrcp.pop %v873
      %v881 = vmul.f32 1.0, %v880
      %v882 = vrcp.pop %v874
      %v883 = vmul.f32 1.0, %v882
      %v884 = vrcp.pop %v875
      %v885 = vmul.f32 1.0, %v884
      %v886 = vrcp.pop %v876
      %v887 = vmul.f32 1.0, %v886
      %v888 = vrcp.pop %v877
      %v889 = vmul.f32 1.0, %v888
      %v890 = vtanh.pop %v852
      %v891 = vtanh.pop %v853
      %v892 = vmul.f32 %v883, %v665
      %v893 = vmul.f32 %v885, %v666
      %v894 = vmul.f32 %v879, %v890
      %v895 = vmul.f32 %v881, %v891
      %v896 = vadd.f32 %v892, %v894
      %v897 = vadd.f32 %v893, %v895
      %v898 = vtanh.pop %v896
      %v899 = vtanh.pop %v897
      %v900 = vmul.f32 %v887, %v898
      %v901 = vmul.f32 %v889, %v899
      %s902 = scalar_lea.vmem %s170, 32
      %903 = vst.msk [vmem:[%s902] sm:$0xff] %vm440, %v900
      %904 = vst.msk [vmem:[%s902 + $0x8] sm:$0xff] %vm440, %v901
      %905 = vrot.lane.b32.xlu0 %v900, 104
      %v906 = vpop.permute.xlu0 %905
      %v907 = vsel %vm184, %v906, %v900
      %908 = vrot.lane.b32.xlu0 %v901, 104
      %v909 = vpop.permute.xlu0 %908
      %v910 = vsel %vm184, %v909, %v901
      %911 = vrot.lane.b32.xlu0 %v907, 104
      %v912 = vpop.permute.xlu0 %911
      %913 = vrot.lane.b32.xlu0 %v910, 104
      %v914 = vpop.permute.xlu0 %913
      %v915 = vsel %vm184, %v912, %v900
      %v916 = vsel %vm184, %v914, %v901
      %v917 = vmul.f32 %v915, %v194
      %v918 = vmul.f32 %v912, %v194
      %v919 = vmul.f32 %v916, %v196
      %v920 = vmul.f32 %v914, %v196
      %v921 = vmul.f32 %v915, %v206
      %v922 = vmul.f32 %v916, %v208
      %925 = vrot.lane.b32.xlu0 %v900, 103
      %v926 = vpop.permute.xlu0 %925
      %927 = vrot.lane.b32.xlu0 %v901, 103
      %v928 = vpop.permute.xlu0 %927
      %931 = vrot.lane.b32.xlu0 %v921, 102
      %v932 = vpop.permute.xlu0 %931
      %933 = vrot.lane.b32.xlu0 %v922, 102
      %v934 = vpop.permute.xlu0 %933
      %s935 = scalar_lea.vmem %s165, 192
      %v936 = vld [vmem:[%s935] sm:$0xff]
      %v937 = vld [vmem:[%s935 + $0x8] sm:$0xff]
      %v938 = vld [vmem:[%s935 + $0x10] sm:$0xff]
      %v939 = vld [vmem:[%s935 + $0x18] sm:$0xff]
      %v940 = vld [vmem:[%s935 + $0x20] sm:$0xff]
      %v941 = vld [vmem:[%s935 + $0x28] sm:$0xff]
      %v942 = vld [vmem:[%s935 + $0x30] sm:$0xff]
      %v943 = vld [vmem:[%s935 + $0x38] sm:$0xff]
      %948 = vrot.lane.b32.xlu0 %v917, 25
      %v949 = vpop.permute.xlu0 %948
      %950 = vrot.lane.b32.xlu0 %v918, 25
      %v951 = vpop.permute.xlu0 %950
      %952 = vrot.lane.b32.xlu0 %v919, 25
      %v953 = vpop.permute.xlu0 %952
      %954 = vrot.lane.b32.xlu0 %v920, 25
      %v955 = vpop.permute.xlu0 %954
      %956 = vrot.lane.b32.xlu0 %v926, 25
      %v957 = vpop.permute.xlu0 %956
      %958 = vrot.lane.b32.xlu0 %v928, 25
      %v959 = vpop.permute.xlu0 %958
      %960 = vrot.lane.b32.xlu0 %v932, 25
      %v961 = vpop.permute.xlu0 %960
      %962 = vrot.lane.b32.xlu0 %v934, 25
      %v963 = vpop.permute.xlu0 %962
      %v964 = vsel %vm246, %v949, %v951
      %v965 = vsel %vm246, %v953, %v955
      %972 = vmatprep.subr.mxu0 0.0
      %973 = vmatpush1.msra.mxu0 %v964
      %974 = vmatprep.subr.mxu0 0.0
      %975 = vmatpush1.msra.mxu0 %v965
      %976 = vmatprep.subr.mxu0 0.0
      %977 = vmatpush1.msra.mxu0 %v957
      %978 = vmatprep.subr.mxu0 0.0
      %979 = vmatpush1.msra.mxu0 %v959
      %980 = vmatprep.subr.mxu0 0.0
      %981 = vmatpush1.msra.mxu0 %v961
      %982 = vmatprep.subr.mxu0 0.0
      %983 = vmatpush1.msra.mxu0 %v963
      %984 = vmatprep.subr.mxu0 0.0
      %985 = vmatpush1.msra.mxu0 0.0
      %986 = vmatprep.subr.mxu0 0.0
      %987 = vmatpush1.msra.mxu0 0.0
      %988 = vmatprep.subr.mxu0 0.0
      %989 = vmatpush1.msra.mxu0 0.0
      %990 = vmatprep.subr.mxu0 0.0
      %991 = vmatpush1.msra.mxu0 0.0
      %992 = vmatprep.subr.mxu0 0.0
      %993 = vmatpush1.msra.mxu0 0.0
      %994 = vmatprep.subr.mxu0 0.0
      %995 = vmatpush1.msra.mxu0 0.0
      %996 = vmatprep.subr.mxu0 0.0
      %997 = vmatpush1.msra.mxu0 0.0
      %998 = vmatprep.subr.mxu0 0.0
      %999 = vmatpush1.msra.mxu0 0.0
      %1000 = vmatprep.subr.mxu0 0.0
      %1001 = vmatpush1.msra.mxu0 0.0
      %1002 = vmatprep.subr.mxu0 0.0
      %1003 = vmatpush1.msra.mxu0 0.0
      %1004 = vmatprep.subr.mxu0 0.0
      %1005 = vmatpush1.msra.mxu0 0.0
      %1006 = vmatprep.subr.mxu0 0.0
      %1007 = vmatpush1.msra.mxu0 0.0
      %1008 = vmatprep.subr.mxu0 0.0
      %1009 = vmatpush1.msra.mxu0 0.0
      %1010 = vmatprep.subr.mxu0 0.0
      %1011 = vmatpush1.msra.mxu0 0.0
      %1012 = vmatprep.subr.mxu0 0.0
      %1013 = vmatpush1.msra.mxu0 0.0
      %1014 = vmatprep.subr.mxu0 0.0
      %1015 = vmatpush1.msra.mxu0 0.0
      %1016 = vmatprep.subr.mxu0 0.0
      %1017 = vmatpush1.msra.mxu0 0.0
      %1018 = vmatprep.subr.mxu0 0.0
      %1019 = vmatpush1.msra.mxu0 0.0
      %1020 = vmatprep.subr.mxu0 0.0
      %1021 = vmatpush1.msra.mxu0 0.0
      %1022 = vmatprep.subr.mxu0 0.0
      %1023 = vmatpush1.msra.mxu0 0.0
      %1024 = vmatprep.subr.mxu0 0.0
      %1025 = vmatpush1.msra.mxu0 0.0
      %1026 = vmatprep.subr.mxu0 0.0
      %1027 = vmatpush1.msra.mxu0 0.0
      %1028 = vmatprep.subr.mxu0 0.0
      %1029 = vmatpush1.msra.mxu0 0.0
      %1030 = vmatprep.subr.mxu0 0.0
      %1031 = vmatpush1.msra.mxu0 0.0
      %1032 = vmatprep.subr.mxu0 0.0
      %1033 = vmatpush1.msra.mxu0 0.0
      %1034 = vmatprep.subr.mxu0 0.0
      %1035 = vmatpush1.msra.mxu0 0.0
      %1036 = vmatprep.mubr.f32.mxu0 0.0
      %1037 = vmatmul.mubr.f32.gmra.mrb[0].mxu0 %v256
      %v1038 = vpop.f32.mrb[0].mxu0
      %v1039 = vadd.f32 0.0, %v1038
      %v1040 = vpop.f32.mrb[0].mxu0
      %1041 = vmatprep.mubr.f32.mxu0 0.0
      %1042 = vmatmul.mubr.f32.gmra.mrb[0].mxu0 %v259
      %v1043 = vpop.f32.mrb[0].mxu0
      %v1044 = vadd.f32 0.0, %v1043
      %v1045 = vpop.f32.mrb[0].mxu0
      %1046 = vmatprep.mubr.f32.mxu0 0.0
      %1047 = vmatmul.mubr.f32.gmra.mrb[0].mxu0 %v262
      %v1048 = vpop.f32.mrb[0].mxu0
      %v1049 = vadd.f32 0.0, %v1048
      %v1050 = vpop.f32.mrb[0].mxu0
      %1051 = vmatprep.mubr.f32.mxu0 0.0
      %1052 = vmatmul.mubr.f32.gmra.mrb[0].mxu0 %v265
      %v1053 = vpop.f32.mrb[0].mxu0
      %v1054 = vadd.f32 0.0, %v1053
      %v1055 = vpop.f32.mrb[0].mxu0
      %1056 = vmatprep.mubr.f32.mxu0 0.0
      %1057 = vmatmul.mubr.f32.gmra.mrb[0].mxu0 %v268
      %v1058 = vpop.f32.mrb[0].mxu0
      %v1059 = vadd.f32 0.0, %v1058
      %v1060 = vpop.f32.mrb[0].mxu0
      %1061 = vmatprep.mubr.f32.mxu0 0.0
      %1062 = vmatmul.mubr.f32.gmra.mrb[0].mxu0 %v271
      %v1063 = vpop.f32.mrb[0].mxu0
      %v1064 = vadd.f32 0.0, %v1063
      %v1065 = vpop.f32.mrb[0].mxu0
      %1066 = vmatprep.mubr.f32.mxu0 0.0
      %1067 = vmatmul.mubr.f32.gmra.mrb[0].mxu0 %v274
      %v1068 = vpop.f32.mrb[0].mxu0
      %v1069 = vadd.f32 0.0, %v1068
      %v1070 = vpop.f32.mrb[0].mxu0
      %1071 = vmatprep.mubr.f32.mxu0 0.0
      %1072 = vmatmul.mubr.f32.gmra.mrb[0].mxu0 %v277
      %v1073 = vpop.f32.mrb[0].mxu0
      %v1074 = vadd.f32 0.0, %v1073
      %v1075 = vpop.f32.mrb[0].mxu0
      %1076 = vdwg.mxu0
      %v1077 = vadd.f32 %v936, %v1039
      %v1078 = vadd.f32 %v937, %v1044
      %v1079 = vadd.f32 %v938, %v1049
      %v1080 = vadd.f32 %v939, %v1054
      %v1081 = vadd.f32 %v940, %v1059
      %v1082 = vadd.f32 %v941, %v1064
      %v1083 = vadd.f32 %v942, %v1069
      %v1084 = vadd.f32 %v943, %v1074
      %v1085 = vxor.u32 %v1077, 2147483648
      %v1086 = vxor.u32 %v1078, 2147483648
      %v1087 = vxor.u32 %v1079, 2147483648
      %v1088 = vxor.u32 %v1080, 2147483648
      %v1089 = vxor.u32 %v1081, 2147483648
      %v1090 = vxor.u32 %v1082, 2147483648
      %v1091 = vmul.f32 %v1085, 1.442695
      %v1092 = vpow.pop %v1091
      %v1093 = vmul.f32 %v1086, 1.442695
      %v1094 = vpow.pop %v1093
      %v1095 = vmul.f32 %v1087, 1.442695
      %v1096 = vpow.pop %v1095
      %v1097 = vmul.f32 %v1088, 1.442695
      %v1098 = vpow.pop %v1097
      %v1099 = vmul.f32 %v1089, 1.442695
      %v1100 = vpow.pop %v1099
      %v1101 = vmul.f32 %v1090, 1.442695
      %v1102 = vpow.pop %v1101
      %v1103 = vadd.f32 %v1092, 1.0
      %v1104 = vadd.f32 %v1094, 1.0
      %v1105 = vadd.f32 %v1096, 1.0
      %v1106 = vadd.f32 %v1098, 1.0
      %v1107 = vadd.f32 %v1100, 1.0
      %v1108 = vadd.f32 %v1102, 1.0
      %v1109 = vrcp.pop %v1103
      %v1110 = vmul.f32 1.0, %v1109
      %v1111 = vrcp.pop %v1104
      %v1112 = vmul.f32 1.0, %v1111
      %v1113 = vrcp.pop %v1105
      %v1114 = vmul.f32 1.0, %v1113
      %v1115 = vrcp.pop %v1106
      %v1116 = vmul.f32 1.0, %v1115
      %v1117 = vrcp.pop %v1107
      %v1118 = vmul.f32 1.0, %v1117
      %v1119 = vrcp.pop %v1108
      %v1120 = vmul.f32 1.0, %v1119
      %v1121 = vtanh.pop %v1083
      %v1122 = vtanh.pop %v1084
      %v1123 = vmul.f32 %v1114, %v896
      %v1124 = vmul.f32 %v1116, %v897
      %v1125 = vmul.f32 %v1110, %v1121
      %v1126 = vmul.f32 %v1112, %v1122
      %v1127 = vadd.f32 %v1123, %v1125
      %v1128 = vadd.f32 %v1124, %v1126
      %v1129 = vtanh.pop %v1127
      %v1130 = vtanh.pop %v1128
      %v1131 = vmul.f32 %v1118, %v1129
      %v1132 = vmul.f32 %v1120, %v1130
      %s1133 = scalar_lea.vmem %s170, 48
      %1134 = vst.msk [vmem:[%s1133] sm:$0xff] %vm440, %v1131
      %1135 = vst.msk [vmem:[%s1133 + $0x8] sm:$0xff] %vm440, %v1132
      %1136 = vrot.lane.b32.xlu0 %v1131, 104
      %v1137 = vpop.permute.xlu0 %1136
      %v1138 = vsel %vm184, %v1137, %v1131
      %1139 = vrot.lane.b32.xlu0 %v1132, 104
      %v1140 = vpop.permute.xlu0 %1139
      %v1141 = vsel %vm184, %v1140, %v1132
      %1142 = vrot.lane.b32.xlu0 %v1138, 104
      %v1143 = vpop.permute.xlu0 %1142
      %1144 = vrot.lane.b32.xlu0 %v1141, 104
      %v1145 = vpop.permute.xlu0 %1144
      %v1146 = vsel %vm184, %v1143, %v1131
      %v1147 = vsel %vm184, %v1145, %v1132
      %v1148 = vmul.f32 %v1146, %v194
      %v1149 = vmul.f32 %v1143, %v194
      %v1150 = vmul.f32 %v1147, %v196
      %v1151 = vmul.f32 %v1145, %v196
      %v1152 = vmul.f32 %v1146, %v206
      %v1153 = vmul.f32 %v1147, %v208
      %1156 = vrot.lane.b32.xlu0 %v1131, 103
      %v1157 = vpop.permute.xlu0 %1156
      %1158 = vrot.lane.b32.xlu0 %v1132, 103
      %v1159 = vpop.permute.xlu0 %1158
      %1162 = vrot.lane.b32.xlu0 %v1152, 102
      %v1163 = vpop.permute.xlu0 %1162
      %1164 = vrot.lane.b32.xlu0 %v1153, 102
      %v1165 = vpop.permute.xlu0 %1164
      %s1166 = scalar_lea.vmem %s165, 256
      %v1167 = vld [vmem:[%s1166] sm:$0xff]
      %v1168 = vld [vmem:[%s1166 + $0x8] sm:$0xff]
      %v1169 = vld [vmem:[%s1166 + $0x10] sm:$0xff]
      %v1170 = vld [vmem:[%s1166 + $0x18] sm:$0xff]
      %v1171 = vld [vmem:[%s1166 + $0x20] sm:$0xff]
      %v1172 = vld [vmem:[%s1166 + $0x28] sm:$0xff]
      %v1173 = vld [vmem:[%s1166 + $0x30] sm:$0xff]
      %v1174 = vld [vmem:[%s1166 + $0x38] sm:$0xff]
      %1179 = vrot.lane.b32.xlu0 %v1148, 25
      %v1180 = vpop.permute.xlu0 %1179
      %1181 = vrot.lane.b32.xlu0 %v1149, 25
      %v1182 = vpop.permute.xlu0 %1181
      %1183 = vrot.lane.b32.xlu0 %v1150, 25
      %v1184 = vpop.permute.xlu0 %1183
      %1185 = vrot.lane.b32.xlu0 %v1151, 25
      %v1186 = vpop.permute.xlu0 %1185
      %1187 = vrot.lane.b32.xlu0 %v1157, 25
      %v1188 = vpop.permute.xlu0 %1187
      %1189 = vrot.lane.b32.xlu0 %v1159, 25
      %v1190 = vpop.permute.xlu0 %1189
      %1191 = vrot.lane.b32.xlu0 %v1163, 25
      %v1192 = vpop.permute.xlu0 %1191
      %1193 = vrot.lane.b32.xlu0 %v1165, 25
      %v1194 = vpop.permute.xlu0 %1193
      %v1195 = vsel %vm246, %v1180, %v1182
      %v1196 = vsel %vm246, %v1184, %v1186
      %1203 = vmatprep.subr.mxu0 0.0
      %1204 = vmatpush1.msra.mxu0 %v1195
      %1205 = vmatprep.subr.mxu0 0.0
      %1206 = vmatpush1.msra.mxu0 %v1196
      %1207 = vmatprep.subr.mxu0 0.0
      %1208 = vmatpush1.msra.mxu0 %v1188
      %1209 = vmatprep.subr.mxu0 0.0
      %1210 = vmatpush1.msra.mxu0 %v1190
      %1211 = vmatprep.subr.mxu0 0.0
      %1212 = vmatpush1.msra.mxu0 %v1192
      %1213 = vmatprep.subr.mxu0 0.0
      %1214 = vmatpush1.msra.mxu0 %v1194
      %1215 = vmatprep.subr.mxu0 0.0
      %1216 = vmatpush1.msra.mxu0 0.0
      %1217 = vmatprep.subr.mxu0 0.0
      %1218 = vmatpush1.msra.mxu0 0.0
      %1219 = vmatprep.subr.mxu0 0.0
      %1220 = vmatpush1.msra.mxu0 0.0
      %1221 = vmatprep.subr.mxu0 0.0
      %1222 = vmatpush1.msra.mxu0 0.0
      %1223 = vmatprep.subr.mxu0 0.0
      %1224 = vmatpush1.msra.mxu0 0.0
      %1225 = vmatprep.subr.mxu0 0.0
      %1226 = vmatpush1.msra.mxu0 0.0
      %1227 = vmatprep.subr.mxu0 0.0
      %1228 = vmatpush1.msra.mxu0 0.0
      %1229 = vmatprep.subr.mxu0 0.0
      %1230 = vmatpush1.msra.mxu0 0.0
      %1231 = vmatprep.subr.mxu0 0.0
      %1232 = vmatpush1.msra.mxu0 0.0
      %1233 = vmatprep.subr.mxu0 0.0
      %1234 = vmatpush1.msra.mxu0 0.0
      %1235 = vmatprep.subr.mxu0 0.0
      %1236 = vmatpush1.msra.mxu0 0.0
      %1237 = vmatprep.subr.mxu0 0.0
      %1238 = vmatpush1.msra.mxu0 0.0
      %1239 = vmatprep.subr.mxu0 0.0
      %1240 = vmatpush1.msra.mxu0 0.0
      %1241 = vmatprep.subr.mxu0 0.0
      %1242 = vmatpush1.msra.mxu0 0.0
      %1243 = vmatprep.subr.mxu0 0.0
      %1244 = vmatpush1.msra.mxu0 0.0
      %1245 = vmatprep.subr.mxu0 0.0
      %1246 = vmatpush1.msra.mxu0 0.0
      %1247 = vmatprep.subr.mxu0 0.0
      %1248 = vmatpush1.msra.mxu0 0.0
      %1249 = vmatprep.subr.mxu0 0.0
      %1250 = vmatpush1.msra.mxu0 0.0
      %1251 = vmatprep.subr.mxu0 0.0
      %1252 = vmatpush1.msra.mxu0 0.0
      %1253 = vmatprep.subr.mxu0 0.0
      %1254 = vmatpush1.msra.mxu0 0.0
      %1255 = vmatprep.subr.mxu0 0.0
      %1256 = vmatpush1.msra.mxu0 0.0
      %1257 = vmatprep.subr.mxu0 0.0
      %1258 = vmatpush1.msra.mxu0 0.0
      %1259 = vmatprep.subr.mxu0 0.0
      %1260 = vmatpush1.msra.mxu0 0.0
      %1261 = vmatprep.subr.mxu0 0.0
      %1262 = vmatpush1.msra.mxu0 0.0
      %1263 = vmatprep.subr.mxu0 0.0
      %1264 = vmatpush1.msra.mxu0 0.0
      %1265 = vmatprep.subr.mxu0 0.0
      %1266 = vmatpush1.msra.mxu0 0.0
      %1267 = vmatprep.mubr.f32.mxu0 0.0
      %1268 = vmatmul.mubr.f32.gmra.mrb[0].mxu0 %v256
      %v1269 = vpop.f32.mrb[0].mxu0
      %v1270 = vadd.f32 0.0, %v1269
      %v1271 = vpop.f32.mrb[0].mxu0
      %1272 = vmatprep.mubr.f32.mxu0 0.0
      %1273 = vmatmul.mubr.f32.gmra.mrb[0].mxu0 %v259
      %v1274 = vpop.f32.mrb[0].mxu0
      %v1275 = vadd.f32 0.0, %v1274
      %v1276 = vpop.f32.mrb[0].mxu0
      %1277 = vmatprep.mubr.f32.mxu0 0.0
      %1278 = vmatmul.mubr.f32.gmra.mrb[0].mxu0 %v262
      %v1279 = vpop.f32.mrb[0].mxu0
      %v1280 = vadd.f32 0.0, %v1279
      %v1281 = vpop.f32.mrb[0].mxu0
      %1282 = vmatprep.mubr.f32.mxu0 0.0
      %1283 = vmatmul.mubr.f32.gmra.mrb[0].mxu0 %v265
      %v1284 = vpop.f32.mrb[0].mxu0
      %v1285 = vadd.f32 0.0, %v1284
      %v1286 = vpop.f32.mrb[0].mxu0
      %1287 = vmatprep.mubr.f32.mxu0 0.0
      %1288 = vmatmul.mubr.f32.gmra.mrb[0].mxu0 %v268
      %v1289 = vpop.f32.mrb[0].mxu0
      %v1290 = vadd.f32 0.0, %v1289
      %v1291 = vpop.f32.mrb[0].mxu0
      %1292 = vmatprep.mubr.f32.mxu0 0.0
      %1293 = vmatmul.mubr.f32.gmra.mrb[0].mxu0 %v271
      %v1294 = vpop.f32.mrb[0].mxu0
      %v1295 = vadd.f32 0.0, %v1294
      %v1296 = vpop.f32.mrb[0].mxu0
      %1297 = vmatprep.mubr.f32.mxu0 0.0
      %1298 = vmatmul.mubr.f32.gmra.mrb[0].mxu0 %v274
      %v1299 = vpop.f32.mrb[0].mxu0
      %v1300 = vadd.f32 0.0, %v1299
      %v1301 = vpop.f32.mrb[0].mxu0
      %1302 = vmatprep.mubr.f32.mxu0 0.0
      %1303 = vmatmul.mubr.f32.gmra.mrb[0].mxu0 %v277
      %v1304 = vpop.f32.mrb[0].mxu0
      %v1305 = vadd.f32 0.0, %v1304
      %v1306 = vpop.f32.mrb[0].mxu0
      %1307 = vdwg.mxu0
      %v1308 = vadd.f32 %v1167, %v1270
      %v1309 = vadd.f32 %v1168, %v1275
      %v1310 = vadd.f32 %v1169, %v1280
      %v1311 = vadd.f32 %v1170, %v1285
      %v1312 = vadd.f32 %v1171, %v1290
      %v1313 = vadd.f32 %v1172, %v1295
      %v1314 = vadd.f32 %v1173, %v1300
      %v1315 = vadd.f32 %v1174, %v1305
      %v1316 = vxor.u32 %v1308, 2147483648
      %v1317 = vxor.u32 %v1309, 2147483648
      %v1318 = vxor.u32 %v1310, 2147483648
      %v1319 = vxor.u32 %v1311, 2147483648
      %v1320 = vxor.u32 %v1312, 2147483648
      %v1321 = vxor.u32 %v1313, 2147483648
      %v1322 = vmul.f32 %v1316, 1.442695
      %v1323 = vpow.pop %v1322
      %v1324 = vmul.f32 %v1317, 1.442695
      %v1325 = vpow.pop %v1324
      %v1326 = vmul.f32 %v1318, 1.442695
      %v1327 = vpow.pop %v1326
      %v1328 = vmul.f32 %v1319, 1.442695
      %v1329 = vpow.pop %v1328
      %v1330 = vmul.f32 %v1320, 1.442695
      %v1331 = vpow.pop %v1330
      %v1332 = vmul.f32 %v1321, 1.442695
      %v1333 = vpow.pop %v1332
      %v1334 = vadd.f32 %v1323, 1.0
      %v1335 = vadd.f32 %v1325, 1.0
      %v1336 = vadd.f32 %v1327, 1.0
      %v1337 = vadd.f32 %v1329, 1.0
      %v1338 = vadd.f32 %v1331, 1.0
      %v1339 = vadd.f32 %v1333, 1.0
      %v1340 = vrcp.pop %v1334
      %v1341 = vmul.f32 1.0, %v1340
      %v1342 = vrcp.pop %v1335
      %v1343 = vmul.f32 1.0, %v1342
      %v1344 = vrcp.pop %v1336
      %v1345 = vmul.f32 1.0, %v1344
      %v1346 = vrcp.pop %v1337
      %v1347 = vmul.f32 1.0, %v1346
      %v1348 = vrcp.pop %v1338
      %v1349 = vmul.f32 1.0, %v1348
      %v1350 = vrcp.pop %v1339
      %v1351 = vmul.f32 1.0, %v1350
      %v1352 = vtanh.pop %v1314
      %v1353 = vtanh.pop %v1315
      %v1354 = vmul.f32 %v1345, %v1127
      %v1355 = vmul.f32 %v1347, %v1128
      %v1356 = vmul.f32 %v1341, %v1352
      %v1357 = vmul.f32 %v1343, %v1353
      %v1358 = vadd.f32 %v1354, %v1356
      %v1359 = vadd.f32 %v1355, %v1357
      %v1360 = vtanh.pop %v1358
      %v1361 = vtanh.pop %v1359
      %v1362 = vmul.f32 %v1349, %v1360
      %v1363 = vmul.f32 %v1351, %v1361
      %s1364 = scalar_lea.vmem %s170, 64
      %1365 = vst.msk [vmem:[%s1364] sm:$0xff] %vm440, %v1362
      %1366 = vst.msk [vmem:[%s1364 + $0x8] sm:$0xff] %vm440, %v1363
      %1367 = vrot.lane.b32.xlu0 %v1362, 104
      %v1368 = vpop.permute.xlu0 %1367
      %v1369 = vsel %vm184, %v1368, %v1362
      %1370 = vrot.lane.b32.xlu0 %v1363, 104
      %v1371 = vpop.permute.xlu0 %1370
      %v1372 = vsel %vm184, %v1371, %v1363
      %1373 = vrot.lane.b32.xlu0 %v1369, 104
      %v1374 = vpop.permute.xlu0 %1373
      %1375 = vrot.lane.b32.xlu0 %v1372, 104
      %v1376 = vpop.permute.xlu0 %1375
      %v1377 = vsel %vm184, %v1374, %v1362
      %v1378 = vsel %vm184, %v1376, %v1363
      %v1379 = vmul.f32 %v1377, %v194
      %v1380 = vmul.f32 %v1374, %v194
      %v1381 = vmul.f32 %v1378, %v196
      %v1382 = vmul.f32 %v1376, %v196
      %v1383 = vmul.f32 %v1377, %v206
      %v1384 = vmul.f32 %v1378, %v208
      %1387 = vrot.lane.b32.xlu0 %v1362, 103
      %v1388 = vpop.permute.xlu0 %1387
      %1389 = vrot.lane.b32.xlu0 %v1363, 103
      %v1390 = vpop.permute.xlu0 %1389
      %1393 = vrot.lane.b32.xlu0 %v1383, 102
      %v1394 = vpop.permute.xlu0 %1393
      %1395 = vrot.lane.b32.xlu0 %v1384, 102
      %v1396 = vpop.permute.xlu0 %1395
      %s1397 = scalar_lea.vmem %s165, 320
      %v1398 = vld [vmem:[%s1397] sm:$0xff]
      %v1399 = vld [vmem:[%s1397 + $0x8] sm:$0xff]
      %v1400 = vld [vmem:[%s1397 + $0x10] sm:$0xff]
      %v1401 = vld [vmem:[%s1397 + $0x18] sm:$0xff]
      %v1402 = vld [vmem:[%s1397 + $0x20] sm:$0xff]
      %v1403 = vld [vmem:[%s1397 + $0x28] sm:$0xff]
      %v1404 = vld [vmem:[%s1397 + $0x30] sm:$0xff]
      %v1405 = vld [vmem:[%s1397 + $0x38] sm:$0xff]
      %1410 = vrot.lane.b32.xlu0 %v1379, 25
      %v1411 = vpop.permute.xlu0 %1410
      %1412 = vrot.lane.b32.xlu0 %v1380, 25
      %v1413 = vpop.permute.xlu0 %1412
      %1414 = vrot.lane.b32.xlu0 %v1381, 25
      %v1415 = vpop.permute.xlu0 %1414
      %1416 = vrot.lane.b32.xlu0 %v1382, 25
      %v1417 = vpop.permute.xlu0 %1416
      %1418 = vrot.lane.b32.xlu0 %v1388, 25
      %v1419 = vpop.permute.xlu0 %1418
      %1420 = vrot.lane.b32.xlu0 %v1390, 25
      %v1421 = vpop.permute.xlu0 %1420
      %1422 = vrot.lane.b32.xlu0 %v1394, 25
      %v1423 = vpop.permute.xlu0 %1422
      %1424 = vrot.lane.b32.xlu0 %v1396, 25
      %v1425 = vpop.permute.xlu0 %1424
      %v1426 = vsel %vm246, %v1411, %v1413
      %v1427 = vsel %vm246, %v1415, %v1417
      %1434 = vmatprep.subr.mxu0 0.0
      %1435 = vmatpush1.msra.mxu0 %v1426
      %1436 = vmatprep.subr.mxu0 0.0
      %1437 = vmatpush1.msra.mxu0 %v1427
      %1438 = vmatprep.subr.mxu0 0.0
      %1439 = vmatpush1.msra.mxu0 %v1419
      %1440 = vmatprep.subr.mxu0 0.0
      %1441 = vmatpush1.msra.mxu0 %v1421
      %1442 = vmatprep.subr.mxu0 0.0
      %1443 = vmatpush1.msra.mxu0 %v1423
      %1444 = vmatprep.subr.mxu0 0.0
      %1445 = vmatpush1.msra.mxu0 %v1425
      %1446 = vmatprep.subr.mxu0 0.0
      %1447 = vmatpush1.msra.mxu0 0.0
      %1448 = vmatprep.subr.mxu0 0.0
      %1449 = vmatpush1.msra.mxu0 0.0
      %1450 = vmatprep.subr.mxu0 0.0
      %1451 = vmatpush1.msra.mxu0 0.0
      %1452 = vmatprep.subr.mxu0 0.0
      %1453 = vmatpush1.msra.mxu0 0.0
      %1454 = vmatprep.subr.mxu0 0.0
      %1455 = vmatpush1.msra.mxu0 0.0
      %1456 = vmatprep.subr.mxu0 0.0
      %1457 = vmatpush1.msra.mxu0 0.0
      %1458 = vmatprep.subr.mxu0 0.0
      %1459 = vmatpush1.msra.mxu0 0.0
      %1460 = vmatprep.subr.mxu0 0.0
      %1461 = vmatpush1.msra.mxu0 0.0
      %1462 = vmatprep.subr.mxu0 0.0
      %1463 = vmatpush1.msra.mxu0 0.0
      %1464 = vmatprep.subr.mxu0 0.0
      %1465 = vmatpush1.msra.mxu0 0.0
      %1466 = vmatprep.subr.mxu0 0.0
      %1467 = vmatpush1.msra.mxu0 0.0
      %1468 = vmatprep.subr.mxu0 0.0
      %1469 = vmatpush1.msra.mxu0 0.0
      %1470 = vmatprep.subr.mxu0 0.0
      %1471 = vmatpush1.msra.mxu0 0.0
      %1472 = vmatprep.subr.mxu0 0.0
      %1473 = vmatpush1.msra.mxu0 0.0
      %1474 = vmatprep.subr.mxu0 0.0
      %1475 = vmatpush1.msra.mxu0 0.0
      %1476 = vmatprep.subr.mxu0 0.0
      %1477 = vmatpush1.msra.mxu0 0.0
      %1478 = vmatprep.subr.mxu0 0.0
      %1479 = vmatpush1.msra.mxu0 0.0
      %1480 = vmatprep.subr.mxu0 0.0
      %1481 = vmatpush1.msra.mxu0 0.0
      %1482 = vmatprep.subr.mxu0 0.0
      %1483 = vmatpush1.msra.mxu0 0.0
      %1484 = vmatprep.subr.mxu0 0.0
      %1485 = vmatpush1.msra.mxu0 0.0
      %1486 = vmatprep.subr.mxu0 0.0
      %1487 = vmatpush1.msra.mxu0 0.0
      %1488 = vmatprep.subr.mxu0 0.0
      %1489 = vmatpush1.msra.mxu0 0.0
      %1490 = vmatprep.subr.mxu0 0.0
      %1491 = vmatpush1.msra.mxu0 0.0
      %1492 = vmatprep.subr.mxu0 0.0
      %1493 = vmatpush1.msra.mxu0 0.0
      %1494 = vmatprep.subr.mxu0 0.0
      %1495 = vmatpush1.msra.mxu0 0.0
      %1496 = vmatprep.subr.mxu0 0.0
      %1497 = vmatpush1.msra.mxu0 0.0
      %1498 = vmatprep.mubr.f32.mxu0 0.0
      %1499 = vmatmul.mubr.f32.gmra.mrb[0].mxu0 %v256
      %v1500 = vpop.f32.mrb[0].mxu0
      %v1501 = vadd.f32 0.0, %v1500
      %v1502 = vpop.f32.mrb[0].mxu0
      %1503 = vmatprep.mubr.f32.mxu0 0.0
      %1504 = vmatmul.mubr.f32.gmra.mrb[0].mxu0 %v259
      %v1505 = vpop.f32.mrb[0].mxu0
      %v1506 = vadd.f32 0.0, %v1505
      %v1507 = vpop.f32.mrb[0].mxu0
      %1508 = vmatprep.mubr.f32.mxu0 0.0
      %1509 = vmatmul.mubr.f32.gmra.mrb[0].mxu0 %v262
      %v1510 = vpop.f32.mrb[0].mxu0
      %v1511 = vadd.f32 0.0, %v1510
      %v1512 = vpop.f32.mrb[0].mxu0
      %1513 = vmatprep.mubr.f32.mxu0 0.0
      %1514 = vmatmul.mubr.f32.gmra.mrb[0].mxu0 %v265
      %v1515 = vpop.f32.mrb[0].mxu0
      %v1516 = vadd.f32 0.0, %v1515
      %v1517 = vpop.f32.mrb[0].mxu0
      %1518 = vmatprep.mubr.f32.mxu0 0.0
      %1519 = vmatmul.mubr.f32.gmra.mrb[0].mxu0 %v268
      %v1520 = vpop.f32.mrb[0].mxu0
      %v1521 = vadd.f32 0.0, %v1520
      %v1522 = vpop.f32.mrb[0].mxu0
      %1523 = vmatprep.mubr.f32.mxu0 0.0
      %1524 = vmatmul.mubr.f32.gmra.mrb[0].mxu0 %v271
      %v1525 = vpop.f32.mrb[0].mxu0
      %v1526 = vadd.f32 0.0, %v1525
      %v1527 = vpop.f32.mrb[0].mxu0
      %1528 = vmatprep.mubr.f32.mxu0 0.0
      %1529 = vmatmul.mubr.f32.gmra.mrb[0].mxu0 %v274
      %v1530 = vpop.f32.mrb[0].mxu0
      %v1531 = vadd.f32 0.0, %v1530
      %v1532 = vpop.f32.mrb[0].mxu0
      %1533 = vmatprep.mubr.f32.mxu0 0.0
      %1534 = vmatmul.mubr.f32.gmra.mrb[0].mxu0 %v277
      %v1535 = vpop.f32.mrb[0].mxu0
      %v1536 = vadd.f32 0.0, %v1535
      %v1537 = vpop.f32.mrb[0].mxu0
      %1538 = vdwg.mxu0
      %v1539 = vadd.f32 %v1398, %v1501
      %v1540 = vadd.f32 %v1399, %v1506
      %v1541 = vadd.f32 %v1400, %v1511
      %v1542 = vadd.f32 %v1401, %v1516
      %v1543 = vadd.f32 %v1402, %v1521
      %v1544 = vadd.f32 %v1403, %v1526
      %v1545 = vadd.f32 %v1404, %v1531
      %v1546 = vadd.f32 %v1405, %v1536
      %v1547 = vxor.u32 %v1539, 2147483648
      %v1548 = vxor.u32 %v1540, 2147483648
      %v1549 = vxor.u32 %v1541, 2147483648
      %v1550 = vxor.u32 %v1542, 2147483648
      %v1551 = vxor.u32 %v1543, 2147483648
      %v1552 = vxor.u32 %v1544, 2147483648
      %v1553 = vmul.f32 %v1547, 1.442695
      %v1554 = vpow.pop %v1553
      %v1555 = vmul.f32 %v1548, 1.442695
      %v1556 = vpow.pop %v1555
      %v1557 = vmul.f32 %v1549, 1.442695
      %v1558 = vpow.pop %v1557
      %v1559 = vmul.f32 %v1550, 1.442695
      %v1560 = vpow.pop %v1559
      %v1561 = vmul.f32 %v1551, 1.442695
      %v1562 = vpow.pop %v1561
      %v1563 = vmul.f32 %v1552, 1.442695
      %v1564 = vpow.pop %v1563
      %v1565 = vadd.f32 %v1554, 1.0
      %v1566 = vadd.f32 %v1556, 1.0
      %v1567 = vadd.f32 %v1558, 1.0
      %v1568 = vadd.f32 %v1560, 1.0
      %v1569 = vadd.f32 %v1562, 1.0
      %v1570 = vadd.f32 %v1564, 1.0
      %v1571 = vrcp.pop %v1565
      %v1572 = vmul.f32 1.0, %v1571
      %v1573 = vrcp.pop %v1566
      %v1574 = vmul.f32 1.0, %v1573
      %v1575 = vrcp.pop %v1567
      %v1576 = vmul.f32 1.0, %v1575
      %v1577 = vrcp.pop %v1568
      %v1578 = vmul.f32 1.0, %v1577
      %v1579 = vrcp.pop %v1569
      %v1580 = vmul.f32 1.0, %v1579
      %v1581 = vrcp.pop %v1570
      %v1582 = vmul.f32 1.0, %v1581
      %v1583 = vtanh.pop %v1545
      %v1584 = vtanh.pop %v1546
      %v1585 = vmul.f32 %v1576, %v1358
      %v1586 = vmul.f32 %v1578, %v1359
      %v1587 = vmul.f32 %v1572, %v1583
      %v1588 = vmul.f32 %v1574, %v1584
      %v1589 = vadd.f32 %v1585, %v1587
      %v1590 = vadd.f32 %v1586, %v1588
      %v1591 = vtanh.pop %v1589
      %v1592 = vtanh.pop %v1590
      %v1593 = vmul.f32 %v1580, %v1591
      %v1594 = vmul.f32 %v1582, %v1592
      %s1595 = scalar_lea.vmem %s170, 80
      %1596 = vst.msk [vmem:[%s1595] sm:$0xff] %vm440, %v1593
      %1597 = vst.msk [vmem:[%s1595 + $0x8] sm:$0xff] %vm440, %v1594
      %1598 = vrot.lane.b32.xlu0 %v1593, 104
      %v1599 = vpop.permute.xlu0 %1598
      %v1600 = vsel %vm184, %v1599, %v1593
      %1601 = vrot.lane.b32.xlu0 %v1594, 104
      %v1602 = vpop.permute.xlu0 %1601
      %v1603 = vsel %vm184, %v1602, %v1594
      %1604 = vrot.lane.b32.xlu0 %v1600, 104
      %v1605 = vpop.permute.xlu0 %1604
      %1606 = vrot.lane.b32.xlu0 %v1603, 104
      %v1607 = vpop.permute.xlu0 %1606
      %v1608 = vsel %vm184, %v1605, %v1593
      %v1609 = vsel %vm184, %v1607, %v1594
      %v1610 = vmul.f32 %v1608, %v194
      %v1611 = vmul.f32 %v1605, %v194
      %v1612 = vmul.f32 %v1609, %v196
      %v1613 = vmul.f32 %v1607, %v196
      %v1614 = vmul.f32 %v1608, %v206
      %v1615 = vmul.f32 %v1609, %v208
      %1618 = vrot.lane.b32.xlu0 %v1593, 103
      %v1619 = vpop.permute.xlu0 %1618
      %1620 = vrot.lane.b32.xlu0 %v1594, 103
      %v1621 = vpop.permute.xlu0 %1620
      %1624 = vrot.lane.b32.xlu0 %v1614, 102
      %v1625 = vpop.permute.xlu0 %1624
      %1626 = vrot.lane.b32.xlu0 %v1615, 102
      %v1627 = vpop.permute.xlu0 %1626
      %s1628 = scalar_lea.vmem %s165, 384
      %v1629 = vld [vmem:[%s1628] sm:$0xff]
      %v1630 = vld [vmem:[%s1628 + $0x8] sm:$0xff]
      %v1631 = vld [vmem:[%s1628 + $0x10] sm:$0xff]
      %v1632 = vld [vmem:[%s1628 + $0x18] sm:$0xff]
      %v1633 = vld [vmem:[%s1628 + $0x20] sm:$0xff]
      %v1634 = vld [vmem:[%s1628 + $0x28] sm:$0xff]
      %v1635 = vld [vmem:[%s1628 + $0x30] sm:$0xff]
      %v1636 = vld [vmem:[%s1628 + $0x38] sm:$0xff]
      %1641 = vrot.lane.b32.xlu0 %v1610, 25
      %v1642 = vpop.permute.xlu0 %1641
      %1643 = vrot.lane.b32.xlu0 %v1611, 25
      %v1644 = vpop.permute.xlu0 %1643
      %1645 = vrot.lane.b32.xlu0 %v1612, 25
      %v1646 = vpop.permute.xlu0 %1645
      %1647 = vrot.lane.b32.xlu0 %v1613, 25
      %v1648 = vpop.permute.xlu0 %1647
      %1649 = vrot.lane.b32.xlu0 %v1619, 25
      %v1650 = vpop.permute.xlu0 %1649
      %1651 = vrot.lane.b32.xlu0 %v1621, 25
      %v1652 = vpop.permute.xlu0 %1651
      %1653 = vrot.lane.b32.xlu0 %v1625, 25
      %v1654 = vpop.permute.xlu0 %1653
      %1655 = vrot.lane.b32.xlu0 %v1627, 25
      %v1656 = vpop.permute.xlu0 %1655
      %v1657 = vsel %vm246, %v1642, %v1644
      %v1658 = vsel %vm246, %v1646, %v1648
      %1665 = vmatprep.subr.mxu0 0.0
      %1666 = vmatpush1.msra.mxu0 %v1657
      %1667 = vmatprep.subr.mxu0 0.0
      %1668 = vmatpush1.msra.mxu0 %v1658
      %1669 = vmatprep.subr.mxu0 0.0
      %1670 = vmatpush1.msra.mxu0 %v1650
      %1671 = vmatprep.subr.mxu0 0.0
      %1672 = vmatpush1.msra.mxu0 %v1652
      %1673 = vmatprep.subr.mxu0 0.0
      %1674 = vmatpush1.msra.mxu0 %v1654
      %1675 = vmatprep.subr.mxu0 0.0
      %1676 = vmatpush1.msra.mxu0 %v1656
      %1677 = vmatprep.subr.mxu0 0.0
      %1678 = vmatpush1.msra.mxu0 0.0
      %1679 = vmatprep.subr.mxu0 0.0
      %1680 = vmatpush1.msra.mxu0 0.0
      %1681 = vmatprep.subr.mxu0 0.0
      %1682 = vmatpush1.msra.mxu0 0.0
      %1683 = vmatprep.subr.mxu0 0.0
      %1684 = vmatpush1.msra.mxu0 0.0
      %1685 = vmatprep.subr.mxu0 0.0
      %1686 = vmatpush1.msra.mxu0 0.0
      %1687 = vmatprep.subr.mxu0 0.0
      %1688 = vmatpush1.msra.mxu0 0.0
      %1689 = vmatprep.subr.mxu0 0.0
      %1690 = vmatpush1.msra.mxu0 0.0
      %1691 = vmatprep.subr.mxu0 0.0
      %1692 = vmatpush1.msra.mxu0 0.0
      %1693 = vmatprep.subr.mxu0 0.0
      %1694 = vmatpush1.msra.mxu0 0.0
      %1695 = vmatprep.subr.mxu0 0.0
      %1696 = vmatpush1.msra.mxu0 0.0
      %1697 = vmatprep.subr.mxu0 0.0
      %1698 = vmatpush1.msra.mxu0 0.0
      %1699 = vmatprep.subr.mxu0 0.0
      %1700 = vmatpush1.msra.mxu0 0.0
      %1701 = vmatprep.subr.mxu0 0.0
      %1702 = vmatpush1.msra.mxu0 0.0
      %1703 = vmatprep.subr.mxu0 0.0
      %1704 = vmatpush1.msra.mxu0 0.0
      %1705 = vmatprep.subr.mxu0 0.0
      %1706 = vmatpush1.msra.mxu0 0.0
      %1707 = vmatprep.subr.mxu0 0.0
      %1708 = vmatpush1.msra.mxu0 0.0
      %1709 = vmatprep.subr.mxu0 0.0
      %1710 = vmatpush1.msra.mxu0 0.0
      %1711 = vmatprep.subr.mxu0 0.0
      %1712 = vmatpush1.msra.mxu0 0.0
      %1713 = vmatprep.subr.mxu0 0.0
      %1714 = vmatpush1.msra.mxu0 0.0
      %1715 = vmatprep.subr.mxu0 0.0
      %1716 = vmatpush1.msra.mxu0 0.0
      %1717 = vmatprep.subr.mxu0 0.0
      %1718 = vmatpush1.msra.mxu0 0.0
      %1719 = vmatprep.subr.mxu0 0.0
      %1720 = vmatpush1.msra.mxu0 0.0
      %1721 = vmatprep.subr.mxu0 0.0
      %1722 = vmatpush1.msra.mxu0 0.0
      %1723 = vmatprep.subr.mxu0 0.0
      %1724 = vmatpush1.msra.mxu0 0.0
      %1725 = vmatprep.subr.mxu0 0.0
      %1726 = vmatpush1.msra.mxu0 0.0
      %1727 = vmatprep.subr.mxu0 0.0
      %1728 = vmatpush1.msra.mxu0 0.0
      %1729 = vmatprep.mubr.f32.mxu0 0.0
      %1730 = vmatmul.mubr.f32.gmra.mrb[0].mxu0 %v256
      %v1731 = vpop.f32.mrb[0].mxu0
      %v1732 = vadd.f32 0.0, %v1731
      %v1733 = vpop.f32.mrb[0].mxu0
      %1734 = vmatprep.mubr.f32.mxu0 0.0
      %1735 = vmatmul.mubr.f32.gmra.mrb[0].mxu0 %v259
      %v1736 = vpop.f32.mrb[0].mxu0
      %v1737 = vadd.f32 0.0, %v1736
      %v1738 = vpop.f32.mrb[0].mxu0
      %1739 = vmatprep.mubr.f32.mxu0 0.0
      %1740 = vmatmul.mubr.f32.gmra.mrb[0].mxu0 %v262
      %v1741 = vpop.f32.mrb[0].mxu0
      %v1742 = vadd.f32 0.0, %v1741
      %v1743 = vpop.f32.mrb[0].mxu0
      %1744 = vmatprep.mubr.f32.mxu0 0.0
      %1745 = vmatmul.mubr.f32.gmra.mrb[0].mxu0 %v265
      %v1746 = vpop.f32.mrb[0].mxu0
      %v1747 = vadd.f32 0.0, %v1746
      %v1748 = vpop.f32.mrb[0].mxu0
      %1749 = vmatprep.mubr.f32.mxu0 0.0
      %1750 = vmatmul.mubr.f32.gmra.mrb[0].mxu0 %v268
      %v1751 = vpop.f32.mrb[0].mxu0
      %v1752 = vadd.f32 0.0, %v1751
      %v1753 = vpop.f32.mrb[0].mxu0
      %1754 = vmatprep.mubr.f32.mxu0 0.0
      %1755 = vmatmul.mubr.f32.gmra.mrb[0].mxu0 %v271
      %v1756 = vpop.f32.mrb[0].mxu0
      %v1757 = vadd.f32 0.0, %v1756
      %v1758 = vpop.f32.mrb[0].mxu0
      %1759 = vmatprep.mubr.f32.mxu0 0.0
      %1760 = vmatmul.mubr.f32.gmra.mrb[0].mxu0 %v274
      %v1761 = vpop.f32.mrb[0].mxu0
      %v1762 = vadd.f32 0.0, %v1761
      %v1763 = vpop.f32.mrb[0].mxu0
      %1764 = vmatprep.mubr.f32.mxu0 0.0
      %1765 = vmatmul.mubr.f32.gmra.mrb[0].mxu0 %v277
      %v1766 = vpop.f32.mrb[0].mxu0
      %v1767 = vadd.f32 0.0, %v1766
      %v1768 = vpop.f32.mrb[0].mxu0
      %1769 = vdwg.mxu0
      %v1770 = vadd.f32 %v1629, %v1732
      %v1771 = vadd.f32 %v1630, %v1737
      %v1772 = vadd.f32 %v1631, %v1742
      %v1773 = vadd.f32 %v1632, %v1747
      %v1774 = vadd.f32 %v1633, %v1752
      %v1775 = vadd.f32 %v1634, %v1757
      %v1776 = vadd.f32 %v1635, %v1762
      %v1777 = vadd.f32 %v1636, %v1767
      %v1778 = vxor.u32 %v1770, 2147483648
      %v1779 = vxor.u32 %v1771, 2147483648
      %v1780 = vxor.u32 %v1772, 2147483648
      %v1781 = vxor.u32 %v1773, 2147483648
      %v1782 = vxor.u32 %v1774, 2147483648
      %v1783 = vxor.u32 %v1775, 2147483648
      %v1784 = vmul.f32 %v1778, 1.442695
      %v1785 = vpow.pop %v1784
      %v1786 = vmul.f32 %v1779, 1.442695
      %v1787 = vpow.pop %v1786
      %v1788 = vmul.f32 %v1780, 1.442695
      %v1789 = vpow.pop %v1788
      %v1790 = vmul.f32 %v1781, 1.442695
      %v1791 = vpow.pop %v1790
      %v1792 = vmul.f32 %v1782, 1.442695
      %v1793 = vpow.pop %v1792
      %v1794 = vmul.f32 %v1783, 1.442695
      %v1795 = vpow.pop %v1794
      %v1796 = vadd.f32 %v1785, 1.0
      %v1797 = vadd.f32 %v1787, 1.0
      %v1798 = vadd.f32 %v1789, 1.0
      %v1799 = vadd.f32 %v1791, 1.0
      %v1800 = vadd.f32 %v1793, 1.0
      %v1801 = vadd.f32 %v1795, 1.0
      %v1802 = vrcp.pop %v1796
      %v1803 = vmul.f32 1.0, %v1802
      %v1804 = vrcp.pop %v1797
      %v1805 = vmul.f32 1.0, %v1804
      %v1806 = vrcp.pop %v1798
      %v1807 = vmul.f32 1.0, %v1806
      %v1808 = vrcp.pop %v1799
      %v1809 = vmul.f32 1.0, %v1808
      %v1810 = vrcp.pop %v1800
      %v1811 = vmul.f32 1.0, %v1810
      %v1812 = vrcp.pop %v1801
      %v1813 = vmul.f32 1.0, %v1812
      %v1814 = vtanh.pop %v1776
      %v1815 = vtanh.pop %v1777
      %v1816 = vmul.f32 %v1807, %v1589
      %v1817 = vmul.f32 %v1809, %v1590
      %v1818 = vmul.f32 %v1803, %v1814
      %v1819 = vmul.f32 %v1805, %v1815
      %v1820 = vadd.f32 %v1816, %v1818
      %v1821 = vadd.f32 %v1817, %v1819
      %v1822 = vtanh.pop %v1820
      %v1823 = vtanh.pop %v1821
      %v1824 = vmul.f32 %v1811, %v1822
      %v1825 = vmul.f32 %v1813, %v1823
      %s1826 = scalar_lea.vmem %s170, 96
      %1827 = vst.msk [vmem:[%s1826] sm:$0xff] %vm440, %v1824
      %1828 = vst.msk [vmem:[%s1826 + $0x8] sm:$0xff] %vm440, %v1825
      %1829 = vrot.lane.b32.xlu0 %v1824, 104
      %v1830 = vpop.permute.xlu0 %1829
      %v1831 = vsel %vm184, %v1830, %v1824
      %1832 = vrot.lane.b32.xlu0 %v1825, 104
      %v1833 = vpop.permute.xlu0 %1832
      %v1834 = vsel %vm184, %v1833, %v1825
      %1835 = vrot.lane.b32.xlu0 %v1831, 104
      %v1836 = vpop.permute.xlu0 %1835
      %1837 = vrot.lane.b32.xlu0 %v1834, 104
      %v1838 = vpop.permute.xlu0 %1837
      %v1839 = vsel %vm184, %v1836, %v1824
      %v1840 = vsel %vm184, %v1838, %v1825
      %v1841 = vmul.f32 %v1839, %v194
      %v1842 = vmul.f32 %v1836, %v194
      %v1843 = vmul.f32 %v1840, %v196
      %v1844 = vmul.f32 %v1838, %v196
      %v1845 = vmul.f32 %v1839, %v206
      %v1846 = vmul.f32 %v1840, %v208
      %1849 = vrot.lane.b32.xlu0 %v1824, 103
      %v1850 = vpop.permute.xlu0 %1849
      %1851 = vrot.lane.b32.xlu0 %v1825, 103
      %v1852 = vpop.permute.xlu0 %1851
      %1855 = vrot.lane.b32.xlu0 %v1845, 102
      %v1856 = vpop.permute.xlu0 %1855
      %1857 = vrot.lane.b32.xlu0 %v1846, 102
      %v1858 = vpop.permute.xlu0 %1857
      %s1859 = scalar_lea.vmem %s165, 448
      %v1860 = vld [vmem:[%s1859] sm:$0xff]
      %v1861 = vld [vmem:[%s1859 + $0x8] sm:$0xff]
      %v1862 = vld [vmem:[%s1859 + $0x10] sm:$0xff]
      %v1863 = vld [vmem:[%s1859 + $0x18] sm:$0xff]
      %v1864 = vld [vmem:[%s1859 + $0x20] sm:$0xff]
      %v1865 = vld [vmem:[%s1859 + $0x28] sm:$0xff]
      %v1866 = vld [vmem:[%s1859 + $0x30] sm:$0xff]
      %v1867 = vld [vmem:[%s1859 + $0x38] sm:$0xff]
      %1872 = vrot.lane.b32.xlu0 %v1841, 25
      %v1873 = vpop.permute.xlu0 %1872
      %1874 = vrot.lane.b32.xlu0 %v1842, 25
      %v1875 = vpop.permute.xlu0 %1874
      %1876 = vrot.lane.b32.xlu0 %v1843, 25
      %v1877 = vpop.permute.xlu0 %1876
      %1878 = vrot.lane.b32.xlu0 %v1844, 25
      %v1879 = vpop.permute.xlu0 %1878
      %1880 = vrot.lane.b32.xlu0 %v1850, 25
      %v1881 = vpop.permute.xlu0 %1880
      %1882 = vrot.lane.b32.xlu0 %v1852, 25
      %v1883 = vpop.permute.xlu0 %1882
      %1884 = vrot.lane.b32.xlu0 %v1856, 25
      %v1885 = vpop.permute.xlu0 %1884
      %1886 = vrot.lane.b32.xlu0 %v1858, 25
      %v1887 = vpop.permute.xlu0 %1886
      %v1888 = vsel %vm246, %v1873, %v1875
      %v1889 = vsel %vm246, %v1877, %v1879
      %1896 = vmatprep.subr.mxu0 0.0
      %1897 = vmatpush1.msra.mxu0 %v1888
      %1898 = vmatprep.subr.mxu0 0.0
      %1899 = vmatpush1.msra.mxu0 %v1889
      %1900 = vmatprep.subr.mxu0 0.0
      %1901 = vmatpush1.msra.mxu0 %v1881
      %1902 = vmatprep.subr.mxu0 0.0
      %1903 = vmatpush1.msra.mxu0 %v1883
      %1904 = vmatprep.subr.mxu0 0.0
      %1905 = vmatpush1.msra.mxu0 %v1885
      %1906 = vmatprep.subr.mxu0 0.0
      %1907 = vmatpush1.msra.mxu0 %v1887
      %1908 = vmatprep.subr.mxu0 0.0
      %1909 = vmatpush1.msra.mxu0 0.0
      %1910 = vmatprep.subr.mxu0 0.0
      %1911 = vmatpush1.msra.mxu0 0.0
      %1912 = vmatprep.subr.mxu0 0.0
      %1913 = vmatpush1.msra.mxu0 0.0
      %1914 = vmatprep.subr.mxu0 0.0
      %1915 = vmatpush1.msra.mxu0 0.0
      %1916 = vmatprep.subr.mxu0 0.0
      %1917 = vmatpush1.msra.mxu0 0.0
      %1918 = vmatprep.subr.mxu0 0.0
      %1919 = vmatpush1.msra.mxu0 0.0
      %1920 = vmatprep.subr.mxu0 0.0
      %1921 = vmatpush1.msra.mxu0 0.0
      %1922 = vmatprep.subr.mxu0 0.0
      %1923 = vmatpush1.msra.mxu0 0.0
      %1924 = vmatprep.subr.mxu0 0.0
      %1925 = vmatpush1.msra.mxu0 0.0
      %1926 = vmatprep.subr.mxu0 0.0
      %1927 = vmatpush1.msra.mxu0 0.0
      %1928 = vmatprep.subr.mxu0 0.0
      %1929 = vmatpush1.msra.mxu0 0.0
      %1930 = vmatprep.subr.mxu0 0.0
      %1931 = vmatpush1.msra.mxu0 0.0
      %1932 = vmatprep.subr.mxu0 0.0
      %1933 = vmatpush1.msra.mxu0 0.0
      %1934 = vmatprep.subr.mxu0 0.0
      %1935 = vmatpush1.msra.mxu0 0.0
      %1936 = vmatprep.subr.mxu0 0.0
      %1937 = vmatpush1.msra.mxu0 0.0
      %1938 = vmatprep.subr.mxu0 0.0
      %1939 = vmatpush1.msra.mxu0 0.0
      %1940 = vmatprep.subr.mxu0 0.0
      %1941 = vmatpush1.msra.mxu0 0.0
      %1942 = vmatprep.subr.mxu0 0.0
      %1943 = vmatpush1.msra.mxu0 0.0
      %1944 = vmatprep.subr.mxu0 0.0
      %1945 = vmatpush1.msra.mxu0 0.0
      %1946 = vmatprep.subr.mxu0 0.0
      %1947 = vmatpush1.msra.mxu0 0.0
      %1948 = vmatprep.subr.mxu0 0.0
      %1949 = vmatpush1.msra.mxu0 0.0
      %1950 = vmatprep.subr.mxu0 0.0
      %1951 = vmatpush1.msra.mxu0 0.0
      %1952 = vmatprep.subr.mxu0 0.0
      %1953 = vmatpush1.msra.mxu0 0.0
      %1954 = vmatprep.subr.mxu0 0.0
      %1955 = vmatpush1.msra.mxu0 0.0
      %1956 = vmatprep.subr.mxu0 0.0
      %1957 = vmatpush1.msra.mxu0 0.0
      %1958 = vmatprep.subr.mxu0 0.0
      %1959 = vmatpush1.msra.mxu0 0.0
      %1960 = vmatprep.mubr.f32.mxu0 0.0
      %1961 = vmatmul.mubr.f32.gmra.mrb[0].mxu0 %v256
      %v1962 = vpop.f32.mrb[0].mxu0
      %v1963 = vadd.f32 0.0, %v1962
      %v1964 = vpop.f32.mrb[0].mxu0
      %1965 = vmatprep.mubr.f32.mxu0 0.0
      %1966 = vmatmul.mubr.f32.gmra.mrb[0].mxu0 %v259
      %v1967 = vpop.f32.mrb[0].mxu0
      %v1968 = vadd.f32 0.0, %v1967
      %v1969 = vpop.f32.mrb[0].mxu0
      %1970 = vmatprep.mubr.f32.mxu0 0.0
      %1971 = vmatmul.mubr.f32.gmra.mrb[0].mxu0 %v262
      %v1972 = vpop.f32.mrb[0].mxu0
      %v1973 = vadd.f32 0.0, %v1972
      %v1974 = vpop.f32.mrb[0].mxu0
      %1975 = vmatprep.mubr.f32.mxu0 0.0
      %1976 = vmatmul.mubr.f32.gmra.mrb[0].mxu0 %v265
      %v1977 = vpop.f32.mrb[0].mxu0
      %v1978 = vadd.f32 0.0, %v1977
      %v1979 = vpop.f32.mrb[0].mxu0
      %1980 = vmatprep.mubr.f32.mxu0 0.0
      %1981 = vmatmul.mubr.f32.gmra.mrb[0].mxu0 %v268
      %v1982 = vpop.f32.mrb[0].mxu0
      %v1983 = vadd.f32 0.0, %v1982
      %v1984 = vpop.f32.mrb[0].mxu0
      %1985 = vmatprep.mubr.f32.mxu0 0.0
      %1986 = vmatmul.mubr.f32.gmra.mrb[0].mxu0 %v271
      %v1987 = vpop.f32.mrb[0].mxu0
      %v1988 = vadd.f32 0.0, %v1987
      %v1989 = vpop.f32.mrb[0].mxu0
      %1990 = vmatprep.mubr.f32.mxu0 0.0
      %1991 = vmatmul.mubr.f32.gmra.mrb[0].mxu0 %v274
      %v1992 = vpop.f32.mrb[0].mxu0
      %v1993 = vadd.f32 0.0, %v1992
      %v1994 = vpop.f32.mrb[0].mxu0
      %1995 = vmatprep.mubr.f32.mxu0 0.0
      %1996 = vmatmul.mubr.f32.gmra.mrb[0].mxu0 %v277
      %v1997 = vpop.f32.mrb[0].mxu0
      %v1998 = vadd.f32 0.0, %v1997
      %v1999 = vpop.f32.mrb[0].mxu0
      %2000 = vdwg.mxu0
      %v2001 = vadd.f32 %v1860, %v1963
      %v2002 = vadd.f32 %v1861, %v1968
      %v2003 = vadd.f32 %v1862, %v1973
      %v2004 = vadd.f32 %v1863, %v1978
      %v2005 = vadd.f32 %v1864, %v1983
      %v2006 = vadd.f32 %v1865, %v1988
      %v2007 = vadd.f32 %v1866, %v1993
      %v2008 = vadd.f32 %v1867, %v1998
      %v2009 = vxor.u32 %v2001, 2147483648
      %v2010 = vxor.u32 %v2002, 2147483648
      %v2011 = vxor.u32 %v2003, 2147483648
      %v2012 = vxor.u32 %v2004, 2147483648
      %v2013 = vxor.u32 %v2005, 2147483648
      %v2014 = vxor.u32 %v2006, 2147483648
      %v2015 = vmul.f32 %v2009, 1.442695
      %v2016 = vpow.pop %v2015
      %v2017 = vmul.f32 %v2010, 1.442695
      %v2018 = vpow.pop %v2017
      %v2019 = vmul.f32 %v2011, 1.442695
      %v2020 = vpow.pop %v2019
      %v2021 = vmul.f32 %v2012, 1.442695
      %v2022 = vpow.pop %v2021
      %v2023 = vmul.f32 %v2013, 1.442695
      %v2024 = vpow.pop %v2023
      %v2025 = vmul.f32 %v2014, 1.442695
      %v2026 = vpow.pop %v2025
      %v2027 = vadd.f32 %v2016, 1.0
      %v2028 = vadd.f32 %v2018, 1.0
      %v2029 = vadd.f32 %v2020, 1.0
      %v2030 = vadd.f32 %v2022, 1.0
      %v2031 = vadd.f32 %v2024, 1.0
      %v2032 = vadd.f32 %v2026, 1.0
      %v2033 = vrcp.pop %v2027
      %v2034 = vmul.f32 1.0, %v2033
      %v2035 = vrcp.pop %v2028
      %v2036 = vmul.f32 1.0, %v2035
      %v2037 = vrcp.pop %v2029
      %v2038 = vmul.f32 1.0, %v2037
      %v2039 = vrcp.pop %v2030
      %v2040 = vmul.f32 1.0, %v2039
      %v2041 = vrcp.pop %v2031
      %v2042 = vmul.f32 1.0, %v2041
      %v2043 = vrcp.pop %v2032
      %v2044 = vmul.f32 1.0, %v2043
      %v2045 = vtanh.pop %v2007
      %v2046 = vtanh.pop %v2008
      %v2047 = vmul.f32 %v2038, %v1820
      %v2048 = vmul.f32 %v2040, %v1821
      %v2049 = vmul.f32 %v2034, %v2045
      %v2050 = vmul.f32 %v2036, %v2046
      %v2051 = vadd.f32 %v2047, %v2049
      %v2052 = vadd.f32 %v2048, %v2050
      %v2053 = vtanh.pop %v2051
      %v2054 = vtanh.pop %v2052
      %v2055 = vmul.f32 %v2042, %v2053
      %v2056 = vmul.f32 %v2044, %v2054
      %s2057 = scalar_lea.vmem %s170, 112
      %2058 = vst.msk [vmem:[%s2057] sm:$0xff] %vm440, %v2055
      %2059 = vst.msk [vmem:[%s2057 + $0x8] sm:$0xff] %vm440, %v2056
      %2060 = vrot.lane.b32.xlu0 %v2055, 104
      %v2061 = vpop.permute.xlu0 %2060
      %v2062 = vsel %vm184, %v2061, %v2055
      %2063 = vrot.lane.b32.xlu0 %v2056, 104
      %v2064 = vpop.permute.xlu0 %2063
      %v2065 = vsel %vm184, %v2064, %v2056
      %2066 = vrot.lane.b32.xlu0 %v2062, 104
      %v2067 = vpop.permute.xlu0 %2066
      %2068 = vrot.lane.b32.xlu0 %v2065, 104
      %v2069 = vpop.permute.xlu0 %2068
      %v2070 = vsel %vm184, %v2067, %v2055
      %v2071 = vsel %vm184, %v2069, %v2056
      %v2072 = vmul.f32 %v2070, %v194
      %v2073 = vmul.f32 %v2067, %v194
      %v2074 = vmul.f32 %v2071, %v196
      %v2075 = vmul.f32 %v2069, %v196
      %v2076 = vmul.f32 %v2070, %v206
      %v2077 = vmul.f32 %v2071, %v208
      %2080 = vrot.lane.b32.xlu0 %v2055, 103
      %v2081 = vpop.permute.xlu0 %2080
      %2082 = vrot.lane.b32.xlu0 %v2056, 103
      %v2083 = vpop.permute.xlu0 %2082
      %2086 = vrot.lane.b32.xlu0 %v2076, 102
      %v2087 = vpop.permute.xlu0 %2086
      %2088 = vrot.lane.b32.xlu0 %v2077, 102
      %v2089 = vpop.permute.xlu0 %2088
      %s2090 = scalar_lea.vmem %s165, 512
      %v2091 = vld [vmem:[%s2090] sm:$0xff]
      %v2092 = vld [vmem:[%s2090 + $0x8] sm:$0xff]
      %v2093 = vld [vmem:[%s2090 + $0x10] sm:$0xff]
      %v2094 = vld [vmem:[%s2090 + $0x18] sm:$0xff]
      %v2095 = vld [vmem:[%s2090 + $0x20] sm:$0xff]
      %v2096 = vld [vmem:[%s2090 + $0x28] sm:$0xff]
      %v2097 = vld [vmem:[%s2090 + $0x30] sm:$0xff]
      %v2098 = vld [vmem:[%s2090 + $0x38] sm:$0xff]
      %2103 = vrot.lane.b32.xlu0 %v2072, 25
      %v2104 = vpop.permute.xlu0 %2103
      %2105 = vrot.lane.b32.xlu0 %v2073, 25
      %v2106 = vpop.permute.xlu0 %2105
      %2107 = vrot.lane.b32.xlu0 %v2074, 25
      %v2108 = vpop.permute.xlu0 %2107
      %2109 = vrot.lane.b32.xlu0 %v2075, 25
      %v2110 = vpop.permute.xlu0 %2109
      %2111 = vrot.lane.b32.xlu0 %v2081, 25
      %v2112 = vpop.permute.xlu0 %2111
      %2113 = vrot.lane.b32.xlu0 %v2083, 25
      %v2114 = vpop.permute.xlu0 %2113
      %2115 = vrot.lane.b32.xlu0 %v2087, 25
      %v2116 = vpop.permute.xlu0 %2115
      %2117 = vrot.lane.b32.xlu0 %v2089, 25
      %v2118 = vpop.permute.xlu0 %2117
      %v2119 = vsel %vm246, %v2104, %v2106
      %v2120 = vsel %vm246, %v2108, %v2110
      %2127 = vmatprep.subr.mxu0 0.0
      %2128 = vmatpush1.msra.mxu0 %v2119
      %2129 = vmatprep.subr.mxu0 0.0
      %2130 = vmatpush1.msra.mxu0 %v2120
      %2131 = vmatprep.subr.mxu0 0.0
      %2132 = vmatpush1.msra.mxu0 %v2112
      %2133 = vmatprep.subr.mxu0 0.0
      %2134 = vmatpush1.msra.mxu0 %v2114
      %2135 = vmatprep.subr.mxu0 0.0
      %2136 = vmatpush1.msra.mxu0 %v2116
      %2137 = vmatprep.subr.mxu0 0.0
      %2138 = vmatpush1.msra.mxu0 %v2118
      %2139 = vmatprep.subr.mxu0 0.0
      %2140 = vmatpush1.msra.mxu0 0.0
      %2141 = vmatprep.subr.mxu0 0.0
      %2142 = vmatpush1.msra.mxu0 0.0
      %2143 = vmatprep.subr.mxu0 0.0
      %2144 = vmatpush1.msra.mxu0 0.0
      %2145 = vmatprep.subr.mxu0 0.0
      %2146 = vmatpush1.msra.mxu0 0.0
      %2147 = vmatprep.subr.mxu0 0.0
      %2148 = vmatpush1.msra.mxu0 0.0
      %2149 = vmatprep.subr.mxu0 0.0
      %2150 = vmatpush1.msra.mxu0 0.0
      %2151 = vmatprep.subr.mxu0 0.0
      %2152 = vmatpush1.msra.mxu0 0.0
      %2153 = vmatprep.subr.mxu0 0.0
      %2154 = vmatpush1.msra.mxu0 0.0
      %2155 = vmatprep.subr.mxu0 0.0
      %2156 = vmatpush1.msra.mxu0 0.0
      %2157 = vmatprep.subr.mxu0 0.0
      %2158 = vmatpush1.msra.mxu0 0.0
      %2159 = vmatprep.subr.mxu0 0.0
      %2160 = vmatpush1.msra.mxu0 0.0
      %2161 = vmatprep.subr.mxu0 0.0
      %2162 = vmatpush1.msra.mxu0 0.0
      %2163 = vmatprep.subr.mxu0 0.0
      %2164 = vmatpush1.msra.mxu0 0.0
      %2165 = vmatprep.subr.mxu0 0.0
      %2166 = vmatpush1.msra.mxu0 0.0
      %2167 = vmatprep.subr.mxu0 0.0
      %2168 = vmatpush1.msra.mxu0 0.0
      %2169 = vmatprep.subr.mxu0 0.0
      %2170 = vmatpush1.msra.mxu0 0.0
      %2171 = vmatprep.subr.mxu0 0.0
      %2172 = vmatpush1.msra.mxu0 0.0
      %2173 = vmatprep.subr.mxu0 0.0
      %2174 = vmatpush1.msra.mxu0 0.0
      %2175 = vmatprep.subr.mxu0 0.0
      %2176 = vmatpush1.msra.mxu0 0.0
      %2177 = vmatprep.subr.mxu0 0.0
      %2178 = vmatpush1.msra.mxu0 0.0
      %2179 = vmatprep.subr.mxu0 0.0
      %2180 = vmatpush1.msra.mxu0 0.0
      %2181 = vmatprep.subr.mxu0 0.0
      %2182 = vmatpush1.msra.mxu0 0.0
      %2183 = vmatprep.subr.mxu0 0.0
      %2184 = vmatpush1.msra.mxu0 0.0
      %2185 = vmatprep.subr.mxu0 0.0
      %2186 = vmatpush1.msra.mxu0 0.0
      %2187 = vmatprep.subr.mxu0 0.0
      %2188 = vmatpush1.msra.mxu0 0.0
      %2189 = vmatprep.subr.mxu0 0.0
      %2190 = vmatpush1.msra.mxu0 0.0
      %2191 = vmatprep.mubr.f32.mxu0 0.0
      %2192 = vmatmul.mubr.f32.gmra.mrb[0].mxu0 %v256
      %v2193 = vpop.f32.mrb[0].mxu0
      %v2194 = vadd.f32 0.0, %v2193
      %v2195 = vpop.f32.mrb[0].mxu0
      %2196 = vmatprep.mubr.f32.mxu0 0.0
      %2197 = vmatmul.mubr.f32.gmra.mrb[0].mxu0 %v259
      %v2198 = vpop.f32.mrb[0].mxu0
      %v2199 = vadd.f32 0.0, %v2198
      %v2200 = vpop.f32.mrb[0].mxu0
      %2201 = vmatprep.mubr.f32.mxu0 0.0
      %2202 = vmatmul.mubr.f32.gmra.mrb[0].mxu0 %v262
      %v2203 = vpop.f32.mrb[0].mxu0
      %v2204 = vadd.f32 0.0, %v2203
      %v2205 = vpop.f32.mrb[0].mxu0
      %2206 = vmatprep.mubr.f32.mxu0 0.0
      %2207 = vmatmul.mubr.f32.gmra.mrb[0].mxu0 %v265
      %v2208 = vpop.f32.mrb[0].mxu0
      %v2209 = vadd.f32 0.0, %v2208
      %v2210 = vpop.f32.mrb[0].mxu0
      %2211 = vmatprep.mubr.f32.mxu0 0.0
      %2212 = vmatmul.mubr.f32.gmra.mrb[0].mxu0 %v268
      %v2213 = vpop.f32.mrb[0].mxu0
      %v2214 = vadd.f32 0.0, %v2213
      %v2215 = vpop.f32.mrb[0].mxu0
      %2216 = vmatprep.mubr.f32.mxu0 0.0
      %2217 = vmatmul.mubr.f32.gmra.mrb[0].mxu0 %v271
      %v2218 = vpop.f32.mrb[0].mxu0
      %v2219 = vadd.f32 0.0, %v2218
      %v2220 = vpop.f32.mrb[0].mxu0
      %2221 = vmatprep.mubr.f32.mxu0 0.0
      %2222 = vmatmul.mubr.f32.gmra.mrb[0].mxu0 %v274
      %v2223 = vpop.f32.mrb[0].mxu0
      %v2224 = vadd.f32 0.0, %v2223
      %v2225 = vpop.f32.mrb[0].mxu0
      %2226 = vmatprep.mubr.f32.mxu0 0.0
      %2227 = vmatmul.mubr.f32.gmra.mrb[0].mxu0 %v277
      %v2228 = vpop.f32.mrb[0].mxu0
      %v2229 = vadd.f32 0.0, %v2228
      %v2230 = vpop.f32.mrb[0].mxu0
      %2231 = vdwg.mxu0
      %v2232 = vadd.f32 %v2091, %v2194
      %v2233 = vadd.f32 %v2092, %v2199
      %v2234 = vadd.f32 %v2093, %v2204
      %v2235 = vadd.f32 %v2094, %v2209
      %v2236 = vadd.f32 %v2095, %v2214
      %v2237 = vadd.f32 %v2096, %v2219
      %v2238 = vadd.f32 %v2097, %v2224
      %v2239 = vadd.f32 %v2098, %v2229
      %v2240 = vxor.u32 %v2232, 2147483648
      %v2241 = vxor.u32 %v2233, 2147483648
      %v2242 = vxor.u32 %v2234, 2147483648
      %v2243 = vxor.u32 %v2235, 2147483648
      %v2244 = vxor.u32 %v2236, 2147483648
      %v2245 = vxor.u32 %v2237, 2147483648
      %v2246 = vmul.f32 %v2240, 1.442695
      %v2247 = vpow.pop %v2246
      %v2248 = vmul.f32 %v2241, 1.442695
      %v2249 = vpow.pop %v2248
      %v2250 = vmul.f32 %v2242, 1.442695
      %v2251 = vpow.pop %v2250
      %v2252 = vmul.f32 %v2243, 1.442695
      %v2253 = vpow.pop %v2252
      %v2254 = vmul.f32 %v2244, 1.442695
      %v2255 = vpow.pop %v2254
      %v2256 = vmul.f32 %v2245, 1.442695
      %v2257 = vpow.pop %v2256
      %v2258 = vadd.f32 %v2247, 1.0
      %v2259 = vadd.f32 %v2249, 1.0
      %v2260 = vadd.f32 %v2251, 1.0
      %v2261 = vadd.f32 %v2253, 1.0
      %v2262 = vadd.f32 %v2255, 1.0
      %v2263 = vadd.f32 %v2257, 1.0
      %v2264 = vrcp.pop %v2258
      %v2265 = vmul.f32 1.0, %v2264
      %v2266 = vrcp.pop %v2259
      %v2267 = vmul.f32 1.0, %v2266
      %v2268 = vrcp.pop %v2260
      %v2269 = vmul.f32 1.0, %v2268
      %v2270 = vrcp.pop %v2261
      %v2271 = vmul.f32 1.0, %v2270
      %v2272 = vrcp.pop %v2262
      %v2273 = vmul.f32 1.0, %v2272
      %v2274 = vrcp.pop %v2263
      %v2275 = vmul.f32 1.0, %v2274
      %v2276 = vtanh.pop %v2238
      %v2277 = vtanh.pop %v2239
      %v2278 = vmul.f32 %v2269, %v2051
      %v2279 = vmul.f32 %v2271, %v2052
      %v2280 = vmul.f32 %v2265, %v2276
      %v2281 = vmul.f32 %v2267, %v2277
      %v2282 = vadd.f32 %v2278, %v2280
      %v2283 = vadd.f32 %v2279, %v2281
      %v2284 = vtanh.pop %v2282
      %v2285 = vtanh.pop %v2283
      %v2286 = vmul.f32 %v2273, %v2284
      %v2287 = vmul.f32 %v2275, %v2285
      %s2288 = scalar_lea.vmem %s170, 128
      %2289 = vst.msk [vmem:[%s2288] sm:$0xff] %vm440, %v2286
      %2290 = vst.msk [vmem:[%s2288 + $0x8] sm:$0xff] %vm440, %v2287
      %2291 = vrot.lane.b32.xlu0 %v2286, 104
      %v2292 = vpop.permute.xlu0 %2291
      %v2293 = vsel %vm184, %v2292, %v2286
      %2294 = vrot.lane.b32.xlu0 %v2287, 104
      %v2295 = vpop.permute.xlu0 %2294
      %v2296 = vsel %vm184, %v2295, %v2287
      %2297 = vrot.lane.b32.xlu0 %v2293, 104
      %v2298 = vpop.permute.xlu0 %2297
      %2299 = vrot.lane.b32.xlu0 %v2296, 104
      %v2300 = vpop.permute.xlu0 %2299
      %v2301 = vsel %vm184, %v2298, %v2286
      %v2302 = vsel %vm184, %v2300, %v2287
      %v2303 = vmul.f32 %v2301, %v194
      %v2304 = vmul.f32 %v2298, %v194
      %v2305 = vmul.f32 %v2302, %v196
      %v2306 = vmul.f32 %v2300, %v196
      %v2307 = vmul.f32 %v2301, %v206
      %v2308 = vmul.f32 %v2302, %v208
      %2311 = vrot.lane.b32.xlu0 %v2286, 103
      %v2312 = vpop.permute.xlu0 %2311
      %2313 = vrot.lane.b32.xlu0 %v2287, 103
      %v2314 = vpop.permute.xlu0 %2313
      %2317 = vrot.lane.b32.xlu0 %v2307, 102
      %v2318 = vpop.permute.xlu0 %2317
      %2319 = vrot.lane.b32.xlu0 %v2308, 102
      %v2320 = vpop.permute.xlu0 %2319
      %s2321 = scalar_lea.vmem %s165, 576
      %v2322 = vld [vmem:[%s2321] sm:$0xff]
      %v2323 = vld [vmem:[%s2321 + $0x8] sm:$0xff]
      %v2324 = vld [vmem:[%s2321 + $0x10] sm:$0xff]
      %v2325 = vld [vmem:[%s2321 + $0x18] sm:$0xff]
      %v2326 = vld [vmem:[%s2321 + $0x20] sm:$0xff]
      %v2327 = vld [vmem:[%s2321 + $0x28] sm:$0xff]
      %v2328 = vld [vmem:[%s2321 + $0x30] sm:$0xff]
      %v2329 = vld [vmem:[%s2321 + $0x38] sm:$0xff]
      %2334 = vrot.lane.b32.xlu0 %v2303, 25
      %v2335 = vpop.permute.xlu0 %2334
      %2336 = vrot.lane.b32.xlu0 %v2304, 25
      %v2337 = vpop.permute.xlu0 %2336
      %2338 = vrot.lane.b32.xlu0 %v2305, 25
      %v2339 = vpop.permute.xlu0 %2338
      %2340 = vrot.lane.b32.xlu0 %v2306, 25
      %v2341 = vpop.permute.xlu0 %2340
      %2342 = vrot.lane.b32.xlu0 %v2312, 25
      %v2343 = vpop.permute.xlu0 %2342
      %2344 = vrot.lane.b32.xlu0 %v2314, 25
      %v2345 = vpop.permute.xlu0 %2344
      %2346 = vrot.lane.b32.xlu0 %v2318, 25
      %v2347 = vpop.permute.xlu0 %2346
      %2348 = vrot.lane.b32.xlu0 %v2320, 25
      %v2349 = vpop.permute.xlu0 %2348
      %v2350 = vsel %vm246, %v2335, %v2337
      %v2351 = vsel %vm246, %v2339, %v2341
      %2358 = vmatprep.subr.mxu0 0.0
      %2359 = vmatpush1.msra.mxu0 %v2350
      %2360 = vmatprep.subr.mxu0 0.0
      %2361 = vmatpush1.msra.mxu0 %v2351
      %2362 = vmatprep.subr.mxu0 0.0
      %2363 = vmatpush1.msra.mxu0 %v2343
      %2364 = vmatprep.subr.mxu0 0.0
      %2365 = vmatpush1.msra.mxu0 %v2345
      %2366 = vmatprep.subr.mxu0 0.0
      %2367 = vmatpush1.msra.mxu0 %v2347
      %2368 = vmatprep.subr.mxu0 0.0
      %2369 = vmatpush1.msra.mxu0 %v2349
      %2370 = vmatprep.subr.mxu0 0.0
      %2371 = vmatpush1.msra.mxu0 0.0
      %2372 = vmatprep.subr.mxu0 0.0
      %2373 = vmatpush1.msra.mxu0 0.0
      %2374 = vmatprep.subr.mxu0 0.0
      %2375 = vmatpush1.msra.mxu0 0.0
      %2376 = vmatprep.subr.mxu0 0.0
      %2377 = vmatpush1.msra.mxu0 0.0
      %2378 = vmatprep.subr.mxu0 0.0
      %2379 = vmatpush1.msra.mxu0 0.0
      %2380 = vmatprep.subr.mxu0 0.0
      %2381 = vmatpush1.msra.mxu0 0.0
      %2382 = vmatprep.subr.mxu0 0.0
      %2383 = vmatpush1.msra.mxu0 0.0
      %2384 = vmatprep.subr.mxu0 0.0
      %2385 = vmatpush1.msra.mxu0 0.0
      %2386 = vmatprep.subr.mxu0 0.0
      %2387 = vmatpush1.msra.mxu0 0.0
      %2388 = vmatprep.subr.mxu0 0.0
      %2389 = vmatpush1.msra.mxu0 0.0
      %2390 = vmatprep.subr.mxu0 0.0
      %2391 = vmatpush1.msra.mxu0 0.0
      %2392 = vmatprep.subr.mxu0 0.0
      %2393 = vmatpush1.msra.mxu0 0.0
      %2394 = vmatprep.subr.mxu0 0.0
      %2395 = vmatpush1.msra.mxu0 0.0
      %2396 = vmatprep.subr.mxu0 0.0
      %2397 = vmatpush1.msra.mxu0 0.0
      %2398 = vmatprep.subr.mxu0 0.0
      %2399 = vmatpush1.msra.mxu0 0.0
      %2400 = vmatprep.subr.mxu0 0.0
      %2401 = vmatpush1.msra.mxu0 0.0
      %2402 = vmatprep.subr.mxu0 0.0
      %2403 = vmatpush1.msra.mxu0 0.0
      %2404 = vmatprep.subr.mxu0 0.0
      %2405 = vmatpush1.msra.mxu0 0.0
      %2406 = vmatprep.subr.mxu0 0.0
      %2407 = vmatpush1.msra.mxu0 0.0
      %2408 = vmatprep.subr.mxu0 0.0
      %2409 = vmatpush1.msra.mxu0 0.0
      %2410 = vmatprep.subr.mxu0 0.0
      %2411 = vmatpush1.msra.mxu0 0.0
      %2412 = vmatprep.subr.mxu0 0.0
      %2413 = vmatpush1.msra.mxu0 0.0
      %2414 = vmatprep.subr.mxu0 0.0
      %2415 = vmatpush1.msra.mxu0 0.0
      %2416 = vmatprep.subr.mxu0 0.0
      %2417 = vmatpush1.msra.mxu0 0.0
      %2418 = vmatprep.subr.mxu0 0.0
      %2419 = vmatpush1.msra.mxu0 0.0
      %2420 = vmatprep.subr.mxu0 0.0
      %2421 = vmatpush1.msra.mxu0 0.0
      %2422 = vmatprep.mubr.f32.mxu0 0.0
      %2423 = vmatmul.mubr.f32.gmra.mrb[0].mxu0 %v256
      %v2424 = vpop.f32.mrb[0].mxu0
      %v2425 = vadd.f32 0.0, %v2424
      %v2426 = vpop.f32.mrb[0].mxu0
      %2427 = vmatprep.mubr.f32.mxu0 0.0
      %2428 = vmatmul.mubr.f32.gmra.mrb[0].mxu0 %v259
      %v2429 = vpop.f32.mrb[0].mxu0
      %v2430 = vadd.f32 0.0, %v2429
      %v2431 = vpop.f32.mrb[0].mxu0
      %2432 = vmatprep.mubr.f32.mxu0 0.0
      %2433 = vmatmul.mubr.f32.gmra.mrb[0].mxu0 %v262
      %v2434 = vpop.f32.mrb[0].mxu0
      %v2435 = vadd.f32 0.0, %v2434
      %v2436 = vpop.f32.mrb[0].mxu0
      %2437 = vmatprep.mubr.f32.mxu0 0.0
      %2438 = vmatmul.mubr.f32.gmra.mrb[0].mxu0 %v265
      %v2439 = vpop.f32.mrb[0].mxu0
      %v2440 = vadd.f32 0.0, %v2439
      %v2441 = vpop.f32.mrb[0].mxu0
      %2442 = vmatprep.mubr.f32.mxu0 0.0
      %2443 = vmatmul.mubr.f32.gmra.mrb[0].mxu0 %v268
      %v2444 = vpop.f32.mrb[0].mxu0
      %v2445 = vadd.f32 0.0, %v2444
      %v2446 = vpop.f32.mrb[0].mxu0
      %2447 = vmatprep.mubr.f32.mxu0 0.0
      %2448 = vmatmul.mubr.f32.gmra.mrb[0].mxu0 %v271
      %v2449 = vpop.f32.mrb[0].mxu0
      %v2450 = vadd.f32 0.0, %v2449
      %v2451 = vpop.f32.mrb[0].mxu0
      %2452 = vmatprep.mubr.f32.mxu0 0.0
      %2453 = vmatmul.mubr.f32.gmra.mrb[0].mxu0 %v274
      %v2454 = vpop.f32.mrb[0].mxu0
      %v2455 = vadd.f32 0.0, %v2454
      %v2456 = vpop.f32.mrb[0].mxu0
      %2457 = vmatprep.mubr.f32.mxu0 0.0
      %2458 = vmatmul.mubr.f32.gmra.mrb[0].mxu0 %v277
      %v2459 = vpop.f32.mrb[0].mxu0
      %v2460 = vadd.f32 0.0, %v2459
      %v2461 = vpop.f32.mrb[0].mxu0
      %2462 = vdwg.mxu0
      %v2463 = vadd.f32 %v2322, %v2425
      %v2464 = vadd.f32 %v2323, %v2430
      %v2465 = vadd.f32 %v2324, %v2435
      %v2466 = vadd.f32 %v2325, %v2440
      %v2467 = vadd.f32 %v2326, %v2445
      %v2468 = vadd.f32 %v2327, %v2450
      %v2469 = vadd.f32 %v2328, %v2455
      %v2470 = vadd.f32 %v2329, %v2460
      %v2471 = vxor.u32 %v2463, 2147483648
      %v2472 = vxor.u32 %v2464, 2147483648
      %v2473 = vxor.u32 %v2465, 2147483648
      %v2474 = vxor.u32 %v2466, 2147483648
      %v2475 = vxor.u32 %v2467, 2147483648
      %v2476 = vxor.u32 %v2468, 2147483648
      %v2477 = vmul.f32 %v2471, 1.442695
      %v2478 = vpow.pop %v2477
      %v2479 = vmul.f32 %v2472, 1.442695
      %v2480 = vpow.pop %v2479
      %v2481 = vmul.f32 %v2473, 1.442695
      %v2482 = vpow.pop %v2481
      %v2483 = vmul.f32 %v2474, 1.442695
      %v2484 = vpow.pop %v2483
      %v2485 = vmul.f32 %v2475, 1.442695
      %v2486 = vpow.pop %v2485
      %v2487 = vmul.f32 %v2476, 1.442695
      %v2488 = vpow.pop %v2487
      %v2489 = vadd.f32 %v2478, 1.0
      %v2490 = vadd.f32 %v2480, 1.0
      %v2491 = vadd.f32 %v2482, 1.0
      %v2492 = vadd.f32 %v2484, 1.0
      %v2493 = vadd.f32 %v2486, 1.0
      %v2494 = vadd.f32 %v2488, 1.0
      %v2495 = vrcp.pop %v2489
      %v2496 = vmul.f32 1.0, %v2495
      %v2497 = vrcp.pop %v2490
      %v2498 = vmul.f32 1.0, %v2497
      %v2499 = vrcp.pop %v2491
      %v2500 = vmul.f32 1.0, %v2499
      %v2501 = vrcp.pop %v2492
      %v2502 = vmul.f32 1.0, %v2501
      %v2503 = vrcp.pop %v2493
      %v2504 = vmul.f32 1.0, %v2503
      %v2505 = vrcp.pop %v2494
      %v2506 = vmul.f32 1.0, %v2505
      %v2507 = vtanh.pop %v2469
      %v2508 = vtanh.pop %v2470
      %v2509 = vmul.f32 %v2500, %v2282
      %v2510 = vmul.f32 %v2502, %v2283
      %v2511 = vmul.f32 %v2496, %v2507
      %v2512 = vmul.f32 %v2498, %v2508
      %v2513 = vadd.f32 %v2509, %v2511
      %v2514 = vadd.f32 %v2510, %v2512
      %v2515 = vtanh.pop %v2513
      %v2516 = vtanh.pop %v2514
      %v2517 = vmul.f32 %v2504, %v2515
      %v2518 = vmul.f32 %v2506, %v2516
      %s2519 = scalar_lea.vmem %s170, 144
      %2520 = vst.msk [vmem:[%s2519] sm:$0xff] %vm440, %v2517
      %2521 = vst.msk [vmem:[%s2519 + $0x8] sm:$0xff] %vm440, %v2518
      %2522 = vrot.lane.b32.xlu0 %v2517, 104
      %v2523 = vpop.permute.xlu0 %2522
      %v2524 = vsel %vm184, %v2523, %v2517
      %2525 = vrot.lane.b32.xlu0 %v2518, 104
      %v2526 = vpop.permute.xlu0 %2525
      %v2527 = vsel %vm184, %v2526, %v2518
      %2528 = vrot.lane.b32.xlu0 %v2524, 104
      %v2529 = vpop.permute.xlu0 %2528
      %2530 = vrot.lane.b32.xlu0 %v2527, 104
      %v2531 = vpop.permute.xlu0 %2530
      %v2532 = vsel %vm184, %v2529, %v2517
      %v2533 = vsel %vm184, %v2531, %v2518
      %v2534 = vmul.f32 %v2532, %v194
      %v2535 = vmul.f32 %v2529, %v194
      %v2536 = vmul.f32 %v2533, %v196
      %v2537 = vmul.f32 %v2531, %v196
      %v2538 = vmul.f32 %v2532, %v206
      %v2539 = vmul.f32 %v2533, %v208
      %2542 = vrot.lane.b32.xlu0 %v2517, 103
      %v2543 = vpop.permute.xlu0 %2542
      %2544 = vrot.lane.b32.xlu0 %v2518, 103
      %v2545 = vpop.permute.xlu0 %2544
      %2548 = vrot.lane.b32.xlu0 %v2538, 102
      %v2549 = vpop.permute.xlu0 %2548
      %2550 = vrot.lane.b32.xlu0 %v2539, 102
      %v2551 = vpop.permute.xlu0 %2550
      %s2552 = scalar_lea.vmem %s165, 640
      %v2553 = vld [vmem:[%s2552] sm:$0xff]
      %v2554 = vld [vmem:[%s2552 + $0x8] sm:$0xff]
      %v2555 = vld [vmem:[%s2552 + $0x10] sm:$0xff]
      %v2556 = vld [vmem:[%s2552 + $0x18] sm:$0xff]
      %v2557 = vld [vmem:[%s2552 + $0x20] sm:$0xff]
      %v2558 = vld [vmem:[%s2552 + $0x28] sm:$0xff]
      %v2559 = vld [vmem:[%s2552 + $0x30] sm:$0xff]
      %v2560 = vld [vmem:[%s2552 + $0x38] sm:$0xff]
      %2565 = vrot.lane.b32.xlu0 %v2534, 25
      %v2566 = vpop.permute.xlu0 %2565
      %2567 = vrot.lane.b32.xlu0 %v2535, 25
      %v2568 = vpop.permute.xlu0 %2567
      %2569 = vrot.lane.b32.xlu0 %v2536, 25
      %v2570 = vpop.permute.xlu0 %2569
      %2571 = vrot.lane.b32.xlu0 %v2537, 25
      %v2572 = vpop.permute.xlu0 %2571
      %2573 = vrot.lane.b32.xlu0 %v2543, 25
      %v2574 = vpop.permute.xlu0 %2573
      %2575 = vrot.lane.b32.xlu0 %v2545, 25
      %v2576 = vpop.permute.xlu0 %2575
      %2577 = vrot.lane.b32.xlu0 %v2549, 25
      %v2578 = vpop.permute.xlu0 %2577
      %2579 = vrot.lane.b32.xlu0 %v2551, 25
      %v2580 = vpop.permute.xlu0 %2579
      %v2581 = vsel %vm246, %v2566, %v2568
      %v2582 = vsel %vm246, %v2570, %v2572
      %2589 = vmatprep.subr.mxu0 0.0
      %2590 = vmatpush1.msra.mxu0 %v2581
      %2591 = vmatprep.subr.mxu0 0.0
      %2592 = vmatpush1.msra.mxu0 %v2582
      %2593 = vmatprep.subr.mxu0 0.0
      %2594 = vmatpush1.msra.mxu0 %v2574
      %2595 = vmatprep.subr.mxu0 0.0
      %2596 = vmatpush1.msra.mxu0 %v2576
      %2597 = vmatprep.subr.mxu0 0.0
      %2598 = vmatpush1.msra.mxu0 %v2578
      %2599 = vmatprep.subr.mxu0 0.0
      %2600 = vmatpush1.msra.mxu0 %v2580
      %2601 = vmatprep.subr.mxu0 0.0
      %2602 = vmatpush1.msra.mxu0 0.0
      %2603 = vmatprep.subr.mxu0 0.0
      %2604 = vmatpush1.msra.mxu0 0.0
      %2605 = vmatprep.subr.mxu0 0.0
      %2606 = vmatpush1.msra.mxu0 0.0
      %2607 = vmatprep.subr.mxu0 0.0
      %2608 = vmatpush1.msra.mxu0 0.0
      %2609 = vmatprep.subr.mxu0 0.0
      %2610 = vmatpush1.msra.mxu0 0.0
      %2611 = vmatprep.subr.mxu0 0.0
      %2612 = vmatpush1.msra.mxu0 0.0
      %2613 = vmatprep.subr.mxu0 0.0
      %2614 = vmatpush1.msra.mxu0 0.0
      %2615 = vmatprep.subr.mxu0 0.0
      %2616 = vmatpush1.msra.mxu0 0.0
      %2617 = vmatprep.subr.mxu0 0.0
      %2618 = vmatpush1.msra.mxu0 0.0
      %2619 = vmatprep.subr.mxu0 0.0
      %2620 = vmatpush1.msra.mxu0 0.0
      %2621 = vmatprep.subr.mxu0 0.0
      %2622 = vmatpush1.msra.mxu0 0.0
      %2623 = vmatprep.subr.mxu0 0.0
      %2624 = vmatpush1.msra.mxu0 0.0
      %2625 = vmatprep.subr.mxu0 0.0
      %2626 = vmatpush1.msra.mxu0 0.0
      %2627 = vmatprep.subr.mxu0 0.0
      %2628 = vmatpush1.msra.mxu0 0.0
      %2629 = vmatprep.subr.mxu0 0.0
      %2630 = vmatpush1.msra.mxu0 0.0
      %2631 = vmatprep.subr.mxu0 0.0
      %2632 = vmatpush1.msra.mxu0 0.0
      %2633 = vmatprep.subr.mxu0 0.0
      %2634 = vmatpush1.msra.mxu0 0.0
      %2635 = vmatprep.subr.mxu0 0.0
      %2636 = vmatpush1.msra.mxu0 0.0
      %2637 = vmatprep.subr.mxu0 0.0
      %2638 = vmatpush1.msra.mxu0 0.0
      %2639 = vmatprep.subr.mxu0 0.0
      %2640 = vmatpush1.msra.mxu0 0.0
      %2641 = vmatprep.subr.mxu0 0.0
      %2642 = vmatpush1.msra.mxu0 0.0
      %2643 = vmatprep.subr.mxu0 0.0
      %2644 = vmatpush1.msra.mxu0 0.0
      %2645 = vmatprep.subr.mxu0 0.0
      %2646 = vmatpush1.msra.mxu0 0.0
      %2647 = vmatprep.subr.mxu0 0.0
      %2648 = vmatpush1.msra.mxu0 0.0
      %2649 = vmatprep.subr.mxu0 0.0
      %2650 = vmatpush1.msra.mxu0 0.0
      %2651 = vmatprep.subr.mxu0 0.0
      %2652 = vmatpush1.msra.mxu0 0.0
      %2653 = vmatprep.mubr.f32.mxu0 0.0
      %2654 = vmatmul.mubr.f32.gmra.mrb[0].mxu0 %v256
      %v2655 = vpop.f32.mrb[0].mxu0
      %v2656 = vadd.f32 0.0, %v2655
      %v2657 = vpop.f32.mrb[0].mxu0
      %2658 = vmatprep.mubr.f32.mxu0 0.0
      %2659 = vmatmul.mubr.f32.gmra.mrb[0].mxu0 %v259
      %v2660 = vpop.f32.mrb[0].mxu0
      %v2661 = vadd.f32 0.0, %v2660
      %v2662 = vpop.f32.mrb[0].mxu0
      %2663 = vmatprep.mubr.f32.mxu0 0.0
      %2664 = vmatmul.mubr.f32.gmra.mrb[0].mxu0 %v262
      %v2665 = vpop.f32.mrb[0].mxu0
      %v2666 = vadd.f32 0.0, %v2665
      %v2667 = vpop.f32.mrb[0].mxu0
      %2668 = vmatprep.mubr.f32.mxu0 0.0
      %2669 = vmatmul.mubr.f32.gmra.mrb[0].mxu0 %v265
      %v2670 = vpop.f32.mrb[0].mxu0
      %v2671 = vadd.f32 0.0, %v2670
      %v2672 = vpop.f32.mrb[0].mxu0
      %2673 = vmatprep.mubr.f32.mxu0 0.0
      %2674 = vmatmul.mubr.f32.gmra.mrb[0].mxu0 %v268
      %v2675 = vpop.f32.mrb[0].mxu0
      %v2676 = vadd.f32 0.0, %v2675
      %v2677 = vpop.f32.mrb[0].mxu0
      %2678 = vmatprep.mubr.f32.mxu0 0.0
      %2679 = vmatmul.mubr.f32.gmra.mrb[0].mxu0 %v271
      %v2680 = vpop.f32.mrb[0].mxu0
      %v2681 = vadd.f32 0.0, %v2680
      %v2682 = vpop.f32.mrb[0].mxu0
      %2683 = vmatprep.mubr.f32.mxu0 0.0
      %2684 = vmatmul.mubr.f32.gmra.mrb[0].mxu0 %v274
      %v2685 = vpop.f32.mrb[0].mxu0
      %v2686 = vadd.f32 0.0, %v2685
      %v2687 = vpop.f32.mrb[0].mxu0
      %2688 = vmatprep.mubr.f32.mxu0 0.0
      %2689 = vmatmul.mubr.f32.gmra.mrb[0].mxu0 %v277
      %v2690 = vpop.f32.mrb[0].mxu0
      %v2691 = vadd.f32 0.0, %v2690
      %v2692 = vpop.f32.mrb[0].mxu0
      %2693 = vdwg.mxu0
      %v2694 = vadd.f32 %v2553, %v2656
      %v2695 = vadd.f32 %v2554, %v2661
      %v2696 = vadd.f32 %v2555, %v2666
      %v2697 = vadd.f32 %v2556, %v2671
      %v2698 = vadd.f32 %v2557, %v2676
      %v2699 = vadd.f32 %v2558, %v2681
      %v2700 = vadd.f32 %v2559, %v2686
      %v2701 = vadd.f32 %v2560, %v2691
      %v2702 = vxor.u32 %v2694, 2147483648
      %v2703 = vxor.u32 %v2695, 2147483648
      %v2704 = vxor.u32 %v2696, 2147483648
      %v2705 = vxor.u32 %v2697, 2147483648
      %v2706 = vxor.u32 %v2698, 2147483648
      %v2707 = vxor.u32 %v2699, 2147483648
      %v2708 = vmul.f32 %v2702, 1.442695
      %v2709 = vpow.pop %v2708
      %v2710 = vmul.f32 %v2703, 1.442695
      %v2711 = vpow.pop %v2710
      %v2712 = vmul.f32 %v2704, 1.442695
      %v2713 = vpow.pop %v2712
      %v2714 = vmul.f32 %v2705, 1.442695
      %v2715 = vpow.pop %v2714
      %v2716 = vmul.f32 %v2706, 1.442695
      %v2717 = vpow.pop %v2716
      %v2718 = vmul.f32 %v2707, 1.442695
      %v2719 = vpow.pop %v2718
      %v2720 = vadd.f32 %v2709, 1.0
      %v2721 = vadd.f32 %v2711, 1.0
      %v2722 = vadd.f32 %v2713, 1.0
      %v2723 = vadd.f32 %v2715, 1.0
      %v2724 = vadd.f32 %v2717, 1.0
      %v2725 = vadd.f32 %v2719, 1.0
      %v2726 = vrcp.pop %v2720
      %v2727 = vmul.f32 1.0, %v2726
      %v2728 = vrcp.pop %v2721
      %v2729 = vmul.f32 1.0, %v2728
      %v2730 = vrcp.pop %v2722
      %v2731 = vmul.f32 1.0, %v2730
      %v2732 = vrcp.pop %v2723
      %v2733 = vmul.f32 1.0, %v2732
      %v2734 = vrcp.pop %v2724
      %v2735 = vmul.f32 1.0, %v2734
      %v2736 = vrcp.pop %v2725
      %v2737 = vmul.f32 1.0, %v2736
      %v2738 = vtanh.pop %v2700
      %v2739 = vtanh.pop %v2701
      %v2740 = vmul.f32 %v2731, %v2513
      %v2741 = vmul.f32 %v2733, %v2514
      %v2742 = vmul.f32 %v2727, %v2738
      %v2743 = vmul.f32 %v2729, %v2739
      %v2744 = vadd.f32 %v2740, %v2742
      %v2745 = vadd.f32 %v2741, %v2743
      %v2746 = vtanh.pop %v2744
      %v2747 = vtanh.pop %v2745
      %v2748 = vmul.f32 %v2735, %v2746
      %v2749 = vmul.f32 %v2737, %v2747
      %s2750 = scalar_lea.vmem %s170, 160
      %2751 = vst.msk [vmem:[%s2750] sm:$0xff] %vm440, %v2748
      %2752 = vst.msk [vmem:[%s2750 + $0x8] sm:$0xff] %vm440, %v2749
      %2753 = vrot.lane.b32.xlu0 %v2748, 104
      %v2754 = vpop.permute.xlu0 %2753
      %v2755 = vsel %vm184, %v2754, %v2748
      %2756 = vrot.lane.b32.xlu0 %v2749, 104
      %v2757 = vpop.permute.xlu0 %2756
      %v2758 = vsel %vm184, %v2757, %v2749
      %2759 = vrot.lane.b32.xlu0 %v2755, 104
      %v2760 = vpop.permute.xlu0 %2759
      %2761 = vrot.lane.b32.xlu0 %v2758, 104
      %v2762 = vpop.permute.xlu0 %2761
      %v2763 = vsel %vm184, %v2760, %v2748
      %v2764 = vsel %vm184, %v2762, %v2749
      %v2765 = vmul.f32 %v2763, %v194
      %v2766 = vmul.f32 %v2760, %v194
      %v2767 = vmul.f32 %v2764, %v196
      %v2768 = vmul.f32 %v2762, %v196
      %v2769 = vmul.f32 %v2763, %v206
      %v2770 = vmul.f32 %v2764, %v208
      %2773 = vrot.lane.b32.xlu0 %v2748, 103
      %v2774 = vpop.permute.xlu0 %2773
      %2775 = vrot.lane.b32.xlu0 %v2749, 103
      %v2776 = vpop.permute.xlu0 %2775
      %2779 = vrot.lane.b32.xlu0 %v2769, 102
      %v2780 = vpop.permute.xlu0 %2779
      %2781 = vrot.lane.b32.xlu0 %v2770, 102
      %v2782 = vpop.permute.xlu0 %2781
      %s2783 = scalar_lea.vmem %s165, 704
      %v2784 = vld [vmem:[%s2783] sm:$0xff]
      %v2785 = vld [vmem:[%s2783 + $0x8] sm:$0xff]
      %v2786 = vld [vmem:[%s2783 + $0x10] sm:$0xff]
      %v2787 = vld [vmem:[%s2783 + $0x18] sm:$0xff]
      %v2788 = vld [vmem:[%s2783 + $0x20] sm:$0xff]
      %v2789 = vld [vmem:[%s2783 + $0x28] sm:$0xff]
      %v2790 = vld [vmem:[%s2783 + $0x30] sm:$0xff]
      %v2791 = vld [vmem:[%s2783 + $0x38] sm:$0xff]
      %2796 = vrot.lane.b32.xlu0 %v2765, 25
      %v2797 = vpop.permute.xlu0 %2796
      %2798 = vrot.lane.b32.xlu0 %v2766, 25
      %v2799 = vpop.permute.xlu0 %2798
      %2800 = vrot.lane.b32.xlu0 %v2767, 25
      %v2801 = vpop.permute.xlu0 %2800
      %2802 = vrot.lane.b32.xlu0 %v2768, 25
      %v2803 = vpop.permute.xlu0 %2802
      %2804 = vrot.lane.b32.xlu0 %v2774, 25
      %v2805 = vpop.permute.xlu0 %2804
      %2806 = vrot.lane.b32.xlu0 %v2776, 25
      %v2807 = vpop.permute.xlu0 %2806
      %2808 = vrot.lane.b32.xlu0 %v2780, 25
      %v2809 = vpop.permute.xlu0 %2808
      %2810 = vrot.lane.b32.xlu0 %v2782, 25
      %v2811 = vpop.permute.xlu0 %2810
      %v2812 = vsel %vm246, %v2797, %v2799
      %v2813 = vsel %vm246, %v2801, %v2803
      %2820 = vmatprep.subr.mxu0 0.0
      %2821 = vmatpush1.msra.mxu0 %v2812
      %2822 = vmatprep.subr.mxu0 0.0
      %2823 = vmatpush1.msra.mxu0 %v2813
      %2824 = vmatprep.subr.mxu0 0.0
      %2825 = vmatpush1.msra.mxu0 %v2805
      %2826 = vmatprep.subr.mxu0 0.0
      %2827 = vmatpush1.msra.mxu0 %v2807
      %2828 = vmatprep.subr.mxu0 0.0
      %2829 = vmatpush1.msra.mxu0 %v2809
      %2830 = vmatprep.subr.mxu0 0.0
      %2831 = vmatpush1.msra.mxu0 %v2811
      %2832 = vmatprep.subr.mxu0 0.0
      %2833 = vmatpush1.msra.mxu0 0.0
      %2834 = vmatprep.subr.mxu0 0.0
      %2835 = vmatpush1.msra.mxu0 0.0
      %2836 = vmatprep.subr.mxu0 0.0
      %2837 = vmatpush1.msra.mxu0 0.0
      %2838 = vmatprep.subr.mxu0 0.0
      %2839 = vmatpush1.msra.mxu0 0.0
      %2840 = vmatprep.subr.mxu0 0.0
      %2841 = vmatpush1.msra.mxu0 0.0
      %2842 = vmatprep.subr.mxu0 0.0
      %2843 = vmatpush1.msra.mxu0 0.0
      %2844 = vmatprep.subr.mxu0 0.0
      %2845 = vmatpush1.msra.mxu0 0.0
      %2846 = vmatprep.subr.mxu0 0.0
      %2847 = vmatpush1.msra.mxu0 0.0
      %2848 = vmatprep.subr.mxu0 0.0
      %2849 = vmatpush1.msra.mxu0 0.0
      %2850 = vmatprep.subr.mxu0 0.0
      %2851 = vmatpush1.msra.mxu0 0.0
      %2852 = vmatprep.subr.mxu0 0.0
      %2853 = vmatpush1.msra.mxu0 0.0
      %2854 = vmatprep.subr.mxu0 0.0
      %2855 = vmatpush1.msra.mxu0 0.0
      %2856 = vmatprep.subr.mxu0 0.0
      %2857 = vmatpush1.msra.mxu0 0.0
      %2858 = vmatprep.subr.mxu0 0.0
      %2859 = vmatpush1.msra.mxu0 0.0
      %2860 = vmatprep.subr.mxu0 0.0
      %2861 = vmatpush1.msra.mxu0 0.0
      %2862 = vmatprep.subr.mxu0 0.0
      %2863 = vmatpush1.msra.mxu0 0.0
      %2864 = vmatprep.subr.mxu0 0.0
      %2865 = vmatpush1.msra.mxu0 0.0
      %2866 = vmatprep.subr.mxu0 0.0
      %2867 = vmatpush1.msra.mxu0 0.0
      %2868 = vmatprep.subr.mxu0 0.0
      %2869 = vmatpush1.msra.mxu0 0.0
      %2870 = vmatprep.subr.mxu0 0.0
      %2871 = vmatpush1.msra.mxu0 0.0
      %2872 = vmatprep.subr.mxu0 0.0
      %2873 = vmatpush1.msra.mxu0 0.0
      %2874 = vmatprep.subr.mxu0 0.0
      %2875 = vmatpush1.msra.mxu0 0.0
      %2876 = vmatprep.subr.mxu0 0.0
      %2877 = vmatpush1.msra.mxu0 0.0
      %2878 = vmatprep.subr.mxu0 0.0
      %2879 = vmatpush1.msra.mxu0 0.0
      %2880 = vmatprep.subr.mxu0 0.0
      %2881 = vmatpush1.msra.mxu0 0.0
      %2882 = vmatprep.subr.mxu0 0.0
      %2883 = vmatpush1.msra.mxu0 0.0
      %2884 = vmatprep.mubr.f32.mxu0 0.0
      %2885 = vmatmul.mubr.f32.gmra.mrb[0].mxu0 %v256
      %v2886 = vpop.f32.mrb[0].mxu0
      %v2887 = vadd.f32 0.0, %v2886
      %v2888 = vpop.f32.mrb[0].mxu0
      %2889 = vmatprep.mubr.f32.mxu0 0.0
      %2890 = vmatmul.mubr.f32.gmra.mrb[0].mxu0 %v259
      %v2891 = vpop.f32.mrb[0].mxu0
      %v2892 = vadd.f32 0.0, %v2891
      %v2893 = vpop.f32.mrb[0].mxu0
      %2894 = vmatprep.mubr.f32.mxu0 0.0
      %2895 = vmatmul.mubr.f32.gmra.mrb[0].mxu0 %v262
      %v2896 = vpop.f32.mrb[0].mxu0
      %v2897 = vadd.f32 0.0, %v2896
      %v2898 = vpop.f32.mrb[0].mxu0
      %2899 = vmatprep.mubr.f32.mxu0 0.0
      %2900 = vmatmul.mubr.f32.gmra.mrb[0].mxu0 %v265
      %v2901 = vpop.f32.mrb[0].mxu0
      %v2902 = vadd.f32 0.0, %v2901
      %v2903 = vpop.f32.mrb[0].mxu0
      %2904 = vmatprep.mubr.f32.mxu0 0.0
      %2905 = vmatmul.mubr.f32.gmra.mrb[0].mxu0 %v268
      %v2906 = vpop.f32.mrb[0].mxu0
      %v2907 = vadd.f32 0.0, %v2906
      %v2908 = vpop.f32.mrb[0].mxu0
      %2909 = vmatprep.mubr.f32.mxu0 0.0
      %2910 = vmatmul.mubr.f32.gmra.mrb[0].mxu0 %v271
      %v2911 = vpop.f32.mrb[0].mxu0
      %v2912 = vadd.f32 0.0, %v2911
      %v2913 = vpop.f32.mrb[0].mxu0
      %2914 = vmatprep.mubr.f32.mxu0 0.0
      %2915 = vmatmul.mubr.f32.gmra.mrb[0].mxu0 %v274
      %v2916 = vpop.f32.mrb[0].mxu0
      %v2917 = vadd.f32 0.0, %v2916
      %v2918 = vpop.f32.mrb[0].mxu0
      %2919 = vmatprep.mubr.f32.mxu0 0.0
      %2920 = vmatmul.mubr.f32.gmra.mrb[0].mxu0 %v277
      %v2921 = vpop.f32.mrb[0].mxu0
      %v2922 = vadd.f32 0.0, %v2921
      %v2923 = vpop.f32.mrb[0].mxu0
      %2924 = vdwg.mxu0
      %v2925 = vadd.f32 %v2784, %v2887
      %v2926 = vadd.f32 %v2785, %v2892
      %v2927 = vadd.f32 %v2786, %v2897
      %v2928 = vadd.f32 %v2787, %v2902
      %v2929 = vadd.f32 %v2788, %v2907
      %v2930 = vadd.f32 %v2789, %v2912
      %v2931 = vadd.f32 %v2790, %v2917
      %v2932 = vadd.f32 %v2791, %v2922
      %v2933 = vxor.u32 %v2925, 2147483648
      %v2934 = vxor.u32 %v2926, 2147483648
      %v2935 = vxor.u32 %v2927, 2147483648
      %v2936 = vxor.u32 %v2928, 2147483648
      %v2937 = vxor.u32 %v2929, 2147483648
      %v2938 = vxor.u32 %v2930, 2147483648
      %v2939 = vmul.f32 %v2933, 1.442695
      %v2940 = vpow.pop %v2939
      %v2941 = vmul.f32 %v2934, 1.442695
      %v2942 = vpow.pop %v2941
      %v2943 = vmul.f32 %v2935, 1.442695
      %v2944 = vpow.pop %v2943
      %v2945 = vmul.f32 %v2936, 1.442695
      %v2946 = vpow.pop %v2945
      %v2947 = vmul.f32 %v2937, 1.442695
      %v2948 = vpow.pop %v2947
      %v2949 = vmul.f32 %v2938, 1.442695
      %v2950 = vpow.pop %v2949
      %v2951 = vadd.f32 %v2940, 1.0
      %v2952 = vadd.f32 %v2942, 1.0
      %v2953 = vadd.f32 %v2944, 1.0
      %v2954 = vadd.f32 %v2946, 1.0
      %v2955 = vadd.f32 %v2948, 1.0
      %v2956 = vadd.f32 %v2950, 1.0
      %v2957 = vrcp.pop %v2951
      %v2958 = vmul.f32 1.0, %v2957
      %v2959 = vrcp.pop %v2952
      %v2960 = vmul.f32 1.0, %v2959
      %v2961 = vrcp.pop %v2953
      %v2962 = vmul.f32 1.0, %v2961
      %v2963 = vrcp.pop %v2954
      %v2964 = vmul.f32 1.0, %v2963
      %v2965 = vrcp.pop %v2955
      %v2966 = vmul.f32 1.0, %v2965
      %v2967 = vrcp.pop %v2956
      %v2968 = vmul.f32 1.0, %v2967
      %v2969 = vtanh.pop %v2931
      %v2970 = vtanh.pop %v2932
      %v2971 = vmul.f32 %v2962, %v2744
      %v2972 = vmul.f32 %v2964, %v2745
      %v2973 = vmul.f32 %v2958, %v2969
      %v2974 = vmul.f32 %v2960, %v2970
      %v2975 = vadd.f32 %v2971, %v2973
      %v2976 = vadd.f32 %v2972, %v2974
      %v2977 = vtanh.pop %v2975
      %v2978 = vtanh.pop %v2976
      %v2979 = vmul.f32 %v2966, %v2977
      %v2980 = vmul.f32 %v2968, %v2978
      %s2981 = scalar_lea.vmem %s170, 176
      %2982 = vst.msk [vmem:[%s2981] sm:$0xff] %vm440, %v2979
      %2983 = vst.msk [vmem:[%s2981 + $0x8] sm:$0xff] %vm440, %v2980
      %p2984 = scmp.lt.s32.totalorder %s14, 1
      %s2985 = scalar_select %p2984, %s14, 1
      %s2986 = smul.addr %s2985, 24
      %s2987 = smul.addr %s2986, 8
      %s2988 = scalar_lea.vmem %s3, %s2987
      // Predicated region
      $region33: #{crop_convlstm_forward.2} parent=31 // pred_check
        %p2989 = pneg %p100
      $region34: #{crop_convlstm_forward.2} parent=31 // pred_check_branch
        %2991 = sbr.rel (%p2989) target = $region36
      $region35: #{crop_convlstm_forward.2} parent=31 // pred_region
        _
      $region36: #{crop_convlstm_forward.2} parent=31 // pred_fallthru
        _
    $region32: #{crop_convlstm_forward.2} parent=5 // pred_fallthru
      _
    %p2992 = scmp.le.s32.totalorder 2, %s9
    // Predicated region
    $region37: #{crop_convlstm_forward.2} parent=5 // pred_check
      %p2993 = pneg %p2992
    $region38: #{crop_convlstm_forward.2} parent=5 // pred_check_branch
      %2995 = sbr.rel (%p2993) target = $region40
    $region39: #{crop_convlstm_forward.2} parent=5 // pred_region
      %s2996 = ssub.s32 %s9, 2
      // Predicated region
      $region41: #{crop_convlstm_forward.2} parent=39 // pred_check
        %p2997 = pneg %p106
      $region42: #{crop_convlstm_forward.2} parent=39 // pred_check_branch
        %2999 = sbr.rel (%p2997) target = $region44
      $region43: #{crop_convlstm_forward.2} parent=39 // pred_region
        %p3000 = scmp.lt.s32.totalorder %s15, 1
        %s3001 = scalar_select %p3000, %s15, 1
        %s3002 = smul.addr %s3001, 24
        %s3003 = smul.addr %s3002, 8
        %s3004 = scalar_lea.vmem %s3, %s3003
      $region44: #{crop_convlstm_forward.2} parent=39 // pred_fallthru
        _
    $region40: #{crop_convlstm_forward.2} parent=5 // pred_fallthru
      _
  $region6: #{crop_convlstm_forward.2} parent=0 // loop_footer
    %s13 = sadd.s32 1, %s9
  $region7: #{crop_convlstm_forward.2} parent=0 // loop_footer_branch
    %8 = sbr.rel target = $region3
  $region8: #{crop_convlstm_forward.2} parent=0 // loop_exit
    _

// kernel: crop_convlstm_forward.3
$region0: #{crop_convlstm_forward.3}
  #allocation0 [shape = 'u32[]', space=smem, size = 0x4, offset = 0x4, fixed_abs, tag = 'smem constant byte address 0x4 - core index']
  #allocation1 [shape = 'u32[144,128]{1,0:T(1,128)}', space=vmem, size = 0x12000, scoped, tag = 'internal scratch']
  #allocation2 [shape = 'f32[4,192]{1,0:T(4,128)}', space=vmem, size = 0x1000, scoped, tag = 'scratch operand']
  %s0 = inlined_call_operand.vmem [shape: f32[4,9984], index: 0, kind: input, shape index: {}]
  %s1 = inlined_call_operand.vmem [shape: f32[9984,192], index: 1, kind: input, shape index: {}]
  %s2 = inlined_call_operand.vmem [shape: f32[1,192], index: 2, kind: input, shape index: {}]
  %s3 = inlined_call_operand.vmem [shape: f32[1,192], index: 3, kind: input, shape index: {}]
  %s4 = inlined_call_operand.vmem [shape: f32[192,12], index: 4, kind: input, shape index: {}]
  %s5 = inlined_call_operand.vmem [shape: f32[1,12], index: 5, kind: input, shape index: {}]
  %s6 = inlined_call_operand.vmem [shape: f32[1,12], index: 6, kind: input, shape index: {}]
  %s7 = inlined_call_operand.vmem [shape: f32[12,4], index: 7, kind: input, shape index: {}]
  %s8 = inlined_call_operand.vmem [shape: f32[1,4], index: 8, kind: input, shape index: {}]
  %s9 = inlined_call_operand.hbm [shape: f32[4,4], index: 9, kind: output, shape index: {}]
  %s10 = sld [smem:[#allocation0]]
  $region77: #{crop_convlstm_forward.3} parent=0
    _
  %s12 = ssub.s32 1, %s10
  %s13 = scalar_select 0, %s12, %s10
  $region1: #{crop_convlstm_forward.3} parent=0
    #allocation3 [shape = 'u8[2048]{0}', space=vmem, size = 0x800, scoped, tag = 'output window, operand 0, single buffered']
    #allocation4 [shape = 's32[2]{0}', space=sflag, size = 0x8, scoped, tag = 'scoped memory for crop_convlstm_forward.3']
    %14 = vsyncpa [#allocation4], 0
    loop: start=0, step=1, limit=8
    $region2: #{crop_convlstm_forward.3} parent=1 // loop_pre_header
      _
    $region3: #{crop_convlstm_forward.3} parent=1 // loop_header
      %s16 = sphi 0, %s20
      %p17 = scmp.ge.s32.totalorder %s16, 8
      %s26 = sphi 0, %s28
      %s29 = sphi 0, %s26
      %s30 = sphi 0, %s29
      %s46 = sphi 0, %s30
      %s52 = sphi 0, %s54
      %s55 = sphi 0, %s52
      %s56 = sphi 0, %s55
      %s72 = sphi 0, %s56
      %s76 = sphi 0, %s76
      %s78 = sphi 0, %s76
      %s79 = sphi 0, %s78
      %s93 = sphi 0, %s79
      %s97 = sphi 0, %s97
      %s99 = sphi 0, %s97
      %s100 = sphi 0, %s99
      %s114 = sphi 0, %s100
      %s118 = sphi 0, %s118
      %s120 = sphi 0, %s118
      %s121 = sphi 0, %s120
      %s135 = sphi 0, %s121
      %s139 = sphi 0, %s139
      %s141 = sphi 0, %s139
      %s142 = sphi 0, %s141
      %s156 = sphi 0, %s142
      %s160 = sphi 0, %s160
      %s162 = sphi 0, %s160
      %s163 = sphi 0, %s162
      %s177 = sphi 0, %s163
      %s181 = sphi 0, %s181
      %s183 = sphi 0, %s181
      %s184 = sphi 0, %s183
      %s198 = sphi 0, %s184
      %s202 = sphi 0, %s202
      %s204 = sphi 0, %s202
      %s205 = sphi 0, %s204
      %s219 = sphi 0, %s205
      %s223 = sphi 0, %s223
      %s225 = sphi 0, %s223
      %s226 = sphi 0, %s225
      %s240 = sphi 0, %s226
    $region4: #{crop_convlstm_forward.3} parent=1 // loop_header_branch
      %19 = sbr.rel (%p17) target = $region8
    $region5: #{crop_convlstm_forward.3} parent=1 // loop_body
      %s21 = ssub.s32 %s16, 1
      %s22 = ssub.s32 %s16, 2
      %s23 = sadd.s32 %s16, 1
      %s24 = ssub.s32 %s16, %s23
      %p25 = scmp.eq.s32.totalorder %s24, 0
      %s27 = sadd.s32 %s26, 1
      %s28 = scalar_select %p25, %s26, %s27
      %p31 = pneg %p25
      %p32 = scmp.eq.s32.totalorder %s16, 5
      %p33 = por %p31, %p32
      %p34 = scmp.ne.s32.totalorder %s26, %s29
      %p35 = scmp.eq.s32.totalorder %s16, 0
      %p36 = por %p34, %p35
      %p37 = scmp.ne.s32.totalorder %s26, %s29
      %p38 = scmp.eq.s32.totalorder %s21, 5
      %p39 = por %p37, %p38
      %p40 = scmp.ne.s32.totalorder %s29, %s30
      %p41 = scmp.eq.s32.totalorder %s21, 0
      %p42 = por %p40, %p41
      %p43 = scmp.ne.s32.totalorder %s29, %s30
      %p44 = scmp.eq.s32.totalorder %s22, 5
      %p45 = por %p43, %p44
      %p47 = scmp.ne.s32.totalorder %s30, %s46
      %p48 = scmp.eq.s32.totalorder %s22, 0
      %p49 = por %p47, %p48
      %s50 = ssub.s32 %s16, %s23
      %p51 = scmp.eq.s32.totalorder %s50, 0
      %s53 = sadd.s32 %s52, 1
      %s54 = scalar_select %p51, %s52, %s53
      %p57 = pneg %p51
      %p58 = scmp.eq.s32.totalorder %s16, 5
      %p59 = por %p57, %p58
      %p60 = scmp.ne.s32.totalorder %s52, %s55
      %p61 = scmp.eq.s32.totalorder %s16, 0
      %p62 = por %p60, %p61
      %p63 = scmp.ne.s32.totalorder %s52, %s55
      %p64 = scmp.eq.s32.totalorder %s21, 5
      %p65 = por %p63, %p64
      %p66 = scmp.ne.s32.totalorder %s55, %s56
      %p67 = scmp.eq.s32.totalorder %s21, 0
      %p68 = por %p66, %p67
      %p69 = scmp.ne.s32.totalorder %s55, %s56
      %p70 = scmp.eq.s32.totalorder %s22, 5
      %p71 = por %p69, %p70
      %p73 = scmp.ne.s32.totalorder %s56, %s72
      %p74 = scmp.eq.s32.totalorder %s22, 0
      %p75 = por %p73, %p74
      %s77 = sadd.s32 %s76, 1
      %p80 = scmp.eq.s32.totalorder %s16, 5
      %p81 = scmp.ne.s32.totalorder %s76, %s78
      %p82 = scmp.eq.s32.totalorder %s16, 0
      %p83 = por %p81, %p82
      %p84 = scmp.ne.s32.totalorder %s76, %s78
      %p85 = scmp.eq.s32.totalorder %s21, 5
      %p86 = por %p84, %p85
      %p87 = scmp.ne.s32.totalorder %s78, %s79
      %p88 = scmp.eq.s32.totalorder %s21, 0
      %p89 = por %p87, %p88
      %p90 = scmp.ne.s32.totalorder %s78, %s79
      %p91 = scmp.eq.s32.totalorder %s22, 5
      %p92 = por %p90, %p91
      %p94 = scmp.ne.s32.totalorder %s79, %s93
      %p95 = scmp.eq.s32.totalorder %s22, 0
      %p96 = por %p94, %p95
      %s98 = sadd.s32 %s97, 1
      %p101 = scmp.eq.s32.totalorder %s16, 5
      %p102 = scmp.ne.s32.totalorder %s97, %s99
      %p103 = scmp.eq.s32.totalorder %s16, 0
      %p104 = por %p102, %p103
      %p105 = scmp.ne.s32.totalorder %s97, %s99
      %p106 = scmp.eq.s32.totalorder %s21, 5
      %p107 = por %p105, %p106
      %p108 = scmp.ne.s32.totalorder %s99, %s100
      %p109 = scmp.eq.s32.totalorder %s21, 0
      %p110 = por %p108, %p109
      %p111 = scmp.ne.s32.totalorder %s99, %s100
      %p112 = scmp.eq.s32.totalorder %s22, 5
      %p113 = por %p111, %p112
      %p115 = scmp.ne.s32.totalorder %s100, %s114
      %p116 = scmp.eq.s32.totalorder %s22, 0
      %p117 = por %p115, %p116
      %s119 = sadd.s32 %s118, 1
      %p122 = scmp.eq.s32.totalorder %s16, 5
      %p123 = scmp.ne.s32.totalorder %s118, %s120
      %p124 = scmp.eq.s32.totalorder %s16, 0
      %p125 = por %p123, %p124
      %p126 = scmp.ne.s32.totalorder %s118, %s120
      %p127 = scmp.eq.s32.totalorder %s21, 5
      %p128 = por %p126, %p127
      %p129 = scmp.ne.s32.totalorder %s120, %s121
      %p130 = scmp.eq.s32.totalorder %s21, 0
      %p131 = por %p129, %p130
      %p132 = scmp.ne.s32.totalorder %s120, %s121
      %p133 = scmp.eq.s32.totalorder %s22, 5
      %p134 = por %p132, %p133
      %p136 = scmp.ne.s32.totalorder %s121, %s135
      %p137 = scmp.eq.s32.totalorder %s22, 0
      %p138 = por %p136, %p137
      %s140 = sadd.s32 %s139, 1
      %p143 = scmp.eq.s32.totalorder %s16, 5
      %p144 = scmp.ne.s32.totalorder %s139, %s141
      %p145 = scmp.eq.s32.totalorder %s16, 0
      %p146 = por %p144, %p145
      %p147 = scmp.ne.s32.totalorder %s139, %s141
      %p148 = scmp.eq.s32.totalorder %s21, 5
      %p149 = por %p147, %p148
      %p150 = scmp.ne.s32.totalorder %s141, %s142
      %p151 = scmp.eq.s32.totalorder %s21, 0
      %p152 = por %p150, %p151
      %p153 = scmp.ne.s32.totalorder %s141, %s142
      %p154 = scmp.eq.s32.totalorder %s22, 5
      %p155 = por %p153, %p154
      %p157 = scmp.ne.s32.totalorder %s142, %s156
      %p158 = scmp.eq.s32.totalorder %s22, 0
      %p159 = por %p157, %p158
      %s161 = sadd.s32 %s160, 1
      %p164 = scmp.eq.s32.totalorder %s16, 5
      %p165 = scmp.ne.s32.totalorder %s160, %s162
      %p166 = scmp.eq.s32.totalorder %s16, 0
      %p167 = por %p165, %p166
      %p168 = scmp.ne.s32.totalorder %s160, %s162
      %p169 = scmp.eq.s32.totalorder %s21, 5
      %p170 = por %p168, %p169
      %p171 = scmp.ne.s32.totalorder %s162, %s163
      %p172 = scmp.eq.s32.totalorder %s21, 0
      %p173 = por %p171, %p172
      %p174 = scmp.ne.s32.totalorder %s162, %s163
      %p175 = scmp.eq.s32.totalorder %s22, 5
      %p176 = por %p174, %p175
      %p178 = scmp.ne.s32.totalorder %s163, %s177
      %p179 = scmp.eq.s32.totalorder %s22, 0
      %p180 = por %p178, %p179
      %s182 = sadd.s32 %s181, 1
      %p185 = scmp.eq.s32.totalorder %s16, 5
      %p186 = scmp.ne.s32.totalorder %s181, %s183
      %p187 = scmp.eq.s32.totalorder %s16, 0
      %p188 = por %p186, %p187
      %p189 = scmp.ne.s32.totalorder %s181, %s183
      %p190 = scmp.eq.s32.totalorder %s21, 5
      %p191 = por %p189, %p190
      %p192 = scmp.ne.s32.totalorder %s183, %s184
      %p193 = scmp.eq.s32.totalorder %s21, 0
      %p194 = por %p192, %p193
      %p195 = scmp.ne.s32.totalorder %s183, %s184
      %p196 = scmp.eq.s32.totalorder %s22, 5
      %p197 = por %p195, %p196
      %p199 = scmp.ne.s32.totalorder %s184, %s198
      %p200 = scmp.eq.s32.totalorder %s22, 0
      %p201 = por %p199, %p200
      %s203 = sadd.s32 %s202, 1
      %p206 = scmp.eq.s32.totalorder %s16, 5
      %p207 = scmp.ne.s32.totalorder %s202, %s204
      %p208 = scmp.eq.s32.totalorder %s16, 0
      %p209 = por %p207, %p208
      %p210 = scmp.ne.s32.totalorder %s202, %s204
      %p211 = scmp.eq.s32.totalorder %s21, 5
      %p212 = por %p210, %p211
      %p213 = scmp.ne.s32.totalorder %s204, %s205
      %p214 = scmp.eq.s32.totalorder %s21, 0
      %p215 = por %p213, %p214
      %p216 = scmp.ne.s32.totalorder %s204, %s205
      %p217 = scmp.eq.s32.totalorder %s22, 5
      %p218 = por %p216, %p217
      %p220 = scmp.ne.s32.totalorder %s205, %s219
      %p221 = scmp.eq.s32.totalorder %s22, 0
      %p222 = por %p220, %p221
      %s224 = sadd.s32 %s223, 1
      %p227 = scmp.eq.s32.totalorder %s16, 5
      %p228 = scmp.ne.s32.totalorder %s223, %s225
      %p229 = scmp.eq.s32.totalorder %s16, 0
      %p230 = por %p228, %p229
      %p231 = scmp.ne.s32.totalorder %s223, %s225
      %p232 = scmp.eq.s32.totalorder %s21, 5
      %p233 = por %p231, %p232
      %p234 = scmp.ne.s32.totalorder %s225, %s226
      %p235 = scmp.eq.s32.totalorder %s21, 0
      %p236 = por %p234, %p235
      %p237 = scmp.ne.s32.totalorder %s225, %s226
      %p238 = scmp.eq.s32.totalorder %s22, 5
      %p239 = por %p237, %p238
      %p241 = scmp.ne.s32.totalorder %s226, %s240
      %p242 = scmp.eq.s32.totalorder %s22, 0
      %p243 = por %p241, %p242
      %p244 = scmp.le.s32.totalorder 1, %s16
      %p245 = scmp.lt.s32.totalorder %s16, 7
      %p246 = pnand %p244, %p245
      %p247 = pneg %p246
      // Predicated region
      $region9: #{crop_convlstm_forward.3} parent=5 // pred_check
        _
      $region10: #{crop_convlstm_forward.3} parent=5 // pred_check_branch
        %249 = sbr.rel (%p246) target = $region12
      $region11: #{crop_convlstm_forward.3} parent=5 // pred_region
        %s250 = ssub.s32 %s16, 1
        // Predicated region
        $region13: #{crop_convlstm_forward.3} parent=11 // pred_check
          %p251 = pneg %p89
        $region14: #{crop_convlstm_forward.3} parent=11 // pred_check_branch
          %253 = sbr.rel (%p251) target = $region16
        $region15: #{crop_convlstm_forward.3} parent=11 // pred_region
          _
        $region16: #{crop_convlstm_forward.3} parent=11 // pred_fallthru
          _
        // Predicated region
        $region17: #{crop_convlstm_forward.3} parent=11 // pred_check
          %p254 = pneg %p110
        $region18: #{crop_convlstm_forward.3} parent=11 // pred_check_branch
          %256 = sbr.rel (%p254) target = $region20
        $region19: #{crop_convlstm_forward.3} parent=11 // pred_region
          _
        $region20: #{crop_convlstm_forward.3} parent=11 // pred_fallthru
          _
        // Predicated region
        $region21: #{crop_convlstm_forward.3} parent=11 // pred_check
          %p257 = pneg %p131
        $region22: #{crop_convlstm_forward.3} parent=11 // pred_check_branch
          %259 = sbr.rel (%p257) target = $region24
        $region23: #{crop_convlstm_forward.3} parent=11 // pred_region
          _
        $region24: #{crop_convlstm_forward.3} parent=11 // pred_fallthru
          _
        // Predicated region
        $region25: #{crop_convlstm_forward.3} parent=11 // pred_check
          %p260 = pneg %p152
        $region26: #{crop_convlstm_forward.3} parent=11 // pred_check_branch
          %262 = sbr.rel (%p260) target = $region28
        $region27: #{crop_convlstm_forward.3} parent=11 // pred_region
          _
        $region28: #{crop_convlstm_forward.3} parent=11 // pred_fallthru
          _
        // Predicated region
        $region29: #{crop_convlstm_forward.3} parent=11 // pred_check
          %p263 = pneg %p173
        $region30: #{crop_convlstm_forward.3} parent=11 // pred_check_branch
          %265 = sbr.rel (%p263) target = $region32
        $region31: #{crop_convlstm_forward.3} parent=11 // pred_region
          _
        $region32: #{crop_convlstm_forward.3} parent=11 // pred_fallthru
          _
        // Predicated region
        $region33: #{crop_convlstm_forward.3} parent=11 // pred_check
          %p266 = pneg %p194
        $region34: #{crop_convlstm_forward.3} parent=11 // pred_check_branch
          %268 = sbr.rel (%p266) target = $region36
        $region35: #{crop_convlstm_forward.3} parent=11 // pred_region
          _
        $region36: #{crop_convlstm_forward.3} parent=11 // pred_fallthru
          _
        // Predicated region
        $region37: #{crop_convlstm_forward.3} parent=11 // pred_check
          %p269 = pneg %p215
        $region38: #{crop_convlstm_forward.3} parent=11 // pred_check_branch
          %271 = sbr.rel (%p269) target = $region40
        $region39: #{crop_convlstm_forward.3} parent=11 // pred_region
          _
        $region40: #{crop_convlstm_forward.3} parent=11 // pred_fallthru
          _
      $region12: #{crop_convlstm_forward.3} parent=5 // pred_fallthru
        _
      %p272 = scmp.lt.s32.totalorder %s16, 6
      // Predicated region
      $region41: #{crop_convlstm_forward.3} parent=5 // pred_check
        %p273 = pneg %p272
      $region42: #{crop_convlstm_forward.3} parent=5 // pred_check_branch
        %275 = sbr.rel (%p273) target = $region44
      $region43: #{crop_convlstm_forward.3} parent=5 // pred_region
        // Predicated region
        $region45: #{crop_convlstm_forward.3} parent=43 // pred_check
          %p276 = pneg %p36
        $region46: #{crop_convlstm_forward.3} parent=43 // pred_check_branch
          %278 = sbr.rel (%p276) target = $region48
        $region47: #{crop_convlstm_forward.3} parent=43 // pred_region
          %s279 = smul.u32 13, %s16
          %p280 = scmp.lt.s32.totalorder %s279, 77
          %s281 = scalar_select %p280, %s279, 77
          %s282 = smul.addr %s281, 4
          %s283 = scalar_lea.vmem %s0, %s282
          %s284 = smul.u32 13, %s16
        $region48: #{crop_convlstm_forward.3} parent=43 // pred_fallthru
          _
        // Predicated region
        $region49: #{crop_convlstm_forward.3} parent=43 // pred_check
          %p285 = pneg %p62
        $region50: #{crop_convlstm_forward.3} parent=43 // pred_check_branch
          %287 = sbr.rel (%p285) target = $region52
        $region51: #{crop_convlstm_forward.3} parent=43 // pred_region
          %s288 = smul.u32 208, %s16
          %p289 = scmp.lt.s32.totalorder %s288, 1247
          %s290 = scalar_select %p289, %s288, 1247
          %s291 = smul.addr %s290, 2
          %s292 = smul.addr %s291, 8
          %s293 = scalar_lea.vmem %s1, %s292
          %s294 = smul.u32 208, %s16
        $region52: #{crop_convlstm_forward.3} parent=43 // pred_fallthru
          _
      $region44: #{crop_convlstm_forward.3} parent=5 // pred_fallthru
        _
      %p295 = scmp.le.s32.totalorder 1, %s16
      %p296 = scmp.lt.s32.totalorder %s16, 7
      %p297 = pnand %p295, %p296
      %p298 = pneg %p297
      // Predicated region
      $region53: #{crop_convlstm_forward.3} parent=5 // pred_check
        _
      $region54: #{crop_convlstm_forward.3} parent=5 // pred_check_branch
        %300 = sbr.rel (%p297) target = $region56
      $region55: #{crop_convlstm_forward.3} parent=5 // pred_region
        %s301 = ssub.s32 %s16, 1
        %s302 = smul.u32 13, %s21
        %p303 = scmp.lt.s32.totalorder %s302, 77
        %s304 = scalar_select %p303, %s302, 77
        %s305 = smul.addr %s304, 4
        %s306 = scalar_lea.vmem %s0, %s305
        %p307 = pneg %p42
        %p308 = pneg %p39
        %s309 = smul.u32 208, %s21
        %p310 = scmp.lt.s32.totalorder %s309, 1247
        %s311 = scalar_select %p310, %s309, 1247
        %s312 = smul.addr %s311, 2
        %s313 = smul.addr %s312, 8
        %s314 = scalar_lea.vmem %s1, %s313
        %p315 = pneg %p68
        %p316 = pneg %p65
        %p317 = pneg %p89
        %p318 = pneg %p86
        %p319 = pneg %p110
        %p320 = pneg %p107
        %p321 = pneg %p131
        %p322 = pneg %p128
        %p323 = pneg %p152
        %p324 = pneg %p149
        %p325 = pneg %p173
        %p326 = pneg %p170
        %p327 = pneg %p194
        %p328 = pneg %p191
        %p329 = pneg %p215
        %p330 = pneg %p212
        %p331 = pneg %p236
        %p332 = pneg %p233
        %s333 = smul.u32 13, %s21
        %p334 = scmp.lt.s32.totalorder %s333, 77
        %s335 = scalar_select %p334, %s333, 77
        %s336 = smul.addr %s335, 4
        %s337 = scalar_lea.vmem %s0, %s336
        %s338 = smul.u32 13, %s21
        %s339 = smul.u32 208, %s21
        %p340 = scmp.lt.s32.totalorder %s339, 1247
        %s341 = scalar_select %p340, %s339, 1247
        %s342 = smul.addr %s341, 2
        %s343 = smul.addr %s342, 8
        %s344 = scalar_lea.vmem %s1, %s343
        %s345 = smul.u32 208, %s21
        %p346 = scmp.eq.s32.totalorder %s21, 0
        // Predicated region
        $region57: #{crop_convlstm_forward.3} parent=55 // pred_check
          %p347 = pneg %p346
        $region58: #{crop_convlstm_forward.3} parent=55 // pred_check_branch
          %349 = sbr.rel (%p347) target = $region60
        $region59: #{crop_convlstm_forward.3} parent=55 // pred_region
          %vm350 = vcmask 1043456
          %vm351 = vcmask 523268
          %vm352 = vmor %vm351, %vm350
          %353 = vst.msk [vmem:[#allocation2] sm:$0xff] %vm352, 0.0
        $region60: #{crop_convlstm_forward.3} parent=55 // pred_fallthru
          _
        %v354 = vld [vmem:[#allocation2] sm:$0xff]
        %v355 = vld [vmem:[%s337] sm:$0xff]
        %v356 = vld [vmem:[%s337 + $0x8] sm:$0xff]
        %v357 = vld [vmem:[%s337 + $0x10] sm:$0xff]
        %v358 = vld [vmem:[%s337 + $0x18] sm:$0xff]
        %v359 = vld [vmem:[%s337 + $0x20] sm:$0xff]
        %v360 = vld [vmem:[%s337 + $0x28] sm:$0xff]
        %v361 = vld [vmem:[%s337 + $0x30] sm:$0xf]
        %v362 = vld [vmem:[%s344] sm:$0xff]
        %v363 = vld [vmem:[%s344 + $0x8] sm:$0xff]
        %v364 = vld [vmem:[%s344 + $0x10] sm:$0xff]
        %v365 = vld [vmem:[%s344 + $0x18] sm:$0xff]
        %v366 = vld [vmem:[%s344 + $0x20] sm:$0xff]
        %v367 = vld [vmem:[%s344 + $0x28] sm:$0xff]
        %v368 = vld [vmem:[%s344 + $0x30] sm:$0xff]
        %v369 = vld [vmem:[%s344 + $0x38] sm:$0xff]
        %v370 = vld [vmem:[%s344 + $0x40] sm:$0xff]
        %v371 = vld [vmem:[%s344 + $0x48] sm:$0xff]
        %v372 = vld [vmem:[%s344 + $0x50] sm:$0xff]
        %v373 = vld [vmem:[%s344 + $0x58] sm:$0xff]
        %v374 = vld [vmem:[%s344 + $0x60] sm:$0xff]
        %v375 = vld [vmem:[%s344 + $0x68] sm:$0xff]
        %v376 = vld [vmem:[%s344 + $0x70] sm:$0xff]
        %v377 = vld [vmem:[%s344 + $0x78] sm:$0xff]
        %v378 = vld [vmem:[%s344 + $0x80] sm:$0xff]
        %v379 = vld [vmem:[%s344 + $0x88] sm:$0xff]
        %v380 = vld [vmem:[%s344 + $0x90] sm:$0xff]
        %v381 = vld [vmem:[%s344 + $0x98] sm:$0xff]
        %v382 = vld [vmem:[%s344 + $0xa0] sm:$0xff]
        %v383 = vld [vmem:[%s344 + $0xa8] sm:$0xff]
        %v384 = vld [vmem:[%s344 + $0xb0] sm:$0xff]
        %v385 = vld [vmem:[%s344 + $0xb8] sm:$0xff]
        %v386 = vld [vmem:[%s344 + $0xc0] sm:$0xff]
        %v387 = vld [vmem:[%s344 + $0xc8] sm:$0xff]
        %v388 = vld [vmem:[%s344 + $0xd0] sm:$0xff]
        %v389 = vld [vmem:[%s344 + $0xd8] sm:$0xff]
        %v390 = vld [vmem:[%s344 + $0xe0] sm:$0xff]
        %v391 = vld [vmem:[%s344 + $0xe8] sm:$0xff]
        %v392 = vld [vmem:[%s344 + $0xf0] sm:$0xff]
        %v393 = vld [vmem:[%s344 + $0xf8] sm:$0xff]
        %v394 = vld [vmem:[%s344 + $0x100] sm:$0xff]
        %v395 = vld [vmem:[%s344 + $0x108] sm:$0xff]
        %v396 = vld [vmem:[%s344 + $0x110] sm:$0xff]
        %v397 = vld [vmem:[%s344 + $0x118] sm:$0xff]
        %v398 = vld [vmem:[%s344 + $0x120] sm:$0xff]
        %v399 = vld [vmem:[%s344 + $0x128] sm:$0xff]
        %v400 = vld [vmem:[%s344 + $0x130] sm:$0xff]
        %v401 = vld [vmem:[%s344 + $0x138] sm:$0xff]
        %v402 = vld [vmem:[%s344 + $0x140] sm:$0xff]
        %v403 = vld [vmem:[%s344 + $0x148] sm:$0xff]
        %v404 = vld [vmem:[%s344 + $0x150] sm:$0xff]
        %v405 = vld [vmem:[%s344 + $0x158] sm:$0xff]
        %v406 = vld [vmem:[%s344 + $0x160] sm:$0xff]
        %v407 = vld [vmem:[%s344 + $0x168] sm:$0xff]
        %v408 = vld [vmem:[%s344 + $0x170] sm:$0xff]
        %v409 = vld [vmem:[%s344 + $0x178] sm:$0xff]
        %v410 = vld [vmem:[%s344 + $0x180] sm:$0xff]
        %v411 = vld [vmem:[%s344 + $0x188] sm:$0xff]
        %v412 = vld [vmem:[%s344 + $0x190] sm:$0xff]
        %v413 = vld [vmem:[%s344 + $0x198] sm:$0xff]
        %v414 = vld [vmem:[%s344 + $0x1a0] sm:$0xff]
        %v415 = vld [vmem:[%s344 + $0x1a8] sm:$0xff]
        %v416 = vld [vmem:[%s344 + $0x1b0] sm:$0xff]
        %v417 = vld [vmem:[%s344 + $0x1b8] sm:$0xff]
        %v418 = vld [vmem:[%s344 + $0x1c0] sm:$0xff]
        %v419 = vld [vmem:[%s344 + $0x1c8] sm:$0xff]
        %v420 = vld [vmem:[%s344 + $0x1d0] sm:$0xff]
        %v421 = vld [vmem:[%s344 + $0x1d8] sm:$0xff]
        %v422 = vld [vmem:[%s344 + $0x1e0] sm:$0xff]
        %v423 = vld [vmem:[%s344 + $0x1e8] sm:$0xff]
        %v424 = vld [vmem:[%s344 + $0x1f0] sm:$0xff]
        %v425 = vld [vmem:[%s344 + $0x1f8] sm:$0xff]
        %v426 = vld [vmem:[%s344 + $0x200] sm:$0xff]
        %v427 = vld [vmem:[%s344 + $0x208] sm:$0xff]
        %v428 = vld [vmem:[%s344 + $0x210] sm:$0xff]
        %v429 = vld [vmem:[%s344 + $0x218] sm:$0xff]
        %v430 = vld [vmem:[%s344 + $0x220] sm:$0xff]
        %v431 = vld [vmem:[%s344 + $0x228] sm:$0xff]
        %v432 = vld [vmem:[%s344 + $0x230] sm:$0xff]
        %v433 = vld [vmem:[%s344 + $0x238] sm:$0xff]
        %v434 = vld [vmem:[%s344 + $0x240] sm:$0xff]
        %v435 = vld [vmem:[%s344 + $0x248] sm:$0xff]
        %v436 = vld [vmem:[%s344 + $0x250] sm:$0xff]
        %v437 = vld [vmem:[%s344 + $0x258] sm:$0xff]
        %v438 = vld [vmem:[%s344 + $0x260] sm:$0xff]
        %v439 = vld [vmem:[%s344 + $0x268] sm:$0xff]
        %v440 = vld [vmem:[%s344 + $0x270] sm:$0xff]
        %v441 = vld [vmem:[%s344 + $0x278] sm:$0xff]
        %v442 = vld [vmem:[%s344 + $0x280] sm:$0xff]
        %v443 = vld [vmem:[%s344 + $0x288] sm:$0xff]
        %v444 = vld [vmem:[%s344 + $0x290] sm:$0xff]
        %v445 = vld [vmem:[%s344 + $0x298] sm:$0xff]
        %v446 = vld [vmem:[%s344 + $0x2a0] sm:$0xff]
        %v447 = vld [vmem:[%s344 + $0x2a8] sm:$0xff]
        %v448 = vld [vmem:[%s344 + $0x2b0] sm:$0xff]
        %v449 = vld [vmem:[%s344 + $0x2b8] sm:$0xff]
        %v450 = vld [vmem:[%s344 + $0x2c0] sm:$0xff]
        %v451 = vld [vmem:[%s344 + $0x2c8] sm:$0xff]
        %v452 = vld [vmem:[%s344 + $0x2d0] sm:$0xff]
        %v453 = vld [vmem:[%s344 + $0x2d8] sm:$0xff]
        %v454 = vld [vmem:[%s344 + $0x2e0] sm:$0xff]
        %v455 = vld [vmem:[%s344 + $0x2e8] sm:$0xff]
        %v456 = vld [vmem:[%s344 + $0x2f0] sm:$0xff]
        %v457 = vld [vmem:[%s344 + $0x2f8] sm:$0xff]
        %v458 = vld [vmem:[%s344 + $0x300] sm:$0xff]
        %v459 = vld [vmem:[%s344 + $0x308] sm:$0xff]
        %v460 = vld [vmem:[%s344 + $0x310] sm:$0xff]
        %v461 = vld [vmem:[%s344 + $0x318] sm:$0xff]
        %v462 = vld [vmem:[%s344 + $0x320] sm:$0xff]
        %v463 = vld [vmem:[%s344 + $0x328] sm:$0xff]
        %v464 = vld [vmem:[%s344 + $0x330] sm:$0xff]
        %v465 = vld [vmem:[%s344 + $0x338] sm:$0xff]
        %v466 = vld [vmem:[%s344 + $0x340] sm:$0xff]
        %v467 = vld [vmem:[%s344 + $0x348] sm:$0xff]
        %v468 = vld [vmem:[%s344 + $0x350] sm:$0xff]
        %v469 = vld [vmem:[%s344 + $0x358] sm:$0xff]
        %v470 = vld [vmem:[%s344 + $0x360] sm:$0xff]
        %v471 = vld [vmem:[%s344 + $0x368] sm:$0xff]
        %v472 = vld [vmem:[%s344 + $0x370] sm:$0xff]
        %v473 = vld [vmem:[%s344 + $0x378] sm:$0xff]
        %v474 = vld [vmem:[%s344 + $0x380] sm:$0xff]
        %v475 = vld [vmem:[%s344 + $0x388] sm:$0xff]
        %v476 = vld [vmem:[%s344 + $0x390] sm:$0xff]
        %v477 = vld [vmem:[%s344 + $0x398] sm:$0xff]
        %v478 = vld [vmem:[%s344 + $0x3a0] sm:$0xff]
        %v479 = vld [vmem:[%s344 + $0x3a8] sm:$0xff]
        %v480 = vld [vmem:[%s344 + $0x3b0] sm:$0xff]
        %v481 = vld [vmem:[%s344 + $0x3b8] sm:$0xff]
        %v482 = vld [vmem:[%s344 + $0x3c0] sm:$0xff]
        %v483 = vld [vmem:[%s344 + $0x3c8] sm:$0xff]
        %v484 = vld [vmem:[%s344 + $0x3d0] sm:$0xff]
        %v485 = vld [vmem:[%s344 + $0x3d8] sm:$0xff]
        %v486 = vld [vmem:[%s344 + $0x3e0] sm:$0xff]
        %v487 = vld [vmem:[%s344 + $0x3e8] sm:$0xff]
        %v488 = vld [vmem:[%s344 + $0x3f0] sm:$0xff]
        %v489 = vld [vmem:[%s344 + $0x3f8] sm:$0xff]
        %v490 = vld [vmem:[%s344 + $0x400] sm:$0xff]
        %v491 = vld [vmem:[%s344 + $0x408] sm:$0xff]
        %v492 = vld [vmem:[%s344 + $0x410] sm:$0xff]
        %v493 = vld [vmem:[%s344 + $0x418] sm:$0xff]
        %v494 = vld [vmem:[%s344 + $0x420] sm:$0xff]
        %v495 = vld [vmem:[%s344 + $0x428] sm:$0xff]
        %v496 = vld [vmem:[%s344 + $0x430] sm:$0xff]
        %v497 = vld [vmem:[%s344 + $0x438] sm:$0xff]
        %v498 = vld [vmem:[%s344 + $0x440] sm:$0xff]
        %v499 = vld [vmem:[%s344 + $0x448] sm:$0xff]
        %v500 = vld [vmem:[%s344 + $0x450] sm:$0xff]
        %v501 = vld [vmem:[%s344 + $0x458] sm:$0xff]
        %v502 = vld [vmem:[%s344 + $0x460] sm:$0xff]
        %v503 = vld [vmem:[%s344 + $0x468] sm:$0xff]
        %v504 = vld [vmem:[%s344 + $0x470] sm:$0xff]
        %v505 = vld [vmem:[%s344 + $0x478] sm:$0xff]
        %v506 = vld [vmem:[%s344 + $0x480] sm:$0xff]
        %v507 = vld [vmem:[%s344 + $0x488] sm:$0xff]
        %v508 = vld [vmem:[%s344 + $0x490] sm:$0xff]
        %v509 = vld [vmem:[%s344 + $0x498] sm:$0xff]
        %v510 = vld [vmem:[%s344 + $0x4a0] sm:$0xff]
        %v511 = vld [vmem:[%s344 + $0x4a8] sm:$0xff]
        %v512 = vld [vmem:[%s344 + $0x4b0] sm:$0xff]
        %v513 = vld [vmem:[%s344 + $0x4b8] sm:$0xff]
        %v514 = vld [vmem:[%s344 + $0x4c0] sm:$0xff]
        %v515 = vld [vmem:[%s344 + $0x4c8] sm:$0xff]
        %v516 = vld [vmem:[%s344 + $0x4d0] sm:$0xff]
        %v517 = vld [vmem:[%s344 + $0x4d8] sm:$0xff]
        %v518 = vld [vmem:[%s344 + $0x4e0] sm:$0xff]
        %v519 = vld [vmem:[%s344 + $0x4e8] sm:$0xff]
        %v520 = vld [vmem:[%s344 + $0x4f0] sm:$0xff]
        %v521 = vld [vmem:[%s344 + $0x4f8] sm:$0xff]
        %v522 = vld [vmem:[%s344 + $0x500] sm:$0xff]
        %v523 = vld [vmem:[%s344 + $0x508] sm:$0xff]
        %v524 = vld [vmem:[%s344 + $0x510] sm:$0xff]
        %v525 = vld [vmem:[%s344 + $0x518] sm:$0xff]
        %v526 = vld [vmem:[%s344 + $0x520] sm:$0xff]
        %v527 = vld [vmem:[%s344 + $0x528] sm:$0xff]
        %v528 = vld [vmem:[%s344 + $0x530] sm:$0xff]
        %v529 = vld [vmem:[%s344 + $0x538] sm:$0xff]
        %v530 = vld [vmem:[%s344 + $0x540] sm:$0xff]
        %v531 = vld [vmem:[%s344 + $0x548] sm:$0xff]
        %v532 = vld [vmem:[%s344 + $0x550] sm:$0xff]
        %v533 = vld [vmem:[%s344 + $0x558] sm:$0xff]
        %v534 = vld [vmem:[%s344 + $0x560] sm:$0xff]
        %v535 = vld [vmem:[%s344 + $0x568] sm:$0xff]
        %v536 = vld [vmem:[%s344 + $0x570] sm:$0xff]
        %v537 = vld [vmem:[%s344 + $0x578] sm:$0xff]
        %v538 = vld [vmem:[%s344 + $0x580] sm:$0xff]
        %v539 = vld [vmem:[%s344 + $0x588] sm:$0xff]
        %v540 = vld [vmem:[%s344 + $0x590] sm:$0xff]
        %v541 = vld [vmem:[%s344 + $0x598] sm:$0xff]
        %v542 = vld [vmem:[%s344 + $0x5a0] sm:$0xff]
        %v543 = vld [vmem:[%s344 + $0x5a8] sm:$0xff]
        %v544 = vld [vmem:[%s344 + $0x5b0] sm:$0xff]
        %v545 = vld [vmem:[%s344 + $0x5b8] sm:$0xff]
        %v546 = vld [vmem:[%s344 + $0x5c0] sm:$0xff]
        %v547 = vld [vmem:[%s344 + $0x5c8] sm:$0xff]
        %v548 = vld [vmem:[%s344 + $0x5d0] sm:$0xff]
        %v549 = vld [vmem:[%s344 + $0x5d8] sm:$0xff]
        %v550 = vld [vmem:[%s344 + $0x5e0] sm:$0xff]
        %v551 = vld [vmem:[%s344 + $0x5e8] sm:$0xff]
        %v552 = vld [vmem:[%s344 + $0x5f0] sm:$0xff]
        %v553 = vld [vmem:[%s344 + $0x5f8] sm:$0xff]
        %v554 = vld [vmem:[%s344 + $0x600] sm:$0xff]
        %v555 = vld [vmem:[%s344 + $0x608] sm:$0xff]
        %v556 = vld [vmem:[%s344 + $0x610] sm:$0xff]
        %v557 = vld [vmem:[%s344 + $0x618] sm:$0xff]
        %v558 = vld [vmem:[%s344 + $0x620] sm:$0xff]
        %v559 = vld [vmem:[%s344 + $0x628] sm:$0xff]
        %v560 = vld [vmem:[%s344 + $0x630] sm:$0xff]
        %v561 = vld [vmem:[%s344 + $0x638] sm:$0xff]
        %v562 = vld [vmem:[%s344 + $0x640] sm:$0xff]
        %v563 = vld [vmem:[%s344 + $0x648] sm:$0xff]
        %v564 = vld [vmem:[%s344 + $0x650] sm:$0xff]
        %v565 = vld [vmem:[%s344 + $0x658] sm:$0xff]
        %v566 = vld [vmem:[%s344 + $0x660] sm:$0xff]
        %v567 = vld [vmem:[%s344 + $0x668] sm:$0xff]
        %v568 = vld [vmem:[%s344 + $0x670] sm:$0xff]
        %v569 = vld [vmem:[%s344 + $0x678] sm:$0xff]
        %v570 = vld [vmem:[%s344 + $0x680] sm:$0xff]
        %v571 = vld [vmem:[%s344 + $0x688] sm:$0xff]
        %v572 = vld [vmem:[%s344 + $0x690] sm:$0xff]
        %v573 = vld [vmem:[%s344 + $0x698] sm:$0xff]
        %v574 = vld [vmem:[%s344 + $0x6a0] sm:$0xff]
        %v575 = vld [vmem:[%s344 + $0x6a8] sm:$0xff]
        %v576 = vld [vmem:[%s344 + $0x6b0] sm:$0xff]
        %v577 = vld [vmem:[%s344 + $0x6b8] sm:$0xff]
        %v578 = vld [vmem:[%s344 + $0x6c0] sm:$0xff]
        %v579 = vld [vmem:[%s344 + $0x6c8] sm:$0xff]
        %v580 = vld [vmem:[%s344 + $0x6d0] sm:$0xff]
        %v581 = vld [vmem:[%s344 + $0x6d8] sm:$0xff]
        %v582 = vld [vmem:[%s344 + $0x6e0] sm:$0xff]
        %v583 = vld [vmem:[%s344 + $0x6e8] sm:$0xff]
        %v584 = vld [vmem:[%s344 + $0x6f0] sm:$0xff]
        %v585 = vld [vmem:[%s344 + $0x6f8] sm:$0xff]
        %v586 = vld [vmem:[%s344 + $0x700] sm:$0xff]
        %v587 = vld [vmem:[%s344 + $0x708] sm:$0xff]
        %v588 = vld [vmem:[%s344 + $0x710] sm:$0xff]
        %v589 = vld [vmem:[%s344 + $0x718] sm:$0xff]
        %v590 = vld [vmem:[%s344 + $0x720] sm:$0xff]
        %v591 = vld [vmem:[%s344 + $0x728] sm:$0xff]
        %v592 = vld [vmem:[%s344 + $0x730] sm:$0xff]
        %v593 = vld [vmem:[%s344 + $0x738] sm:$0xff]
        %v594 = vld [vmem:[%s344 + $0x740] sm:$0xff]
        %v595 = vld [vmem:[%s344 + $0x748] sm:$0xff]
        %v596 = vld [vmem:[%s344 + $0x750] sm:$0xff]
        %v597 = vld [vmem:[%s344 + $0x758] sm:$0xff]
        %v598 = vld [vmem:[%s344 + $0x760] sm:$0xff]
        %v599 = vld [vmem:[%s344 + $0x768] sm:$0xff]
        %v600 = vld [vmem:[%s344 + $0x770] sm:$0xff]
        %v601 = vld [vmem:[%s344 + $0x778] sm:$0xff]
        %v602 = vld [vmem:[%s344 + $0x780] sm:$0xff]
        %v603 = vld [vmem:[%s344 + $0x788] sm:$0xff]
        %v604 = vld [vmem:[%s344 + $0x790] sm:$0xff]
        %v605 = vld [vmem:[%s344 + $0x798] sm:$0xff]
        %v606 = vld [vmem:[%s344 + $0x7a0] sm:$0xff]
        %v607 = vld [vmem:[%s344 + $0x7a8] sm:$0xff]
        %v608 = vld [vmem:[%s344 + $0x7b0] sm:$0xff]
        %v609 = vld [vmem:[%s344 + $0x7b8] sm:$0xff]
        %v610 = vld [vmem:[%s344 + $0x7c0] sm:$0xff]
        %v611 = vld [vmem:[%s344 + $0x7c8] sm:$0xff]
        %v612 = vld [vmem:[%s344 + $0x7d0] sm:$0xff]
        %v613 = vld [vmem:[%s344 + $0x7d8] sm:$0xff]
        %v614 = vld [vmem:[%s344 + $0x7e0] sm:$0xff]
        %v615 = vld [vmem:[%s344 + $0x7e8] sm:$0xff]
        %v616 = vld [vmem:[%s344 + $0x7f0] sm:$0xff]
        %v617 = vld [vmem:[%s344 + $0x7f8] sm:$0xff]
        %v618 = vld [vmem:[%s344 + $0x800] sm:$0xff]
        %v619 = vld [vmem:[%s344 + $0x808] sm:$0xff]
        %v620 = vld [vmem:[%s344 + $0x810] sm:$0xff]
        %v621 = vld [vmem:[%s344 + $0x818] sm:$0xff]
        %v622 = vld [vmem:[%s344 + $0x820] sm:$0xff]
        %v623 = vld [vmem:[%s344 + $0x828] sm:$0xff]
        %v624 = vld [vmem:[%s344 + $0x830] sm:$0xff]
        %v625 = vld [vmem:[%s344 + $0x838] sm:$0xff]
        %v626 = vld [vmem:[%s344 + $0x840] sm:$0xff]
        %v627 = vld [vmem:[%s344 + $0x848] sm:$0xff]
        %v628 = vld [vmem:[%s344 + $0x850] sm:$0xff]
        %v629 = vld [vmem:[%s344 + $0x858] sm:$0xff]
        %v630 = vld [vmem:[%s344 + $0x860] sm:$0xff]
        %v631 = vld [vmem:[%s344 + $0x868] sm:$0xff]
        %v632 = vld [vmem:[%s344 + $0x870] sm:$0xff]
        %v633 = vld [vmem:[%s344 + $0x878] sm:$0xff]
        %v634 = vld [vmem:[%s344 + $0x880] sm:$0xff]
        %v635 = vld [vmem:[%s344 + $0x888] sm:$0xff]
        %v636 = vld [vmem:[%s344 + $0x890] sm:$0xff]
        %v637 = vld [vmem:[%s344 + $0x898] sm:$0xff]
        %v638 = vld [vmem:[%s344 + $0x8a0] sm:$0xff]
        %v639 = vld [vmem:[%s344 + $0x8a8] sm:$0xff]
        %v640 = vld [vmem:[%s344 + $0x8b0] sm:$0xff]
        %v641 = vld [vmem:[%s344 + $0x8b8] sm:$0xff]
        %v642 = vld [vmem:[%s344 + $0x8c0] sm:$0xff]
        %v643 = vld [vmem:[%s344 + $0x8c8] sm:$0xff]
        %v644 = vld [vmem:[%s344 + $0x8d0] sm:$0xff]
        %v645 = vld [vmem:[%s344 + $0x8d8] sm:$0xff]
        %v646 = vld [vmem:[%s344 + $0x8e0] sm:$0xff]
        %v647 = vld [vmem:[%s344 + $0x8e8] sm:$0xff]
        %v648 = vld [vmem:[%s344 + $0x8f0] sm:$0xff]
        %v649 = vld [vmem:[%s344 + $0x8f8] sm:$0xff]
        %v650 = vld [vmem:[%s344 + $0x900] sm:$0xff]
        %v651 = vld [vmem:[%s344 + $0x908] sm:$0xff]
        %v652 = vld [vmem:[%s344 + $0x910] sm:$0xff]
        %v653 = vld [vmem:[%s344 + $0x918] sm:$0xff]
        %v654 = vld [vmem:[%s344 + $0x920] sm:$0xff]
        %v655 = vld [vmem:[%s344 + $0x928] sm:$0xff]
        %v656 = vld [vmem:[%s344 + $0x930] sm:$0xff]
        %v657 = vld [vmem:[%s344 + $0x938] sm:$0xff]
        %v658 = vld [vmem:[%s344 + $0x940] sm:$0xff]
        %v659 = vld [vmem:[%s344 + $0x948] sm:$0xff]
        %v660 = vld [vmem:[%s344 + $0x950] sm:$0xff]
        %v661 = vld [vmem:[%s344 + $0x958] sm:$0xff]
        %v662 = vld [vmem:[%s344 + $0x960] sm:$0xff]
        %v663 = vld [vmem:[%s344 + $0x968] sm:$0xff]
        %v664 = vld [vmem:[%s344 + $0x970] sm:$0xff]
        %v665 = vld [vmem:[%s344 + $0x978] sm:$0xff]
        %v666 = vld [vmem:[%s344 + $0x980] sm:$0xff]
        %v667 = vld [vmem:[%s344 + $0x988] sm:$0xff]
        %v668 = vld [vmem:[%s344 + $0x990] sm:$0xff]
        %v669 = vld [vmem:[%s344 + $0x998] sm:$0xff]
        %v670 = vld [vmem:[%s344 + $0x9a0] sm:$0xff]
        %v671 = vld [vmem:[%s344 + $0x9a8] sm:$0xff]
        %v672 = vld [vmem:[%s344 + $0x9b0] sm:$0xff]
        %v673 = vld [vmem:[%s344 + $0x9b8] sm:$0xff]
        %v674 = vld [vmem:[%s344 + $0x9c0] sm:$0xff]
        %v675 = vld [vmem:[%s344 + $0x9c8] sm:$0xff]
        %v676 = vld [vmem:[%s344 + $0x9d0] sm:$0xff]
        %v677 = vld [vmem:[%s344 + $0x9d8] sm:$0xff]
        %v678 = vld [vmem:[%s344 + $0x9e0] sm:$0xff]
        %v679 = vld [vmem:[%s344 + $0x9e8] sm:$0xff]
        %v680 = vld [vmem:[%s344 + $0x9f0] sm:$0xff]
        %v681 = vld [vmem:[%s344 + $0x9f8] sm:$0xff]
        %v682 = vld [vmem:[%s344 + $0xa00] sm:$0xff]
        %v683 = vld [vmem:[%s344 + $0xa08] sm:$0xff]
        %v684 = vld [vmem:[%s344 + $0xa10] sm:$0xff]
        %v685 = vld [vmem:[%s344 + $0xa18] sm:$0xff]
        %v686 = vld [vmem:[%s344 + $0xa20] sm:$0xff]
        %v687 = vld [vmem:[%s344 + $0xa28] sm:$0xff]
        %v688 = vld [vmem:[%s344 + $0xa30] sm:$0xff]
        %v689 = vld [vmem:[%s344 + $0xa38] sm:$0xff]
        %v690 = vld [vmem:[%s344 + $0xa40] sm:$0xff]
        %v691 = vld [vmem:[%s344 + $0xa48] sm:$0xff]
        %v692 = vld [vmem:[%s344 + $0xa50] sm:$0xff]
        %v693 = vld [vmem:[%s344 + $0xa58] sm:$0xff]
        %v694 = vld [vmem:[%s344 + $0xa60] sm:$0xff]
        %v695 = vld [vmem:[%s344 + $0xa68] sm:$0xff]
        %v696 = vld [vmem:[%s344 + $0xa70] sm:$0xff]
        %v697 = vld [vmem:[%s344 + $0xa78] sm:$0xff]
        %v698 = vld [vmem:[%s344 + $0xa80] sm:$0xff]
        %v699 = vld [vmem:[%s344 + $0xa88] sm:$0xff]
        %v700 = vld [vmem:[%s344 + $0xa90] sm:$0xff]
        %v701 = vld [vmem:[%s344 + $0xa98] sm:$0xff]
        %v702 = vld [vmem:[%s344 + $0xaa0] sm:$0xff]
        %v703 = vld [vmem:[%s344 + $0xaa8] sm:$0xff]
        %v704 = vld [vmem:[%s344 + $0xab0] sm:$0xff]
        %v705 = vld [vmem:[%s344 + $0xab8] sm:$0xff]
        %v706 = vld [vmem:[%s344 + $0xac0] sm:$0xff]
        %v707 = vld [vmem:[%s344 + $0xac8] sm:$0xff]
        %v708 = vld [vmem:[%s344 + $0xad0] sm:$0xff]
        %v709 = vld [vmem:[%s344 + $0xad8] sm:$0xff]
        %v710 = vld [vmem:[%s344 + $0xae0] sm:$0xff]
        %v711 = vld [vmem:[%s344 + $0xae8] sm:$0xff]
        %v712 = vld [vmem:[%s344 + $0xaf0] sm:$0xff]
        %v713 = vld [vmem:[%s344 + $0xaf8] sm:$0xff]
        %v714 = vld [vmem:[%s344 + $0xb00] sm:$0xff]
        %v715 = vld [vmem:[%s344 + $0xb08] sm:$0xff]
        %v716 = vld [vmem:[%s344 + $0xb10] sm:$0xff]
        %v717 = vld [vmem:[%s344 + $0xb18] sm:$0xff]
        %v718 = vld [vmem:[%s344 + $0xb20] sm:$0xff]
        %v719 = vld [vmem:[%s344 + $0xb28] sm:$0xff]
        %v720 = vld [vmem:[%s344 + $0xb30] sm:$0xff]
        %v721 = vld [vmem:[%s344 + $0xb38] sm:$0xff]
        %v722 = vld [vmem:[%s344 + $0xb40] sm:$0xff]
        %v723 = vld [vmem:[%s344 + $0xb48] sm:$0xff]
        %v724 = vld [vmem:[%s344 + $0xb50] sm:$0xff]
        %v725 = vld [vmem:[%s344 + $0xb58] sm:$0xff]
        %v726 = vld [vmem:[%s344 + $0xb60] sm:$0xff]
        %v727 = vld [vmem:[%s344 + $0xb68] sm:$0xff]
        %v728 = vld [vmem:[%s344 + $0xb70] sm:$0xff]
        %v729 = vld [vmem:[%s344 + $0xb78] sm:$0xff]
        %v730 = vld [vmem:[%s344 + $0xb80] sm:$0xff]
        %v731 = vld [vmem:[%s344 + $0xb88] sm:$0xff]
        %v732 = vld [vmem:[%s344 + $0xb90] sm:$0xff]
        %v733 = vld [vmem:[%s344 + $0xb98] sm:$0xff]
        %v734 = vld [vmem:[%s344 + $0xba0] sm:$0xff]
        %v735 = vld [vmem:[%s344 + $0xba8] sm:$0xff]
        %v736 = vld [vmem:[%s344 + $0xbb0] sm:$0xff]
        %v737 = vld [vmem:[%s344 + $0xbb8] sm:$0xff]
        %v738 = vld [vmem:[%s344 + $0xbc0] sm:$0xff]
        %v739 = vld [vmem:[%s344 + $0xbc8] sm:$0xff]
        %v740 = vld [vmem:[%s344 + $0xbd0] sm:$0xff]
        %v741 = vld [vmem:[%s344 + $0xbd8] sm:$0xff]
        %v742 = vld [vmem:[%s344 + $0xbe0] sm:$0xff]
        %v743 = vld [vmem:[%s344 + $0xbe8] sm:$0xff]
        %v744 = vld [vmem:[%s344 + $0xbf0] sm:$0xff]
        %v745 = vld [vmem:[%s344 + $0xbf8] sm:$0xff]
        %v746 = vld [vmem:[%s344 + $0xc00] sm:$0xff]
        %v747 = vld [vmem:[%s344 + $0xc08] sm:$0xff]
        %v748 = vld [vmem:[%s344 + $0xc10] sm:$0xff]
        %v749 = vld [vmem:[%s344 + $0xc18] sm:$0xff]
        %v750 = vld [vmem:[%s344 + $0xc20] sm:$0xff]
        %v751 = vld [vmem:[%s344 + $0xc28] sm:$0xff]
        %v752 = vld [vmem:[%s344 + $0xc30] sm:$0xff]
        %v753 = vld [vmem:[%s344 + $0xc38] sm:$0xff]
        %v754 = vld [vmem:[%s344 + $0xc40] sm:$0xff]
        %v755 = vld [vmem:[%s344 + $0xc48] sm:$0xff]
        %v756 = vld [vmem:[%s344 + $0xc50] sm:$0xff]
        %v757 = vld [vmem:[%s344 + $0xc58] sm:$0xff]
        %v758 = vld [vmem:[%s344 + $0xc60] sm:$0xff]
        %v759 = vld [vmem:[%s344 + $0xc68] sm:$0xff]
        %v760 = vld [vmem:[%s344 + $0xc70] sm:$0xff]
        %v761 = vld [vmem:[%s344 + $0xc78] sm:$0xff]
        %v762 = vld [vmem:[%s344 + $0xc80] sm:$0xff]
        %v763 = vld [vmem:[%s344 + $0xc88] sm:$0xff]
        %v764 = vld [vmem:[%s344 + $0xc90] sm:$0xff]
        %v765 = vld [vmem:[%s344 + $0xc98] sm:$0xff]
        %v766 = vld [vmem:[%s344 + $0xca0] sm:$0xff]
        %v767 = vld [vmem:[%s344 + $0xca8] sm:$0xff]
        %v768 = vld [vmem:[%s344 + $0xcb0] sm:$0xff]
        %v769 = vld [vmem:[%s344 + $0xcb8] sm:$0xff]
        %v770 = vld [vmem:[%s344 + $0xcc0] sm:$0xff]
        %v771 = vld [vmem:[%s344 + $0xcc8] sm:$0xff]
        %v772 = vld [vmem:[%s344 + $0xcd0] sm:$0xff]
        %v773 = vld [vmem:[%s344 + $0xcd8] sm:$0xff]
        %v774 = vld [vmem:[%s344 + $0xce0] sm:$0xff]
        %v775 = vld [vmem:[%s344 + $0xce8] sm:$0xff]
        %v776 = vld [vmem:[%s344 + $0xcf0] sm:$0xff]
        %v777 = vld [vmem:[%s344 + $0xcf8] sm:$0xff]
        %v784 = vcombine.high %v355, %v355
        %v785 = vcombine.high %v356, %v356
        %v786 = vcombine.high %v357, %v357
        %v787 = vcombine.high %v358, %v358
        %v788 = vcombine.high %v359, %v359
        %v789 = vcombine.high %v360, %v360
        %796 = vmatprep.subr.mxu0 %v363
        %797 = vmatpush1.msra.mxu0 %v362
        %798 = vmatprep.subr.mxu0 %v365
        %799 = vmatpush1.msra.mxu0 %v364
        %800 = vmatprep.subr.mxu0 %v367
        %801 = vmatpush1.msra.mxu0 %v366
        %802 = vmatprep.subr.mxu0 %v369
        %803 = vmatpush1.msra.mxu0 %v368
        %804 = vmatprep.subr.mxu0 %v371
        %805 = vmatpush1.msra.mxu0 %v370
        %806 = vmatprep.subr.mxu0 %v373
        %807 = vmatpush1.msra.mxu0 %v372
        %808 = vmatprep.subr.mxu0 %v375
        %809 = vmatpush1.msra.mxu0 %v374
        %810 = vmatprep.subr.mxu0 %v377
        %811 = vmatpush1.msra.mxu0 %v376
        %812 = vmatprep.subr.mxu0 %v379
        %813 = vmatpush1.msra.mxu0 %v378
        %814 = vmatprep.subr.mxu0 %v381
        %815 = vmatpush1.msra.mxu0 %v380
        %816 = vmatprep.subr.mxu0 %v383
        %817 = vmatpush1.msra.mxu0 %v382
        %818 = vmatprep.subr.mxu0 %v385
        %819 = vmatpush1.msra.mxu0 %v384
        %820 = vmatprep.subr.mxu0 %v387
        %821 = vmatpush1.msra.mxu0 %v386
        %822 = vmatprep.subr.mxu0 %v389
        %823 = vmatpush1.msra.mxu0 %v388
        %824 = vmatprep.subr.mxu0 %v391
        %825 = vmatpush1.msra.mxu0 %v390
        %826 = vmatprep.subr.mxu0 %v393
        %827 = vmatpush1.msra.mxu0 %v392
        %828 = vmatprep.subr.mxu0 %v395
        %829 = vmatpush1.msra.mxu0 %v394
        %830 = vmatprep.subr.mxu0 %v397
        %831 = vmatpush1.msra.mxu0 %v396
        %832 = vmatprep.subr.mxu0 %v399
        %833 = vmatpush1.msra.mxu0 %v398
        %834 = vmatprep.subr.mxu0 %v401
        %835 = vmatpush1.msra.mxu0 %v400
        %836 = vmatprep.subr.mxu0 %v403
        %837 = vmatpush1.msra.mxu0 %v402
        %838 = vmatprep.subr.mxu0 %v405
        %839 = vmatpush1.msra.mxu0 %v404
        %840 = vmatprep.subr.mxu0 %v407
        %841 = vmatpush1.msra.mxu0 %v406
        %842 = vmatprep.subr.mxu0 %v409
        %843 = vmatpush1.msra.mxu0 %v408
        %844 = vmatprep.subr.mxu0 %v411
        %845 = vmatpush1.msra.mxu0 %v410
        %846 = vmatprep.subr.mxu0 %v413
        %847 = vmatpush1.msra.mxu0 %v412
        %848 = vmatprep.subr.mxu0 %v415
        %849 = vmatpush1.msra.mxu0 %v414
        %850 = vmatprep.subr.mxu0 %v417
        %851 = vmatpush1.msra.mxu0 %v416
        %852 = vmatprep.subr.mxu0 %v419
        %853 = vmatpush1.msra.mxu0 %v418
        %854 = vmatprep.subr.mxu0 %v421
        %855 = vmatpush1.msra.mxu0 %v420
        %856 = vmatprep.subr.mxu0 %v423
        %857 = vmatpush1.msra.mxu0 %v422
        %858 = vmatprep.subr.mxu0 %v425
        %859 = vmatpush1.msra.mxu0 %v424
        %860 = vmatprep.mubr.f32.mxu0 %v784
        %861 = vmatmul.mubr.f32.gmra.mrb[0].mxu0 %v355
        %v862 = vpop.f32.mrb[0].mxu0
        %v863 = vadd.f32 0.0, %v862
        %v864 = vpop.f32.mrb[0].mxu0
        %v865 = vadd.f32 0.0, %v864
        %866 = vdwg.mxu0
        %867 = vmatprep.subr.mxu0 %v427
        %868 = vmatpush1.msra.mxu0 %v426
        %869 = vmatprep.subr.mxu0 %v429
        %870 = vmatpush1.msra.mxu0 %v428
        %871 = vmatprep.subr.mxu0 %v431
        %872 = vmatpush1.msra.mxu0 %v430
        %873 = vmatprep.subr.mxu0 %v433
        %874 = vmatpush1.msra.mxu0 %v432
        %875 = vmatprep.subr.mxu0 %v435
        %876 = vmatpush1.msra.mxu0 %v434
        %877 = vmatprep.subr.mxu0 %v437
        %878 = vmatpush1.msra.mxu0 %v436
        %879 = vmatprep.subr.mxu0 %v439
        %880 = vmatpush1.msra.mxu0 %v438
        %881 = vmatprep.subr.mxu0 %v441
        %882 = vmatpush1.msra.mxu0 %v440
        %883 = vmatprep.subr.mxu0 %v443
        %884 = vmatpush1.msra.mxu0 %v442
        %885 = vmatprep.subr.mxu0 %v445
        %886 = vmatpush1.msra.mxu0 %v444
        %887 = vmatprep.subr.mxu0 %v447
        %888 = vmatpush1.msra.mxu0 %v446
        %889 = vmatprep.subr.mxu0 %v449
        %890 = vmatpush1.msra.mxu0 %v448
        %891 = vmatprep.subr.mxu0 %v451
        %892 = vmatpush1.msra.mxu0 %v450
        %893 = vmatprep.subr.mxu0 %v453
        %894 = vmatpush1.msra.mxu0 %v452
        %895 = vmatprep.subr.mxu0 %v455
        %896 = vmatpush1.msra.mxu0 %v454
        %897 = vmatprep.subr.mxu0 %v457
        %898 = vmatpush1.msra.mxu0 %v456
        %899 = vmatprep.subr.mxu0 %v459
        %900 = vmatpush1.msra.mxu0 %v458
        %901 = vmatprep.subr.mxu0 %v461
        %902 = vmatpush1.msra.mxu0 %v460
        %903 = vmatprep.subr.mxu0 %v463
        %904 = vmatpush1.msra.mxu0 %v462
        %905 = vmatprep.subr.mxu0 %v465
        %906 = vmatpush1.msra.mxu0 %v464
        %907 = vmatprep.subr.mxu0 %v467
        %908 = vmatpush1.msra.mxu0 %v466
        %909 = vmatprep.subr.mxu0 %v469
        %910 = vmatpush1.msra.mxu0 %v468
        %911 = vmatprep.subr.mxu0 %v471
        %912 = vmatpush1.msra.mxu0 %v470
        %913 = vmatprep.subr.mxu0 %v473
        %914 = vmatpush1.msra.mxu0 %v472
        %915 = vmatprep.subr.mxu0 %v475
        %916 = vmatpush1.msra.mxu0 %v474
        %917 = vmatprep.subr.mxu0 %v477
        %918 = vmatpush1.msra.mxu0 %v476
        %919 = vmatprep.subr.mxu0 %v479
        %920 = vmatpush1.msra.mxu0 %v478
        %921 = vmatprep.subr.mxu0 %v481
        %922 = vmatpush1.msra.mxu0 %v480
        %923 = vmatprep.subr.mxu0 %v483
        %924 = vmatpush1.msra.mxu0 %v482
        %925 = vmatprep.subr.mxu0 %v485
        %926 = vmatpush1.msra.mxu0 %v484
        %927 = vmatprep.subr.mxu0 %v487
        %928 = vmatpush1.msra.mxu0 %v486
        %929 = vmatprep.subr.mxu0 %v489
        %930 = vmatpush1.msra.mxu0 %v488
        %931 = vmatprep.mubr.f32.mxu0 %v785
        %932 = vmatmul.mubr.f32.gmra.mrb[0].mxu0 %v356
        %v933 = vpop.f32.mrb[0].mxu0
        %v934 = vadd.f32 %v863, %v933
        %v935 = vpop.f32.mrb[0].mxu0
        %v936 = vadd.f32 %v865, %v935
        %937 = vdwg.mxu0
        %938 = vmatprep.subr.mxu0 %v491
        %939 = vmatpush1.msra.mxu0 %v490
        %940 = vmatprep.subr.mxu0 %v493
        %941 = vmatpush1.msra.mxu0 %v492
        %942 = vmatprep.subr.mxu0 %v495
        %943 = vmatpush1.msra.mxu0 %v494
        %944 = vmatprep.subr.mxu0 %v497
        %945 = vmatpush1.msra.mxu0 %v496
        %946 = vmatprep.subr.mxu0 %v499
        %947 = vmatpush1.msra.mxu0 %v498
        %948 = vmatprep.subr.mxu0 %v501
        %949 = vmatpush1.msra.mxu0 %v500
        %950 = vmatprep.subr.mxu0 %v503
        %951 = vmatpush1.msra.mxu0 %v502
        %952 = vmatprep.subr.mxu0 %v505
        %953 = vmatpush1.msra.mxu0 %v504
        %954 = vmatprep.subr.mxu0 %v507
        %955 = vmatpush1.msra.mxu0 %v506
        %956 = vmatprep.subr.mxu0 %v509
        %957 = vmatpush1.msra.mxu0 %v508
        %958 = vmatprep.subr.mxu0 %v511
        %959 = vmatpush1.msra.mxu0 %v510
        %960 = vmatprep.subr.mxu0 %v513
        %961 = vmatpush1.msra.mxu0 %v512
        %962 = vmatprep.subr.mxu0 %v515
        %963 = vmatpush1.msra.mxu0 %v514
        %964 = vmatprep.subr.mxu0 %v517
        %965 = vmatpush1.msra.mxu0 %v516
        %966 = vmatprep.subr.mxu0 %v519
        %967 = vmatpush1.msra.mxu0 %v518
        %968 = vmatprep.subr.mxu0 %v521
        %969 = vmatpush1.msra.mxu0 %v520
        %970 = vmatprep.subr.mxu0 %v523
        %971 = vmatpush1.msra.mxu0 %v522
        %972 = vmatprep.subr.mxu0 %v525
        %973 = vmatpush1.msra.mxu0 %v524
        %974 = vmatprep.subr.mxu0 %v527
        %975 = vmatpush1.msra.mxu0 %v526
        %976 = vmatprep.subr.mxu0 %v529
        %977 = vmatpush1.msra.mxu0 %v528
        %978 = vmatprep.subr.mxu0 %v531
        %979 = vmatpush1.msra.mxu0 %v530
        %980 = vmatprep.subr.mxu0 %v533
        %981 = vmatpush1.msra.mxu0 %v532
        %982 = vmatprep.subr.mxu0 %v535
        %983 = vmatpush1.msra.mxu0 %v534
        %984 = vmatprep.subr.mxu0 %v537
        %985 = vmatpush1.msra.mxu0 %v536
        %986 = vmatprep.subr.mxu0 %v539
        %987 = vmatpush1.msra.mxu0 %v538
        %988 = vmatprep.subr.mxu0 %v541
        %989 = vmatpush1.msra.mxu0 %v540
        %990 = vmatprep.subr.mxu0 %v543
        %991 = vmatpush1.msra.mxu0 %v542
        %992 = vmatprep.subr.mxu0 %v545
        %993 = vmatpush1.msra.mxu0 %v544
        %994 = vmatprep.subr.mxu0 %v547
        %995 = vmatpush1.msra.mxu0 %v546
        %996 = vmatprep.subr.mxu0 %v549
        %997 = vmatpush1.msra.mxu0 %v548
        %998 = vmatprep.subr.mxu0 %v551
        %999 = vmatpush1.msra.mxu0 %v550
        %1000 = vmatprep.subr.mxu0 %v553
        %1001 = vmatpush1.msra.mxu0 %v552
        %1002 = vmatprep.mubr.f32.mxu0 %v786
        %1003 = vmatmul.mubr.f32.gmra.mrb[0].mxu0 %v357
        %v1004 = vpop.f32.mrb[0].mxu0
        %v1005 = vadd.f32 %v934, %v1004
        %v1006 = vpop.f32.mrb[0].mxu0
        %v1007 = vadd.f32 %v936, %v1006
        %1008 = vdwg.mxu0
        %1009 = vmatprep.subr.mxu0 %v555
        %1010 = vmatpush1.msra.mxu0 %v554
        %1011 = vmatprep.subr.mxu0 %v557
        %1012 = vmatpush1.msra.mxu0 %v556
        %1013 = vmatprep.subr.mxu0 %v559
        %1014 = vmatpush1.msra.mxu0 %v558
        %1015 = vmatprep.subr.mxu0 %v561
        %1016 = vmatpush1.msra.mxu0 %v560
        %1017 = vmatprep.subr.mxu0 %v563
        %1018 = vmatpush1.msra.mxu0 %v562
        %1019 = vmatprep.subr.mxu0 %v565
        %1020 = vmatpush1.msra.mxu0 %v564
        %1021 = vmatprep.subr.mxu0 %v567
        %1022 = vmatpush1.msra.mxu0 %v566
        %1023 = vmatprep.subr.mxu0 %v569
        %1024 = vmatpush1.msra.mxu0 %v568
        %1025 = vmatprep.subr.mxu0 %v571
        %1026 = vmatpush1.msra.mxu0 %v570
        %1027 = vmatprep.subr.mxu0 %v573
        %1028 = vmatpush1.msra.mxu0 %v572
        %1029 = vmatprep.subr.mxu0 %v575
        %1030 = vmatpush1.msra.mxu0 %v574
        %1031 = vmatprep.subr.mxu0 %v577
        %1032 = vmatpush1.msra.mxu0 %v576
        %1033 = vmatprep.subr.mxu0 %v579
        %1034 = vmatpush1.msra.mxu0 %v578
        %1035 = vmatprep.subr.mxu0 %v581
        %1036 = vmatpush1.msra.mxu0 %v580
        %1037 = vmatprep.subr.mxu0 %v583
        %1038 = vmatpush1.msra.mxu0 %v582
        %1039 = vmatprep.subr.mxu0 %v585
        %1040 = vmatpush1.msra.mxu0 %v584
        %1041 = vmatprep.subr.mxu0 %v587
        %1042 = vmatpush1.msra.mxu0 %v586
        %1043 = vmatprep.subr.mxu0 %v589
        %1044 = vmatpush1.msra.mxu0 %v588
        %1045 = vmatprep.subr.mxu0 %v591
        %1046 = vmatpush1.msra.mxu0 %v590
        %1047 = vmatprep.subr.mxu0 %v593
        %1048 = vmatpush1.msra.mxu0 %v592
        %1049 = vmatprep.subr.mxu0 %v595
        %1050 = vmatpush1.msra.mxu0 %v594
        %1051 = vmatprep.subr.mxu0 %v597
        %1052 = vmatpush1.msra.mxu0 %v596
        %1053 = vmatprep.subr.mxu0 %v599
        %1054 = vmatpush1.msra.mxu0 %v598
        %1055 = vmatprep.subr.mxu0 %v601
        %1056 = vmatpush1.msra.mxu0 %v600
        %1057 = vmatprep.subr.mxu0 %v603
        %1058 = vmatpush1.msra.mxu0 %v602
        %1059 = vmatprep.subr.mxu0 %v605
        %1060 = vmatpush1.msra.mxu0 %v604
        %1061 = vmatprep.subr.mxu0 %v607
        %1062 = vmatpush1.msra.mxu0 %v606
        %1063 = vmatprep.subr.mxu0 %v609
        %1064 = vmatpush1.msra.mxu0 %v608
        %1065 = vmatprep.subr.mxu0 %v611
        %1066 = vmatpush1.msra.mxu0 %v610
        %1067 = vmatprep.subr.mxu0 %v613
        %1068 = vmatpush1.msra.mxu0 %v612
        %1069 = vmatprep.subr.mxu0 %v615
        %1070 = vmatpush1.msra.mxu0 %v614
        %1071 = vmatprep.subr.mxu0 %v617
        %1072 = vmatpush1.msra.mxu0 %v616
        %1073 = vmatprep.mubr.f32.mxu0 %v787
        %1074 = vmatmul.mubr.f32.gmra.mrb[0].mxu0 %v358
        %v1075 = vpop.f32.mrb[0].mxu0
        %v1076 = vadd.f32 %v1005, %v1075
        %v1077 = vpop.f32.mrb[0].mxu0
        %v1078 = vadd.f32 %v1007, %v1077
        %1079 = vdwg.mxu0
        %1080 = vmatprep.subr.mxu0 %v619
        %1081 = vmatpush1.msra.mxu0 %v618
        %1082 = vmatprep.subr.mxu0 %v621
        %1083 = vmatpush1.msra.mxu0 %v620
        %1084 = vmatprep.subr.mxu0 %v623
        %1085 = vmatpush1.msra.mxu0 %v622
        %1086 = vmatprep.subr.mxu0 %v625
        %1087 = vmatpush1.msra.mxu0 %v624
        %1088 = vmatprep.subr.mxu0 %v627
        %1089 = vmatpush1.msra.mxu0 %v626
        %1090 = vmatprep.subr.mxu0 %v629
        %1091 = vmatpush1.msra.mxu0 %v628
        %1092 = vmatprep.subr.mxu0 %v631
        %1093 = vmatpush1.msra.mxu0 %v630
        %1094 = vmatprep.subr.mxu0 %v633
        %1095 = vmatpush1.msra.mxu0 %v632
        %1096 = vmatprep.subr.mxu0 %v635
        %1097 = vmatpush1.msra.mxu0 %v634
        %1098 = vmatprep.subr.mxu0 %v637
        %1099 = vmatpush1.msra.mxu0 %v636
        %1100 = vmatprep.subr.mxu0 %v639
        %1101 = vmatpush1.msra.mxu0 %v638
        %1102 = vmatprep.subr.mxu0 %v641
        %1103 = vmatpush1.msra.mxu0 %v640
        %1104 = vmatprep.subr.mxu0 %v643
        %1105 = vmatpush1.msra.mxu0 %v642
        %1106 = vmatprep.subr.mxu0 %v645
        %1107 = vmatpush1.msra.mxu0 %v644
        %1108 = vmatprep.subr.mxu0 %v647
        %1109 = vmatpush1.msra.mxu0 %v646
        %1110 = vmatprep.subr.mxu0 %v649
        %1111 = vmatpush1.msra.mxu0 %v648
        %1112 = vmatprep.subr.mxu0 %v651
        %1113 = vmatpush1.msra.mxu0 %v650
        %1114 = vmatprep.subr.mxu0 %v653
        %1115 = vmatpush1.msra.mxu0 %v652
        %1116 = vmatprep.subr.mxu0 %v655
        %1117 = vmatpush1.msra.mxu0 %v654
        %1118 = vmatprep.subr.mxu0 %v657
        %1119 = vmatpush1.msra.mxu0 %v656
        %1120 = vmatprep.subr.mxu0 %v659
        %1121 = vmatpush1.msra.mxu0 %v658
        %1122 = vmatprep.subr.mxu0 %v661
        %1123 = vmatpush1.msra.mxu0 %v660
        %1124 = vmatprep.subr.mxu0 %v663
        %1125 = vmatpush1.msra.mxu0 %v662
        %1126 = vmatprep.subr.mxu0 %v665
        %1127 = vmatpush1.msra.mxu0 %v664
        %1128 = vmatprep.subr.mxu0 %v667
        %1129 = vmatpush1.msra.mxu0 %v666
        %1130 = vmatprep.subr.mxu0 %v669
        %1131 = vmatpush1.msra.mxu0 %v668
        %1132 = vmatprep.subr.mxu0 %v671
        %1133 = vmatpush1.msra.mxu0 %v670
        %1134 = vmatprep.subr.mxu0 %v673
        %1135 = vmatpush1.msra.mxu0 %v672
        %1136 = vmatprep.subr.mxu0 %v675
        %1137 = vmatpush1.msra.mxu0 %v674
        %1138 = vmatprep.subr.mxu0 %v677
        %1139 = vmatpush1.msra.mxu0 %v676
        %1140 = vmatprep.subr.mxu0 %v679
        %1141 = vmatpush1.msra.mxu0 %v678
        %1142 = vmatprep.subr.mxu0 %v681
        %1143 = vmatpush1.msra.mxu0 %v680
        %1144 = vmatprep.mubr.f32.mxu0 %v788
        %1145 = vmatmul.mubr.f32.gmra.mrb[0].mxu0 %v359
        %v1146 = vpop.f32.mrb[0].mxu0
        %v1147 = vadd.f32 %v1076, %v1146
        %v1148 = vpop.f32.mrb[0].mxu0
        %v1149 = vadd.f32 %v1078, %v1148
        %1150 = vdwg.mxu0
        %1151 = vmatprep.subr.mxu0 %v683
        %1152 = vmatpush1.msra.mxu0 %v682
        %1153 = vmatprep.subr.mxu0 %v685
        %1154 = vmatpush1.msra.mxu0 %v684
        %1155 = vmatprep.subr.mxu0 %v687
        %1156 = vmatpush1.msra.mxu0 %v686
        %1157 = vmatprep.subr.mxu0 %v689
        %1158 = vmatpush1.msra.mxu0 %v688
        %1159 = vmatprep.subr.mxu0 %v691
        %1160 = vmatpush1.msra.mxu0 %v690
        %1161 = vmatprep.subr.mxu0 %v693
        %1162 = vmatpush1.msra.mxu0 %v692
        %1163 = vmatprep.subr.mxu0 %v695
        %1164 = vmatpush1.msra.mxu0 %v694
        %1165 = vmatprep.subr.mxu0 %v697
        %1166 = vmatpush1.msra.mxu0 %v696
        %1167 = vmatprep.subr.mxu0 %v699
        %1168 = vmatpush1.msra.mxu0 %v698
        %1169 = vmatprep.subr.mxu0 %v701
        %1170 = vmatpush1.msra.mxu0 %v700
        %1171 = vmatprep.subr.mxu0 %v703
        %1172 = vmatpush1.msra.mxu0 %v702
        %1173 = vmatprep.subr.mxu0 %v705
        %1174 = vmatpush1.msra.mxu0 %v704
        %1175 = vmatprep.subr.mxu0 %v707
        %1176 = vmatpush1.msra.mxu0 %v706
        %1177 = vmatprep.subr.mxu0 %v709
        %1178 = vmatpush1.msra.mxu0 %v708
        %1179 = vmatprep.subr.mxu0 %v711
        %1180 = vmatpush1.msra.mxu0 %v710
        %1181 = vmatprep.subr.mxu0 %v713
        %1182 = vmatpush1.msra.mxu0 %v712
        %1183 = vmatprep.subr.mxu0 %v715
        %1184 = vmatpush1.msra.mxu0 %v714
        %1185 = vmatprep.subr.mxu0 %v717
        %1186 = vmatpush1.msra.mxu0 %v716
        %1187 = vmatprep.subr.mxu0 %v719
        %1188 = vmatpush1.msra.mxu0 %v718
        %1189 = vmatprep.subr.mxu0 %v721
        %1190 = vmatpush1.msra.mxu0 %v720
        %1191 = vmatprep.subr.mxu0 %v723
        %1192 = vmatpush1.msra.mxu0 %v722
        %1193 = vmatprep.subr.mxu0 %v725
        %1194 = vmatpush1.msra.mxu0 %v724
        %1195 = vmatprep.subr.mxu0 %v727
        %1196 = vmatpush1.msra.mxu0 %v726
        %1197 = vmatprep.subr.mxu0 %v729
        %1198 = vmatpush1.msra.mxu0 %v728
        %1199 = vmatprep.subr.mxu0 %v731
        %1200 = vmatpush1.msra.mxu0 %v730
        %1201 = vmatprep.subr.mxu0 %v733
        %1202 = vmatpush1.msra.mxu0 %v732
        %1203 = vmatprep.subr.mxu0 %v735
        %1204 = vmatpush1.msra.mxu0 %v734
        %1205 = vmatprep.subr.mxu0 %v737
        %1206 = vmatpush1.msra.mxu0 %v736
        %1207 = vmatprep.subr.mxu0 %v739
        %1208 = vmatpush1.msra.mxu0 %v738
        %1209 = vmatprep.subr.mxu0 %v741
        %1210 = vmatpush1.msra.mxu0 %v740
        %1211 = vmatprep.subr.mxu0 %v743
        %1212 = vmatpush1.msra.mxu0 %v742
        %1213 = vmatprep.subr.mxu0 %v745
        %1214 = vmatpush1.msra.mxu0 %v744
        %1215 = vmatprep.mubr.f32.mxu0 %v789
        %1216 = vmatmul.mubr.f32.gmra.mrb[0].mxu0 %v360
        %v1217 = vpop.f32.mrb[0].mxu0
        %v1218 = vadd.f32 %v1147, %v1217
        %v1219 = vpop.f32.mrb[0].mxu0
        %v1220 = vadd.f32 %v1149, %v1219
        %1221 = vdwg.mxu0
        %1222 = vmatprep.subr.mxu0 %v747
        %1223 = vmatpush1.msra.mxu0 %v746
        %1224 = vmatprep.subr.mxu0 %v749
        %1225 = vmatpush1.msra.mxu0 %v748
        %1226 = vmatprep.subr.mxu0 %v751
        %1227 = vmatpush1.msra.mxu0 %v750
        %1228 = vmatprep.subr.mxu0 %v753
        %1229 = vmatpush1.msra.mxu0 %v752
        %1230 = vmatprep.subr.mxu0 %v755
        %1231 = vmatpush1.msra.mxu0 %v754
        %1232 = vmatprep.subr.mxu0 %v757
        %1233 = vmatpush1.msra.mxu0 %v756
        %1234 = vmatprep.subr.mxu0 %v759
        %1235 = vmatpush1.msra.mxu0 %v758
        %1236 = vmatprep.subr.mxu0 %v761
        %1237 = vmatpush1.msra.mxu0 %v760
        %1238 = vmatprep.subr.mxu0 %v763
        %1239 = vmatpush1.msra.mxu0 %v762
        %1240 = vmatprep.subr.mxu0 %v765
        %1241 = vmatpush1.msra.mxu0 %v764
        %1242 = vmatprep.subr.mxu0 %v767
        %1243 = vmatpush1.msra.mxu0 %v766
        %1244 = vmatprep.subr.mxu0 %v769
        %1245 = vmatpush1.msra.mxu0 %v768
        %1246 = vmatprep.subr.mxu0 %v771
        %1247 = vmatpush1.msra.mxu0 %v770
        %1248 = vmatprep.subr.mxu0 %v773
        %1249 = vmatpush1.msra.mxu0 %v772
        %1250 = vmatprep.subr.mxu0 %v775
        %1251 = vmatpush1.msra.mxu0 %v774
        %1252 = vmatprep.subr.mxu0 %v777
        %1253 = vmatpush1.msra.mxu0 %v776
        %1254 = vmatprep.subr.mxu0 0.0
        %1255 = vmatpush1.msra.mxu0 0.0
        %1256 = vmatprep.subr.mxu0 0.0
        %1257 = vmatpush1.msra.mxu0 0.0
        %1258 = vmatprep.subr.mxu0 0.0
        %1259 = vmatpush1.msra.mxu0 0.0
        %1260 = vmatprep.subr.mxu0 0.0
        %1261 = vmatpush1.msra.mxu0 0.0
        %1262 = vmatprep.subr.mxu0 0.0
        %1263 = vmatpush1.msra.mxu0 0.0
        %1264 = vmatprep.subr.mxu0 0.0
        %1265 = vmatpush1.msra.mxu0 0.0
        %1266 = vmatprep.subr.mxu0 0.0
        %1267 = vmatpush1.msra.mxu0 0.0
        %1268 = vmatprep.subr.mxu0 0.0
        %1269 = vmatpush1.msra.mxu0 0.0
        %1270 = vmatprep.subr.mxu0 0.0
        %1271 = vmatpush1.msra.mxu0 0.0
        %1272 = vmatprep.subr.mxu0 0.0
        %1273 = vmatpush1.msra.mxu0 0.0
        %1274 = vmatprep.subr.mxu0 0.0
        %1275 = vmatpush1.msra.mxu0 0.0
        %1276 = vmatprep.subr.mxu0 0.0
        %1277 = vmatpush1.msra.mxu0 0.0
        %1278 = vmatprep.subr.mxu0 0.0
        %1279 = vmatpush1.msra.mxu0 0.0
        %1280 = vmatprep.subr.mxu0 0.0
        %1281 = vmatpush1.msra.mxu0 0.0
        %1282 = vmatprep.subr.mxu0 0.0
        %1283 = vmatpush1.msra.mxu0 0.0
        %1284 = vmatprep.subr.mxu0 0.0
        %1285 = vmatpush1.msra.mxu0 0.0
        %1286 = vmatprep.mubr.f32.mxu0 0.0
        %1287 = vmatmul.mubr.f32.gmra.mrb[0].mxu0 %v361
        %v1288 = vpop.f32.mrb[0].mxu0
        %v1289 = vadd.f32 %v1218, %v1288
        %v1290 = vpop.f32.mrb[0].mxu0
        %v1291 = vadd.f32 %v1220, %v1290
        %1292 = vdwg.mxu0
        %v1295 = vcombine.low %v1289, %v1291
        %v1297 = vadd.f32 %v354, %v1295
        %vm1298 = vcmask 1043456
        %vm1299 = vcmask 523268
        %vm1300 = vmor %vm1299, %vm1298
        %1301 = vst.msk [vmem:[#allocation2] sm:$0xff] %vm1300, %v1297
        %p1302 = scmp.eq.s32.totalorder %s21, 5
        // Predicated region
        $region61: #{crop_convlstm_forward.3} parent=55 // pred_check
          %p1303 = pneg %p1302
        $region62: #{crop_convlstm_forward.3} parent=55 // pred_check_branch
          %1305 = sbr.rel (%p1303) target = $region64
        $region63: #{crop_convlstm_forward.3} parent=55 // pred_region
          %v1306 = vld [vmem:[#allocation2] sm:$0xff]
          %v1307 = vld [vmem:[%s2] sm:$0x3]
          %v1309 = vlaneseq
          %v1310 = vshrl.u32 %v1309, 7
          %v1311 = vsub.s32 0, %v1310
          %v1312 = vrot.slane %v1307, %v1311
          %v1313 = vlaneseq
          %v1314 = vshrl.u32 %v1313, 7
          %v1315 = vsub.s32 1, %v1314
          %v1316 = vrot.slane %v1307, %v1315
          %v1317 = vcombine.low %v1312, %v1316
          %v1319 = vmul.f32 %v1306, %v1317
          %v1320 = vld [vmem:[%s3] sm:$0x3]
          %v1322 = vlaneseq
          %v1323 = vshrl.u32 %v1322, 7
          %v1324 = vsub.s32 0, %v1323
          %v1325 = vrot.slane %v1320, %v1324
          %v1326 = vlaneseq
          %v1327 = vshrl.u32 %v1326, 7
          %v1328 = vsub.s32 1, %v1327
          %v1329 = vrot.slane %v1320, %v1328
          %v1330 = vcombine.low %v1325, %v1329
          %v1332 = vadd.f32 %v1319, %v1330
          %v1333 = vmax.f32 %v1332, 0.0
          %v1334 = vld [vmem:[%s4] sm:$0xff]
          %v1335 = vld [vmem:[%s4 + $0x8] sm:$0xff]
          %v1336 = vld [vmem:[%s4 + $0x10] sm:$0xff]
          %v1337 = vld [vmem:[%s4 + $0x18] sm:$0xff]
          %v1338 = vld [vmem:[%s4 + $0x20] sm:$0xff]
          %v1339 = vld [vmem:[%s4 + $0x28] sm:$0xff]
          %v1340 = vld [vmem:[%s4 + $0x30] sm:$0xff]
          %v1341 = vld [vmem:[%s4 + $0x38] sm:$0xff]
          %v1342 = vld [vmem:[%s4 + $0x40] sm:$0xff]
          %v1343 = vld [vmem:[%s4 + $0x48] sm:$0xff]
          %v1344 = vld [vmem:[%s4 + $0x50] sm:$0xff]
          %v1345 = vld [vmem:[%s4 + $0x58] sm:$0xff]
          %v1346 = vld [vmem:[%s4 + $0x60] sm:$0xff]
          %v1347 = vld [vmem:[%s4 + $0x68] sm:$0xff]
          %v1348 = vld [vmem:[%s4 + $0x70] sm:$0xff]
          %v1349 = vld [vmem:[%s4 + $0x78] sm:$0xff]
          %v1350 = vld [vmem:[%s4 + $0x80] sm:$0xff]
          %v1351 = vld [vmem:[%s4 + $0x88] sm:$0xff]
          %v1352 = vld [vmem:[%s4 + $0x90] sm:$0xff]
          %v1353 = vld [vmem:[%s4 + $0x98] sm:$0xff]
          %v1354 = vld [vmem:[%s4 + $0xa0] sm:$0xff]
          %v1355 = vld [vmem:[%s4 + $0xa8] sm:$0xff]
          %v1356 = vld [vmem:[%s4 + $0xb0] sm:$0xff]
          %v1357 = vld [vmem:[%s4 + $0xb8] sm:$0xff]
          %v1359 = vcombine.high %v1333, %v1333
          %vm1360 = vcmask 523264
          %v1361 = vsel %vm1360, %v1359, 0
          %1363 = vmatprep.subr.mxu0 0.0
          %1364 = vmatpush1.msra.mxu0 %v1334
          %1365 = vmatprep.subr.mxu0 0.0
          %1366 = vmatpush1.msra.mxu0 %v1335
          %1367 = vmatprep.subr.mxu0 0.0
          %1368 = vmatpush1.msra.mxu0 %v1336
          %1369 = vmatprep.subr.mxu0 0.0
          %1370 = vmatpush1.msra.mxu0 %v1337
          %1371 = vmatprep.subr.mxu0 0.0
          %1372 = vmatpush1.msra.mxu0 %v1338
          %1373 = vmatprep.subr.mxu0 0.0
          %1374 = vmatpush1.msra.mxu0 %v1339
          %1375 = vmatprep.subr.mxu0 0.0
          %1376 = vmatpush1.msra.mxu0 %v1340
          %1377 = vmatprep.subr.mxu0 0.0
          %1378 = vmatpush1.msra.mxu0 %v1341
          %1379 = vmatprep.subr.mxu0 0.0
          %1380 = vmatpush1.msra.mxu0 %v1342
          %1381 = vmatprep.subr.mxu0 0.0
          %1382 = vmatpush1.msra.mxu0 %v1343
          %1383 = vmatprep.subr.mxu0 0.0
          %1384 = vmatpush1.msra.mxu0 %v1344
          %1385 = vmatprep.subr.mxu0 0.0
          %1386 = vmatpush1.msra.mxu0 %v1345
          %1387 = vmatprep.subr.mxu0 0.0
          %1388 = vmatpush1.msra.mxu0 %v1346
          %1389 = vmatprep.subr.mxu0 0.0
          %1390 = vmatpush1.msra.mxu0 %v1347
          %1391 = vmatprep.subr.mxu0 0.0
          %1392 = vmatpush1.msra.mxu0 %v1348
          %1393 = vmatprep.subr.mxu0 0.0
          %1394 = vmatpush1.msra.mxu0 %v1349
          %1395 = vmatprep.subr.mxu0 0.0
          %1396 = vmatpush1.msra.mxu0 %v1350
          %1397 = vmatprep.subr.mxu0 0.0
          %1398 = vmatpush1.msra.mxu0 %v1351
          %1399 = vmatprep.subr.mxu0 0.0
          %1400 = vmatpush1.msra.mxu0 %v1352
          %1401 = vmatprep.subr.mxu0 0.0
          %1402 = vmatpush1.msra.mxu0 %v1353
          %1403 = vmatprep.subr.mxu0 0.0
          %1404 = vmatpush1.msra.mxu0 %v1354
          %1405 = vmatprep.subr.mxu0 0.0
          %1406 = vmatpush1.msra.mxu0 %v1355
          %1407 = vmatprep.subr.mxu0 0.0
          %1408 = vmatpush1.msra.mxu0 %v1356
          %1409 = vmatprep.subr.mxu0 0.0
          %1410 = vmatpush1.msra.mxu0 %v1357
          %1411 = vmatprep.subr.mxu0 0.0
          %1412 = vmatpush1.msra.mxu0 0.0
          %1413 = vmatprep.subr.mxu0 0.0
          %1414 = vmatpush1.msra.mxu0 0.0
          %1415 = vmatprep.subr.mxu0 0.0
          %1416 = vmatpush1.msra.mxu0 0.0
          %1417 = vmatprep.subr.mxu0 0.0
          %1418 = vmatpush1.msra.mxu0 0.0
          %1419 = vmatprep.subr.mxu0 0.0
          %1420 = vmatpush1.msra.mxu0 0.0
          %1421 = vmatprep.subr.mxu0 0.0
          %1422 = vmatpush1.msra.mxu0 0.0
          %1423 = vmatprep.subr.mxu0 0.0
          %1424 = vmatpush1.msra.mxu0 0.0
          %1425 = vmatprep.subr.mxu0 0.0
          %1426 = vmatpush1.msra.mxu0 0.0
          %1427 = vmatprep.mubr.f32.mxu0 %v1361
          %1428 = vmatmul.mubr.f32.gmra.mrb[0].mxu0 %v1333
          %v1429 = vpop.f32.mrb[0].mxu0
          %v1430 = vadd.f32 0.0, %v1429
          %v1431 = vpop.f32.mrb[0].mxu0
          %1432 = vdwg.mxu0
          %v1433 = vld [vmem:[%s5] sm:$0x1]
          %v1435 = vlaneseq
          %v1436 = vshrl.u32 %v1435, 7
          %v1437 = vsub.s32 0, %v1436
          %v1438 = vrot.slane %v1433, %v1437
          %v1440 = vmul.f32 %v1430, %v1438
          %v1441 = vld [vmem:[%s6] sm:$0x1]
          %v1443 = vlaneseq
          %v1444 = vshrl.u32 %v1443, 7
          %v1445 = vsub.s32 0, %v1444
          %v1446 = vrot.slane %v1441, %v1445
          %v1448 = vadd.f32 %v1440, %v1446
          %v1449 = vmax.f32 %v1448, 0.0
          %v1450 = vld [vmem:[%s7] sm:$0xff]
          %v1451 = vld [vmem:[%s7 + $0x8] sm:$0xf]
          %v1452 = vld [vmem:[%s8] sm:$0x1]
          %v1454 = vlaneseq
          %v1455 = vshrl.u32 %v1454, 7
          %v1456 = vsub.s32 0, %v1455
          %v1457 = vrot.slane %v1452, %v1456
          %vm1459 = vcmask 97280
          %v1461 = vsel %vm1459, %v1449, 0
          %v1464 = vsel %vm1298, %v1451, 0
          %1466 = vmatprep.subr.mxu0 0.0
          %1467 = vmatpush1.msra.mxu0 %v1450
          %1468 = vmatprep.subr.mxu0 0.0
          %1469 = vmatpush1.msra.mxu0 %v1464
          %1470 = vmatprep.subr.mxu0 0.0
          %1471 = vmatpush1.msra.mxu0 0.0
          %1472 = vmatprep.subr.mxu0 0.0
          %1473 = vmatpush1.msra.mxu0 0.0
          %1474 = vmatprep.subr.mxu0 0.0
          %1475 = vmatpush1.msra.mxu0 0.0
          %1476 = vmatprep.subr.mxu0 0.0
          %1477 = vmatpush1.msra.mxu0 0.0
          %1478 = vmatprep.subr.mxu0 0.0
          %1479 = vmatpush1.msra.mxu0 0.0
          %1480 = vmatprep.subr.mxu0 0.0
          %1481 = vmatpush1.msra.mxu0 0.0
          %1482 = vmatprep.subr.mxu0 0.0
          %1483 = vmatpush1.msra.mxu0 0.0
          %1484 = vmatprep.subr.mxu0 0.0
          %1485 = vmatpush1.msra.mxu0 0.0
          %1486 = vmatprep.subr.mxu0 0.0
          %1487 = vmatpush1.msra.mxu0 0.0
          %1488 = vmatprep.subr.mxu0 0.0
          %1489 = vmatpush1.msra.mxu0 0.0
          %1490 = vmatprep.subr.mxu0 0.0
          %1491 = vmatpush1.msra.mxu0 0.0
          %1492 = vmatprep.subr.mxu0 0.0
          %1493 = vmatpush1.msra.mxu0 0.0
          %1494 = vmatprep.subr.mxu0 0.0
          %1495 = vmatpush1.msra.mxu0 0.0
          %1496 = vmatprep.subr.mxu0 0.0
          %1497 = vmatpush1.msra.mxu0 0.0
          %1498 = vmatprep.subr.mxu0 0.0
          %1499 = vmatpush1.msra.mxu0 0.0
          %1500 = vmatprep.subr.mxu0 0.0
          %1501 = vmatpush1.msra.mxu0 0.0
          %1502 = vmatprep.subr.mxu0 0.0
          %1503 = vmatpush1.msra.mxu0 0.0
          %1504 = vmatprep.subr.mxu0 0.0
          %1505 = vmatpush1.msra.mxu0 0.0
          %1506 = vmatprep.subr.mxu0 0.0
          %1507 = vmatpush1.msra.mxu0 0.0
          %1508 = vmatprep.subr.mxu0 0.0
          %1509 = vmatpush1.msra.mxu0 0.0
          %1510 = vmatprep.subr.mxu0 0.0
          %1511 = vmatpush1.msra.mxu0 0.0
          %1512 = vmatprep.subr.mxu0 0.0
          %1513 = vmatpush1.msra.mxu0 0.0
          %1514 = vmatprep.subr.mxu0 0.0
          %1515 = vmatpush1.msra.mxu0 0.0
          %1516 = vmatprep.subr.mxu0 0.0
          %1517 = vmatpush1.msra.mxu0 0.0
          %1518 = vmatprep.subr.mxu0 0.0
          %1519 = vmatpush1.msra.mxu0 0.0
          %1520 = vmatprep.subr.mxu0 0.0
          %1521 = vmatpush1.msra.mxu0 0.0
          %1522 = vmatprep.subr.mxu0 0.0
          %1523 = vmatpush1.msra.mxu0 0.0
          %1524 = vmatprep.subr.mxu0 0.0
          %1525 = vmatpush1.msra.mxu0 0.0
          %1526 = vmatprep.subr.mxu0 0.0
          %1527 = vmatpush1.msra.mxu0 0.0
          %1528 = vmatprep.subr.mxu0 0.0
          %1529 = vmatpush1.msra.mxu0 0.0
          %1530 = vmatprep.mubr.f32.mxu0 0.0
          %1531 = vmatmul.mubr.f32.gmra.mrb[0].mxu0 %v1461
          %v1532 = vpop.f32.mrb[0].mxu0
          %v1533 = vadd.f32 %v1457, %v1532
          %v1534 = vpop.f32.mrb[0].mxu0
          %1535 = vdwg.mxu0
          %vm1536 = vcmask 27648
          %1537 = vst.msk [vmem:[#allocation3] sm:$0xf] %vm1536, %v1533
        $region64: #{crop_convlstm_forward.3} parent=55 // pred_fallthru
          _
        // Predicated region
        $region65: #{crop_convlstm_forward.3} parent=55 // pred_check
          %p1538 = pneg %p233
        $region66: #{crop_convlstm_forward.3} parent=55 // pred_check_branch
          %1540 = sbr.rel (%p1538) target = $region68
        $region67: #{crop_convlstm_forward.3} parent=55 // pred_region
          %s1542 = ssub.s32 64, 64
          %1543 = vsyncadd [#allocation4], %s1542
          %s1545 = sshll.u32 [#allocation3], 4
          %s1546 = int_to_ptr.vmem [resolvable:$true] %s1545
          %1548 = dma.vmem_to_hbm [thread:$0]  %s1546, 64, %s9, [#allocation4]
        $region68: #{crop_convlstm_forward.3} parent=55 // pred_fallthru
          _
        // Predicated region
        $region69: #{crop_convlstm_forward.3} parent=55 // pred_check
          %p1549 = pneg %p233
        $region70: #{crop_convlstm_forward.3} parent=55 // pred_check_branch
          %1551 = sbr.rel (%p1549) target = $region72
        $region71: #{crop_convlstm_forward.3} parent=55 // pred_region
          %1552 = dma.done [#allocation4], 64
        $region72: #{crop_convlstm_forward.3} parent=55 // pred_fallthru
          _
      $region56: #{crop_convlstm_forward.3} parent=5 // pred_fallthru
        _
      %p1553 = scmp.le.s32.totalorder 2, %s16
      // Predicated region
      $region73: #{crop_convlstm_forward.3} parent=5 // pred_check
        %p1554 = pneg %p1553
      $region74: #{crop_convlstm_forward.3} parent=5 // pred_check_branch
        %1556 = sbr.rel (%p1554) target = $region76
      $region75: #{crop_convlstm_forward.3} parent=5 // pred_region
        %s1557 = ssub.s32 %s16, 2
      $region76: #{crop_convlstm_forward.3} parent=5 // pred_fallthru
        _
    $region6: #{crop_convlstm_forward.3} parent=1 // loop_footer
      %s20 = sadd.s32 1, %s16
    $region7: #{crop_convlstm_forward.3} parent=1 // loop_footer_branch
      %15 = sbr.rel target = $region3
    $region8: #{crop_convlstm_forward.3} parent=1 // loop_exit
      _
    %1558 = vsyncpa [#allocation4], 1
    %s1559 = scalar_lea.sflag [#allocation4], 1
    %1560 = vsyncpa %s1559, 1

</llo_original>
